<compile_context>
chip_gen: v5e
topology: v5e:2x2
jax: 0.10.0
libtpu: 0.0.40
codegen_flags: <defaults>
</compile_context>

<pallas_src>
import jax
import jax.numpy as jnp
from jax.experimental import pallas as pl
from jax.experimental.pallas import tpu as pltpu

IN_FEATURES = 50
OUT_FEATURES = 8
LAYER_DIMS = [(IN_FEATURES, 140), (140, 90), (90, 50), (50, 30), (30, OUT_FEATURES)]
NUM_LAYERS = len(LAYER_DIMS)
DP = 256            # uniform padded feature width (covers max dim 140; 2 x 128 lanes)
BN_EPS = 1e-5
LEAKY_SLOPE = 0.01  # PyTorch nn.LeakyReLU default


def _leaky_relu(x):
    return jnp.maximum(x, LEAKY_SLOPE * x)


def _identity(x):
    return x


_ACTS = (_leaky_relu, _leaky_relu, _leaky_relu, jnp.tanh, _identity)


def network_kernel(x_ref, w_ref, gb_ref, o_ref):
    # x_ref : (B, DP)       f32, zero-padded beyond IN_FEATURES
    # w_ref : (5, DP, DP)   bf16, layer l occupies [l, :din_l, :dout_l], zeros elsewhere
    # gb_ref: (5, 2, DP)    f32, [l, 0] = gamma, [l, 1] = beta (zero-padded)
    # o_ref : (B, OUT)      f32
    h = x_ref[...]
    for l in range(NUM_LAYERS):
        # Linear (bias-free: bias cancels exactly under the train-mode BN below).
        y = jnp.dot(h.astype(jnp.bfloat16), w_ref[l],
                    preferred_element_type=jnp.float32)
        # BatchNorm1d, training mode (biased batch variance), f32 math.
        gb = gb_ref[l]                                      # (2, DP)
        mean = jnp.mean(y, axis=0, keepdims=True)
        centered = y - mean
        var = jnp.mean(centered * centered, axis=0, keepdims=True)
        scale = jax.lax.rsqrt(var + BN_EPS) * gb[0:1, :]    # fold inv_std * gamma
        h = _ACTS[l](centered * scale + gb[1:2, :])
        # Padded columns stay exactly zero (zero W cols, zero gamma/beta) through
        # BN / LeakyReLU / tanh, so they never contaminate the next layer.
        # TODO(synk): train-mode Dropout(p=0.1) after layers 1-3 is stochastic; it
        # is treated as identity here (inference behaviour) rather than faking a mask.

    # Final Sigmoid on the 8 real output columns (stable tanh form, EUP op).
    logits = h[:, :OUT_FEATURES]
    o_ref[...] = (0.5 * (jnp.tanh(0.5 * logits) + 1.0)).astype(o_ref.dtype)


def pack_params(weights, gammas, betas):
    """Pack all layer parameters into two lane-aligned slabs (one DMA each)."""
    w_slab = jnp.zeros((NUM_LAYERS, DP, DP), jnp.bfloat16)
    gb_slab = jnp.zeros((NUM_LAYERS, 2, DP), jnp.float32)
    for l, ((din, dout), w) in enumerate(zip(LAYER_DIMS, weights)):
        w_slab = w_slab.at[l, :din, :dout].set(w.astype(jnp.bfloat16))
        gb_slab = gb_slab.at[l, 0, :dout].set(gammas[l].astype(jnp.float32))
        gb_slab = gb_slab.at[l, 1, :dout].set(betas[l].astype(jnp.float32))
    return w_slab, gb_slab


@jax.jit
def network_forward(x, w_slab, gb_slab):
    batch = x.shape[0]
    x_pad = jnp.pad(x.astype(jnp.float32), ((0, 0), (0, DP - x.shape[1])))

    def vmem_spec():
        return pl.BlockSpec(memory_space=pltpu.MemorySpace.VMEM)

    cost = pl.CostEstimate(
        flops=2 * batch * DP * DP * NUM_LAYERS,
        transcendentals=batch * (DP + OUT_FEATURES) + NUM_LAYERS * DP,
        bytes_accessed=(x_pad.size * 4 + w_slab.size * 2 + gb_slab.size * 4
                        + batch * OUT_FEATURES * 4),
    )

    return pl.pallas_call(
        network_kernel,
        out_shape=jax.ShapeDtypeStruct((batch, OUT_FEATURES), jnp.float32),
        in_specs=[vmem_spec(), vmem_spec(), vmem_spec()],
        out_specs=vmem_spec(),
        cost_estimate=cost,
    )(x_pad, w_slab, gb_slab)


if __name__ == "__main__":
    key = jax.random.PRNGKey(0)
    BATCH = 128  # fills the MXU rows and amortizes the fixed launch/DMA overhead

    keys = jax.random.split(key, 1 + 3 * NUM_LAYERS)
    x = jax.random.normal(keys[0], (BATCH, IN_FEATURES), dtype=jnp.float32)

    weights, gammas, betas = [], [], []
    for l, (din, dout) in enumerate(LAYER_DIMS):
        kw, kg, kb = keys[1 + 3 * l], keys[2 + 3 * l], keys[3 + 3 * l]
        bound = 1.0 / (din ** 0.5)
        weights.append(jax.random.uniform(kw, (din, dout), jnp.float32, -bound, bound))
        gammas.append(jax.random.uniform(kg, (dout,), jnp.float32, 0.5, 1.5))
        betas.append(0.1 * jax.random.normal(kb, (dout,), jnp.float32))

    w_slab, gb_slab = pack_params(weights, gammas, betas)

    out = network_forward(x, w_slab, gb_slab)
    jax.block_until_ready(out)

    # Pure-JAX reference with identical numerics (bf16 matmul operands, f32 BN math).
    acts = [lambda t: jnp.maximum(t, LEAKY_SLOPE * t)] * 3 + [jnp.tanh, lambda t: t]
    h = x
    for w, g, b, act in zip(weights, gammas, betas, acts):
        y = jnp.dot(h.astype(jnp.bfloat16), w.astype(jnp.bfloat16),
                    preferred_element_type=jnp.float32)
        mu = jnp.mean(y, axis=0, keepdims=True)
        c = y - mu
        var = jnp.mean(c * c, axis=0, keepdims=True)
        h = act(c * jax.lax.rsqrt(var + BN_EPS) * g[None, :] + b[None, :])
    ref = jax.nn.sigmoid(h)

    assert out.shape == (BATCH, OUT_FEATURES)
    err = jnp.max(jnp.abs(out - ref))
    assert jnp.allclose(out, ref, atol=2e-3, rtol=2e-3), f"mismatch vs reference, max abs err={err}"

    print("KERNEL_OK")
</pallas_src>

<mosaic_0001>
module attributes {stable_mosaic.version = 11 : i64} {
  func.func @network_kernel(%arg0: memref<128x256xf32, #tpu.memory_space<vmem>>, %arg1: memref<5x256x256xbf16, #tpu.memory_space<vmem>>, %arg2: memref<5x2x256xf32, #tpu.memory_space<vmem>>, %arg3: memref<128x8xf32, #tpu.memory_space<vmem>>) attributes {dimension_semantics = [], scalar_prefetch = 0 : i64, scratch_operands = 0 : i64, tpu.core_type = #tpu.core_type<tc>} {
    %c0 = arith.constant 0 : index
    %c0_0 = arith.constant 0 : index
    %0 = vector.load %arg0[%c0, %c0_0] : memref<128x256xf32, #tpu.memory_space<vmem>>, vector<128x256xf32>
    %1 = arith.truncf %0 : vector<128x256xf32> to vector<128x256xbf16>
    %c0_1 = arith.constant 0 : index
    %c0_2 = arith.constant 0 : index
    %c0_3 = arith.constant 0 : index
    %2 = vector.load %arg1[%c0_1, %c0_2, %c0_3] : memref<5x256x256xbf16, #tpu.memory_space<vmem>>, vector<1x256x256xbf16>
    %3 = vector.shape_cast %2 : vector<1x256x256xbf16> to vector<256x256xbf16>
    %cst = arith.constant dense<0.000000e+00> : vector<128x256xf32>
    %4 = tpu.matmul %1, %3, %cst {dimension_numbers = #tpu.dot_dimension_numbers<[1], [0], [0], [1], [0, 0, 1, 1], [], []>} : vector<128x256xbf16>, vector<256x256xbf16>, vector<128x256xf32> -> vector<128x256xf32>
    %c0_4 = arith.constant 0 : index
    %c0_5 = arith.constant 0 : index
    %c0_6 = arith.constant 0 : index
    %5 = vector.load %arg2[%c0_4, %c0_5, %c0_6] : memref<5x2x256xf32, #tpu.memory_space<vmem>>, vector<1x2x256xf32>
    %6 = vector.shape_cast %5 : vector<1x2x256xf32> to vector<2x256xf32>
    %cst_7 = arith.constant dense<0.000000e+00> : vector<256xf32>
    %7 = vector.multi_reduction <add>, %4, %cst_7 [0] : vector<128x256xf32> to vector<256xf32>
    %8 = vector.shape_cast %7 : vector<256xf32> to vector<1x256xf32>
    %cst_8 = arith.constant 1.280000e+02 : f32
    %9 = vector.broadcast %cst_8 : f32 to vector<1x256xf32>
    %10 = arith.divf %8, %9 : vector<1x256xf32>
    %11 = vector.broadcast %10 : vector<1x256xf32> to vector<128x256xf32>
    %12 = arith.subf %4, %11 : vector<128x256xf32>
    %13 = arith.mulf %12, %12 : vector<128x256xf32>
    %cst_9 = arith.constant dense<0.000000e+00> : vector<256xf32>
    %14 = vector.multi_reduction <add>, %13, %cst_9 [0] : vector<128x256xf32> to vector<256xf32>
    %15 = vector.shape_cast %14 : vector<256xf32> to vector<1x256xf32>
    %cst_10 = arith.constant 1.280000e+02 : f32
    %16 = vector.broadcast %cst_10 : f32 to vector<1x256xf32>
    %17 = arith.divf %15, %16 : vector<1x256xf32>
    %cst_11 = arith.constant 9.99999974E-6 : f32
    %18 = vector.broadcast %cst_11 : f32 to vector<1x256xf32>
    %19 = arith.addf %17, %18 : vector<1x256xf32>
    %20 = math.rsqrt %19 : vector<1x256xf32>
    %21 = vector.extract_strided_slice %6 {offsets = [0, 0], sizes = [1, 256], strides = [1, 1]} : vector<2x256xf32> to vector<1x256xf32>
    %22 = arith.mulf %20, %21 : vector<1x256xf32>
    %23 = vector.broadcast %22 : vector<1x256xf32> to vector<128x256xf32>
    %24 = arith.mulf %12, %23 : vector<128x256xf32>
    %25 = vector.extract_strided_slice %6 {offsets = [1, 0], sizes = [1, 256], strides = [1, 1]} : vector<2x256xf32> to vector<1x256xf32>
    %26 = vector.broadcast %25 : vector<1x256xf32> to vector<128x256xf32>
    %27 = arith.addf %24, %26 : vector<128x256xf32>
    %cst_12 = arith.constant 0.00999999977 : f32
    %28 = vector.broadcast %cst_12 : f32 to vector<128x256xf32>
    %29 = arith.mulf %28, %27 : vector<128x256xf32>
    %30 = arith.maximumf %27, %29 : vector<128x256xf32>
    %31 = arith.truncf %30 : vector<128x256xf32> to vector<128x256xbf16>
    %c1 = arith.constant 1 : index
    %c0_13 = arith.constant 0 : index
    %c0_14 = arith.constant 0 : index
    %32 = vector.load %arg1[%c1, %c0_13, %c0_14] : memref<5x256x256xbf16, #tpu.memory_space<vmem>>, vector<1x256x256xbf16>
    %33 = vector.shape_cast %32 : vector<1x256x256xbf16> to vector<256x256xbf16>
    %cst_15 = arith.constant dense<0.000000e+00> : vector<128x256xf32>
    %34 = tpu.matmul %31, %33, %cst_15 {dimension_numbers = #tpu.dot_dimension_numbers<[1], [0], [0], [1], [0, 0, 1, 1], [], []>} : vector<128x256xbf16>, vector<256x256xbf16>, vector<128x256xf32> -> vector<128x256xf32>
    %c1_16 = arith.constant 1 : index
    %c0_17 = arith.constant 0 : index
    %c0_18 = arith.constant 0 : index
    %35 = vector.load %arg2[%c1_16, %c0_17, %c0_18] : memref<5x2x256xf32, #tpu.memory_space<vmem>>, vector<1x2x256xf32>
    %36 = vector.shape_cast %35 : vector<1x2x256xf32> to vector<2x256xf32>
    %cst_19 = arith.constant dense<0.000000e+00> : vector<256xf32>
    %37 = vector.multi_reduction <add>, %34, %cst_19 [0] : vector<128x256xf32> to vector<256xf32>
    %38 = vector.shape_cast %37 : vector<256xf32> to vector<1x256xf32>
    %cst_20 = arith.constant 1.280000e+02 : f32
    %39 = vector.broadcast %cst_20 : f32 to vector<1x256xf32>
    %40 = arith.divf %38, %39 : vector<1x256xf32>
    %41 = vector.broadcast %40 : vector<1x256xf32> to vector<128x256xf32>
    %42 = arith.subf %34, %41 : vector<128x256xf32>
    %43 = arith.mulf %42, %42 : vector<128x256xf32>
    %cst_21 = arith.constant dense<0.000000e+00> : vector<256xf32>
    %44 = vector.multi_reduction <add>, %43, %cst_21 [0] : vector<128x256xf32> to vector<256xf32>
    %45 = vector.shape_cast %44 : vector<256xf32> to vector<1x256xf32>
    %cst_22 = arith.constant 1.280000e+02 : f32
    %46 = vector.broadcast %cst_22 : f32 to vector<1x256xf32>
    %47 = arith.divf %45, %46 : vector<1x256xf32>
    %cst_23 = arith.constant 9.99999974E-6 : f32
    %48 = vector.broadcast %cst_23 : f32 to vector<1x256xf32>
    %49 = arith.addf %47, %48 : vector<1x256xf32>
    %50 = math.rsqrt %49 : vector<1x256xf32>
    %51 = vector.extract_strided_slice %36 {offsets = [0, 0], sizes = [1, 256], strides = [1, 1]} : vector<2x256xf32> to vector<1x256xf32>
    %52 = arith.mulf %50, %51 : vector<1x256xf32>
    %53 = vector.broadcast %52 : vector<1x256xf32> to vector<128x256xf32>
    %54 = arith.mulf %42, %53 : vector<128x256xf32>
    %55 = vector.extract_strided_slice %36 {offsets = [1, 0], sizes = [1, 256], strides = [1, 1]} : vector<2x256xf32> to vector<1x256xf32>
    %56 = vector.broadcast %55 : vector<1x256xf32> to vector<128x256xf32>
    %57 = arith.addf %54, %56 : vector<128x256xf32>
    %cst_24 = arith.constant 0.00999999977 : f32
    %58 = vector.broadcast %cst_24 : f32 to vector<128x256xf32>
    %59 = arith.mulf %58, %57 : vector<128x256xf32>
    %60 = arith.maximumf %57, %59 : vector<128x256xf32>
    %61 = arith.truncf %60 : vector<128x256xf32> to vector<128x256xbf16>
    %c2 = arith.constant 2 : index
    %c0_25 = arith.constant 0 : index
    %c0_26 = arith.constant 0 : index
    %62 = vector.load %arg1[%c2, %c0_25, %c0_26] : memref<5x256x256xbf16, #tpu.memory_space<vmem>>, vector<1x256x256xbf16>
    %63 = vector.shape_cast %62 : vector<1x256x256xbf16> to vector<256x256xbf16>
    %cst_27 = arith.constant dense<0.000000e+00> : vector<128x256xf32>
    %64 = tpu.matmul %61, %63, %cst_27 {dimension_numbers = #tpu.dot_dimension_numbers<[1], [0], [0], [1], [0, 0, 1, 1], [], []>} : vector<128x256xbf16>, vector<256x256xbf16>, vector<128x256xf32> -> vector<128x256xf32>
    %c2_28 = arith.constant 2 : index
    %c0_29 = arith.constant 0 : index
    %c0_30 = arith.constant 0 : index
    %65 = vector.load %arg2[%c2_28, %c0_29, %c0_30] : memref<5x2x256xf32, #tpu.memory_space<vmem>>, vector<1x2x256xf32>
    %66 = vector.shape_cast %65 : vector<1x2x256xf32> to vector<2x256xf32>
    %cst_31 = arith.constant dense<0.000000e+00> : vector<256xf32>
    %67 = vector.multi_reduction <add>, %64, %cst_31 [0] : vector<128x256xf32> to vector<256xf32>
    %68 = vector.shape_cast %67 : vector<256xf32> to vector<1x256xf32>
    %cst_32 = arith.constant 1.280000e+02 : f32
    %69 = vector.broadcast %cst_32 : f32 to vector<1x256xf32>
    %70 = arith.divf %68, %69 : vector<1x256xf32>
    %71 = vector.broadcast %70 : vector<1x256xf32> to vector<128x256xf32>
    %72 = arith.subf %64, %71 : vector<128x256xf32>
    %73 = arith.mulf %72, %72 : vector<128x256xf32>
    %cst_33 = arith.constant dense<0.000000e+00> : vector<256xf32>
    %74 = vector.multi_reduction <add>, %73, %cst_33 [0] : vector<128x256xf32> to vector<256xf32>
    %75 = vector.shape_cast %74 : vector<256xf32> to vector<1x256xf32>
    %cst_34 = arith.constant 1.280000e+02 : f32
    %76 = vector.broadcast %cst_34 : f32 to vector<1x256xf32>
    %77 = arith.divf %75, %76 : vector<1x256xf32>
    %cst_35 = arith.constant 9.99999974E-6 : f32
    %78 = vector.broadcast %cst_35 : f32 to vector<1x256xf32>
    %79 = arith.addf %77, %78 : vector<1x256xf32>
    %80 = math.rsqrt %79 : vector<1x256xf32>
    %81 = vector.extract_strided_slice %66 {offsets = [0, 0], sizes = [1, 256], strides = [1, 1]} : vector<2x256xf32> to vector<1x256xf32>
    %82 = arith.mulf %80, %81 : vector<1x256xf32>
    %83 = vector.broadcast %82 : vector<1x256xf32> to vector<128x256xf32>
    %84 = arith.mulf %72, %83 : vector<128x256xf32>
    %85 = vector.extract_strided_slice %66 {offsets = [1, 0], sizes = [1, 256], strides = [1, 1]} : vector<2x256xf32> to vector<1x256xf32>
    %86 = vector.broadcast %85 : vector<1x256xf32> to vector<128x256xf32>
    %87 = arith.addf %84, %86 : vector<128x256xf32>
    %cst_36 = arith.constant 0.00999999977 : f32
    %88 = vector.broadcast %cst_36 : f32 to vector<128x256xf32>
    %89 = arith.mulf %88, %87 : vector<128x256xf32>
    %90 = arith.maximumf %87, %89 : vector<128x256xf32>
    %91 = arith.truncf %90 : vector<128x256xf32> to vector<128x256xbf16>
    %c3 = arith.constant 3 : index
    %c0_37 = arith.constant 0 : index
    %c0_38 = arith.constant 0 : index
    %92 = vector.load %arg1[%c3, %c0_37, %c0_38] : memref<5x256x256xbf16, #tpu.memory_space<vmem>>, vector<1x256x256xbf16>
    %93 = vector.shape_cast %92 : vector<1x256x256xbf16> to vector<256x256xbf16>
    %cst_39 = arith.constant dense<0.000000e+00> : vector<128x256xf32>
    %94 = tpu.matmul %91, %93, %cst_39 {dimension_numbers = #tpu.dot_dimension_numbers<[1], [0], [0], [1], [0, 0, 1, 1], [], []>} : vector<128x256xbf16>, vector<256x256xbf16>, vector<128x256xf32> -> vector<128x256xf32>
    %c3_40 = arith.constant 3 : index
    %c0_41 = arith.constant 0 : index
    %c0_42 = arith.constant 0 : index
    %95 = vector.load %arg2[%c3_40, %c0_41, %c0_42] : memref<5x2x256xf32, #tpu.memory_space<vmem>>, vector<1x2x256xf32>
    %96 = vector.shape_cast %95 : vector<1x2x256xf32> to vector<2x256xf32>
    %cst_43 = arith.constant dense<0.000000e+00> : vector<256xf32>
    %97 = vector.multi_reduction <add>, %94, %cst_43 [0] : vector<128x256xf32> to vector<256xf32>
    %98 = vector.shape_cast %97 : vector<256xf32> to vector<1x256xf32>
    %cst_44 = arith.constant 1.280000e+02 : f32
    %99 = vector.broadcast %cst_44 : f32 to vector<1x256xf32>
    %100 = arith.divf %98, %99 : vector<1x256xf32>
    %101 = vector.broadcast %100 : vector<1x256xf32> to vector<128x256xf32>
    %102 = arith.subf %94, %101 : vector<128x256xf32>
    %103 = arith.mulf %102, %102 : vector<128x256xf32>
    %cst_45 = arith.constant dense<0.000000e+00> : vector<256xf32>
    %104 = vector.multi_reduction <add>, %103, %cst_45 [0] : vector<128x256xf32> to vector<256xf32>
    %105 = vector.shape_cast %104 : vector<256xf32> to vector<1x256xf32>
    %cst_46 = arith.constant 1.280000e+02 : f32
    %106 = vector.broadcast %cst_46 : f32 to vector<1x256xf32>
    %107 = arith.divf %105, %106 : vector<1x256xf32>
    %cst_47 = arith.constant 9.99999974E-6 : f32
    %108 = vector.broadcast %cst_47 : f32 to vector<1x256xf32>
    %109 = arith.addf %107, %108 : vector<1x256xf32>
    %110 = math.rsqrt %109 : vector<1x256xf32>
    %111 = vector.extract_strided_slice %96 {offsets = [0, 0], sizes = [1, 256], strides = [1, 1]} : vector<2x256xf32> to vector<1x256xf32>
    %112 = arith.mulf %110, %111 : vector<1x256xf32>
    %113 = vector.broadcast %112 : vector<1x256xf32> to vector<128x256xf32>
    %114 = arith.mulf %102, %113 : vector<128x256xf32>
    %115 = vector.extract_strided_slice %96 {offsets = [1, 0], sizes = [1, 256], strides = [1, 1]} : vector<2x256xf32> to vector<1x256xf32>
    %116 = vector.broadcast %115 : vector<1x256xf32> to vector<128x256xf32>
    %117 = arith.addf %114, %116 : vector<128x256xf32>
    %118 = math.tanh %117 : vector<128x256xf32>
    %119 = arith.truncf %118 : vector<128x256xf32> to vector<128x256xbf16>
    %c4 = arith.constant 4 : index
    %c0_48 = arith.constant 0 : index
    %c0_49 = arith.constant 0 : index
    %120 = vector.load %arg1[%c4, %c0_48, %c0_49] : memref<5x256x256xbf16, #tpu.memory_space<vmem>>, vector<1x256x256xbf16>
    %121 = vector.shape_cast %120 : vector<1x256x256xbf16> to vector<256x256xbf16>
    %cst_50 = arith.constant dense<0.000000e+00> : vector<128x256xf32>
    %122 = tpu.matmul %119, %121, %cst_50 {dimension_numbers = #tpu.dot_dimension_numbers<[1], [0], [0], [1], [0, 0, 1, 1], [], []>} : vector<128x256xbf16>, vector<256x256xbf16>, vector<128x256xf32> -> vector<128x256xf32>
    %c4_51 = arith.constant 4 : index
    %c0_52 = arith.constant 0 : index
    %c0_53 = arith.constant 0 : index
    %123 = vector.load %arg2[%c4_51, %c0_52, %c0_53] : memref<5x2x256xf32, #tpu.memory_space<vmem>>, vector<1x2x256xf32>
    %124 = vector.shape_cast %123 : vector<1x2x256xf32> to vector<2x256xf32>
    %cst_54 = arith.constant dense<0.000000e+00> : vector<256xf32>
    %125 = vector.multi_reduction <add>, %122, %cst_54 [0] : vector<128x256xf32> to vector<256xf32>
    %126 = vector.shape_cast %125 : vector<256xf32> to vector<1x256xf32>
    %cst_55 = arith.constant 1.280000e+02 : f32
    %127 = vector.broadcast %cst_55 : f32 to vector<1x256xf32>
    %128 = arith.divf %126, %127 : vector<1x256xf32>
    %129 = vector.broadcast %128 : vector<1x256xf32> to vector<128x256xf32>
    %130 = arith.subf %122, %129 : vector<128x256xf32>
    %131 = arith.mulf %130, %130 : vector<128x256xf32>
    %cst_56 = arith.constant dense<0.000000e+00> : vector<256xf32>
    %132 = vector.multi_reduction <add>, %131, %cst_56 [0] : vector<128x256xf32> to vector<256xf32>
    %133 = vector.shape_cast %132 : vector<256xf32> to vector<1x256xf32>
    %cst_57 = arith.constant 1.280000e+02 : f32
    %134 = vector.broadcast %cst_57 : f32 to vector<1x256xf32>
    %135 = arith.divf %133, %134 : vector<1x256xf32>
    %cst_58 = arith.constant 9.99999974E-6 : f32
    %136 = vector.broadcast %cst_58 : f32 to vector<1x256xf32>
    %137 = arith.addf %135, %136 : vector<1x256xf32>
    %138 = math.rsqrt %137 : vector<1x256xf32>
    %139 = vector.extract_strided_slice %124 {offsets = [0, 0], sizes = [1, 256], strides = [1, 1]} : vector<2x256xf32> to vector<1x256xf32>
    %140 = arith.mulf %138, %139 : vector<1x256xf32>
    %141 = vector.broadcast %140 : vector<1x256xf32> to vector<128x256xf32>
    %142 = arith.mulf %130, %141 : vector<128x256xf32>
    %143 = vector.extract_strided_slice %124 {offsets = [1, 0], sizes = [1, 256], strides = [1, 1]} : vector<2x256xf32> to vector<1x256xf32>
    %144 = vector.broadcast %143 : vector<1x256xf32> to vector<128x256xf32>
    %145 = arith.addf %142, %144 : vector<128x256xf32>
    %146 = vector.extract_strided_slice %145 {offsets = [0, 0], sizes = [128, 8], strides = [1, 1]} : vector<128x256xf32> to vector<128x8xf32>
    %cst_59 = arith.constant 5.000000e-01 : f32
    %147 = vector.broadcast %cst_59 : f32 to vector<128x8xf32>
    %148 = arith.mulf %147, %146 : vector<128x8xf32>
    %149 = math.tanh %148 : vector<128x8xf32>
    %cst_60 = arith.constant 1.000000e+00 : f32
    %150 = vector.broadcast %cst_60 : f32 to vector<128x8xf32>
    %151 = arith.addf %149, %150 : vector<128x8xf32>
    %cst_61 = arith.constant 5.000000e-01 : f32
    %152 = vector.broadcast %cst_61 : f32 to vector<128x8xf32>
    %153 = arith.mulf %152, %151 : vector<128x8xf32>
    %c0_62 = arith.constant 0 : index
    %c0_63 = arith.constant 0 : index
    %154 = vector.load %arg3[%c0_62, %c0_63] : memref<128x8xf32, #tpu.memory_space<vmem>>, vector<128x8xf32>
    tpu.vector_store %arg3[%c0_62, %c0_63], %153 {strides = array<i32>} : memref<128x8xf32, #tpu.memory_space<vmem>>, vector<128x8xf32>,
    return
  }
}

</mosaic_0001>

<llo_original>
// kernel: network_forward.1
$region0: #{network_forward.1}
  #allocation0 [shape = 'u32[]', space=smem, size = 0x4, offset = 0x4, fixed_abs, tag = 'smem constant byte address 0x4 - core index']
  #allocation1 [shape = 'u32[72,128]{1,0:T(1,128)}', space=vmem, size = 0x9000, scoped, tag = 'internal scratch']
  %s0 = inlined_call_operand.vmem [shape: f32[128,256], index: 0, kind: input, shape index: {}]
  %s1 = inlined_call_operand.hbm [shape: bf16[5,256,256], index: 1, kind: input, shape index: {}]
  %s2 = inlined_call_operand.vmem [shape: f32[5,2,256], index: 2, kind: input, shape index: {}]
  %s3 = inlined_call_operand.vmem [shape: f32[128,8], index: 3, kind: output, shape index: {}]
  %s4 = sld [smem:[#allocation0]]
  $region26: #{network_forward.1} parent=0
    _
  %s6 = ssub.s32 1, %s4
  %s7 = scalar_select 0, %s6, %s4
  $region1: #{network_forward.1} parent=0
    #allocation2 [shape = 'u8[655360]{0}', space=vmem, size = 0xa0000, scoped, tag = 'input window, operand 1, single buffered']
    #allocation3 [shape = 's32[1]{0}', space=sflag, size = 0x4, scoped, tag = 'scoped memory for network_forward.1']
    %8 = vsyncpa [#allocation3], 0
    // Predicated region
    $region2: #{network_forward.1} parent=1 // pred_check
      _
    $region3: #{network_forward.1} parent=1 // pred_check_branch
      %10 = sbr.rel (0) target = $region5
    $region4: #{network_forward.1} parent=1 // pred_region
      _
    $region5: #{network_forward.1} parent=1 // pred_fallthru
      _
    // Predicated region
    $region6: #{network_forward.1} parent=1 // pred_check
      _
    $region7: #{network_forward.1} parent=1 // pred_check_branch
      %12 = sbr.rel (0) target = $region9
    $region8: #{network_forward.1} parent=1 // pred_region
      %14 = vsyncadd [#allocation3], 0
      %s15 = sshll.u32 %s1, 4
      %s16 = int_to_ptr.hbm [resolvable:$true] %s15
      %s17 = sshll.u32 [#allocation2], 4
      %s18 = int_to_ptr.vmem [resolvable:$true] %s17
      %23 = dma.hbm_to_vmem [thread:$0]  %s16, 20480, %s18, [#allocation3], 128, 128, 8
    $region9: #{network_forward.1} parent=1 // pred_fallthru
      _
    // Predicated region
    $region10: #{network_forward.1} parent=1 // pred_check
      _
    $region11: #{network_forward.1} parent=1 // pred_check_branch
      %25 = sbr.rel (0) target = $region13
    $region12: #{network_forward.1} parent=1 // pred_region
      _
    $region13: #{network_forward.1} parent=1 // pred_fallthru
      _
    // Predicated region
    $region14: #{network_forward.1} parent=1 // pred_check
      _
    $region15: #{network_forward.1} parent=1 // pred_check_branch
      %27 = sbr.rel (0) target = $region17
    $region16: #{network_forward.1} parent=1 // pred_region
      %29 = dma.done [#allocation3], 20480
    $region17: #{network_forward.1} parent=1 // pred_fallthru
      _
    %v30 = vld [vmem:[%s0] sm:$0xff]
    %v31 = vld [vmem:[%s0 + $0x8] sm:$0xff]
    %v32 = vld [vmem:[%s0 + $0x10] sm:$0xff]
    %v33 = vld [vmem:[%s0 + $0x18] sm:$0xff]
    %v34 = vld [vmem:[%s0 + $0x20] sm:$0xff]
    %v35 = vld [vmem:[%s0 + $0x28] sm:$0xff]
    %v36 = vld [vmem:[%s0 + $0x30] sm:$0xff]
    %v37 = vld [vmem:[%s0 + $0x38] sm:$0xff]
    %v38 = vld [vmem:[%s0 + $0x40] sm:$0xff]
    %v39 = vld [vmem:[%s0 + $0x48] sm:$0xff]
    %v40 = vld [vmem:[%s0 + $0x50] sm:$0xff]
    %v41 = vld [vmem:[%s0 + $0x58] sm:$0xff]
    %v42 = vld [vmem:[%s0 + $0x60] sm:$0xff]
    %v43 = vld [vmem:[%s0 + $0x68] sm:$0xff]
    %v44 = vld [vmem:[%s0 + $0x70] sm:$0xff]
    %v45 = vld [vmem:[%s0 + $0x78] sm:$0xff]
    %v46 = vld [vmem:[%s0 + $0x80] sm:$0xff]
    %v47 = vld [vmem:[%s0 + $0x88] sm:$0xff]
    %v48 = vld [vmem:[%s0 + $0x90] sm:$0xff]
    %v49 = vld [vmem:[%s0 + $0x98] sm:$0xff]
    %v50 = vld [vmem:[%s0 + $0xa0] sm:$0xff]
    %v51 = vld [vmem:[%s0 + $0xa8] sm:$0xff]
    %v52 = vld [vmem:[%s0 + $0xb0] sm:$0xff]
    %v53 = vld [vmem:[%s0 + $0xb8] sm:$0xff]
    %v54 = vld [vmem:[%s0 + $0xc0] sm:$0xff]
    %v55 = vld [vmem:[%s0 + $0xc8] sm:$0xff]
    %v56 = vld [vmem:[%s0 + $0xd0] sm:$0xff]
    %v57 = vld [vmem:[%s0 + $0xd8] sm:$0xff]
    %v58 = vld [vmem:[%s0 + $0xe0] sm:$0xff]
    %v59 = vld [vmem:[%s0 + $0xe8] sm:$0xff]
    %v60 = vld [vmem:[%s0 + $0xf0] sm:$0xff]
    %v61 = vld [vmem:[%s0 + $0xf8] sm:$0xff]
    %v62 = vpack.c.bf16 %v32, %v30
    %v63 = vpack.c.bf16 %v33, %v31
    %v64 = vpack.c.bf16 %v36, %v34
    %v65 = vpack.c.bf16 %v37, %v35
    %v66 = vpack.c.bf16 %v40, %v38
    %v67 = vpack.c.bf16 %v41, %v39
    %v68 = vpack.c.bf16 %v44, %v42
    %v69 = vpack.c.bf16 %v45, %v43
    %v70 = vpack.c.bf16 %v48, %v46
    %v71 = vpack.c.bf16 %v49, %v47
    %v72 = vpack.c.bf16 %v52, %v50
    %v73 = vpack.c.bf16 %v53, %v51
    %v74 = vpack.c.bf16 %v56, %v54
    %v75 = vpack.c.bf16 %v57, %v55
    %v76 = vpack.c.bf16 %v60, %v58
    %v77 = vpack.c.bf16 %v61, %v59
    %v78 = vld [vmem:[#allocation2] sm:$0xff]
    %v79 = vld [vmem:[#allocation2 + $0x8] sm:$0xff]
    %v80 = vld [vmem:[#allocation2 + $0x10] sm:$0xff]
    %v81 = vld [vmem:[#allocation2 + $0x18] sm:$0xff]
    %v82 = vld [vmem:[#allocation2 + $0x20] sm:$0xff]
    %v83 = vld [vmem:[#allocation2 + $0x28] sm:$0xff]
    %v84 = vld [vmem:[#allocation2 + $0x30] sm:$0xff]
    %v85 = vld [vmem:[#allocation2 + $0x38] sm:$0xff]
    %v86 = vld [vmem:[#allocation2 + $0x40] sm:$0xff]
    %v87 = vld [vmem:[#allocation2 + $0x48] sm:$0xff]
    %v88 = vld [vmem:[#allocation2 + $0x50] sm:$0xff]
    %v89 = vld [vmem:[#allocation2 + $0x58] sm:$0xff]
    %v90 = vld [vmem:[#allocation2 + $0x60] sm:$0xff]
    %v91 = vld [vmem:[#allocation2 + $0x68] sm:$0xff]
    %v92 = vld [vmem:[#allocation2 + $0x70] sm:$0xff]
    %v93 = vld [vmem:[#allocation2 + $0x78] sm:$0xff]
    %v94 = vld [vmem:[#allocation2 + $0x80] sm:$0xff]
    %v95 = vld [vmem:[#allocation2 + $0x88] sm:$0xff]
    %v96 = vld [vmem:[#allocation2 + $0x90] sm:$0xff]
    %v97 = vld [vmem:[#allocation2 + $0x98] sm:$0xff]
    %v98 = vld [vmem:[#allocation2 + $0xa0] sm:$0xff]
    %v99 = vld [vmem:[#allocation2 + $0xa8] sm:$0xff]
    %v100 = vld [vmem:[#allocation2 + $0xb0] sm:$0xff]
    %v101 = vld [vmem:[#allocation2 + $0xb8] sm:$0xff]
    %v102 = vld [vmem:[#allocation2 + $0xc0] sm:$0xff]
    %v103 = vld [vmem:[#allocation2 + $0xc8] sm:$0xff]
    %v104 = vld [vmem:[#allocation2 + $0xd0] sm:$0xff]
    %v105 = vld [vmem:[#allocation2 + $0xd8] sm:$0xff]
    %v106 = vld [vmem:[#allocation2 + $0xe0] sm:$0xff]
    %v107 = vld [vmem:[#allocation2 + $0xe8] sm:$0xff]
    %v108 = vld [vmem:[#allocation2 + $0xf0] sm:$0xff]
    %v109 = vld [vmem:[#allocation2 + $0xf8] sm:$0xff]
    %v142 = vunpack.c.l.b16 %v78
    %v143 = vunpack.c.h.b16 %v78
    %v144 = vunpack.c.l.b16 %v79
    %v145 = vunpack.c.h.b16 %v79
    %v146 = vunpack.c.l.b16 %v80
    %v147 = vunpack.c.h.b16 %v80
    %v148 = vunpack.c.l.b16 %v81
    %v149 = vunpack.c.h.b16 %v81
    %v150 = vunpack.c.l.b16 %v82
    %v151 = vunpack.c.h.b16 %v82
    %v152 = vunpack.c.l.b16 %v83
    %v153 = vunpack.c.h.b16 %v83
    %v154 = vunpack.c.l.b16 %v84
    %v155 = vunpack.c.h.b16 %v84
    %v156 = vunpack.c.l.b16 %v85
    %v157 = vunpack.c.h.b16 %v85
    %v158 = vunpack.c.l.b16 %v86
    %v159 = vunpack.c.h.b16 %v86
    %v160 = vunpack.c.l.b16 %v87
    %v161 = vunpack.c.h.b16 %v87
    %v162 = vunpack.c.l.b16 %v88
    %v163 = vunpack.c.h.b16 %v88
    %v164 = vunpack.c.l.b16 %v89
    %v165 = vunpack.c.h.b16 %v89
    %v166 = vunpack.c.l.b16 %v90
    %v167 = vunpack.c.h.b16 %v90
    %v168 = vunpack.c.l.b16 %v91
    %v169 = vunpack.c.h.b16 %v91
    %v170 = vunpack.c.l.b16 %v92
    %v171 = vunpack.c.h.b16 %v92
    %v172 = vunpack.c.l.b16 %v93
    %v173 = vunpack.c.h.b16 %v93
    %v174 = vunpack.c.l.b16 %v94
    %v175 = vunpack.c.h.b16 %v94
    %v176 = vunpack.c.l.b16 %v95
    %v177 = vunpack.c.h.b16 %v95
    %v178 = vunpack.c.l.b16 %v96
    %v179 = vunpack.c.h.b16 %v96
    %v180 = vunpack.c.l.b16 %v97
    %v181 = vunpack.c.h.b16 %v97
    %v182 = vunpack.c.l.b16 %v98
    %v183 = vunpack.c.h.b16 %v98
    %v184 = vunpack.c.l.b16 %v99
    %v185 = vunpack.c.h.b16 %v99
    %v186 = vunpack.c.l.b16 %v100
    %v187 = vunpack.c.h.b16 %v100
    %v188 = vunpack.c.l.b16 %v101
    %v189 = vunpack.c.h.b16 %v101
    %v190 = vunpack.c.l.b16 %v102
    %v191 = vunpack.c.h.b16 %v102
    %v192 = vunpack.c.l.b16 %v103
    %v193 = vunpack.c.h.b16 %v103
    %v194 = vunpack.c.l.b16 %v104
    %v195 = vunpack.c.h.b16 %v104
    %v196 = vunpack.c.l.b16 %v105
    %v197 = vunpack.c.h.b16 %v105
    %v198 = vunpack.c.l.b16 %v106
    %v199 = vunpack.c.h.b16 %v106
    %v200 = vunpack.c.l.b16 %v107
    %v201 = vunpack.c.h.b16 %v107
    %v202 = vunpack.c.l.b16 %v108
    %v203 = vunpack.c.h.b16 %v108
    %v204 = vunpack.c.l.b16 %v109
    %v205 = vunpack.c.h.b16 %v109
    %v206 = vpack.c.b16 %v144, %v142
    %v207 = vpack.c.b16 %v145, %v143
    %v208 = vpack.c.b16 %v148, %v146
    %v209 = vpack.c.b16 %v149, %v147
    %v210 = vpack.c.b16 %v152, %v150
    %v211 = vpack.c.b16 %v153, %v151
    %v212 = vpack.c.b16 %v156, %v154
    %v213 = vpack.c.b16 %v157, %v155
    %v214 = vpack.c.b16 %v160, %v158
    %v215 = vpack.c.b16 %v161, %v159
    %v216 = vpack.c.b16 %v164, %v162
    %v217 = vpack.c.b16 %v165, %v163
    %v218 = vpack.c.b16 %v168, %v166
    %v219 = vpack.c.b16 %v169, %v167
    %v220 = vpack.c.b16 %v172, %v170
    %v221 = vpack.c.b16 %v173, %v171
    %v222 = vpack.c.b16 %v176, %v174
    %v223 = vpack.c.b16 %v177, %v175
    %v224 = vpack.c.b16 %v180, %v178
    %v225 = vpack.c.b16 %v181, %v179
    %v226 = vpack.c.b16 %v184, %v182
    %v227 = vpack.c.b16 %v185, %v183
    %v228 = vpack.c.b16 %v188, %v186
    %v229 = vpack.c.b16 %v189, %v187
    %v230 = vpack.c.b16 %v192, %v190
    %v231 = vpack.c.b16 %v193, %v191
    %v232 = vpack.c.b16 %v196, %v194
    %v233 = vpack.c.b16 %v197, %v195
    %v234 = vpack.c.b16 %v200, %v198
    %v235 = vpack.c.b16 %v201, %v199
    %v236 = vpack.c.b16 %v204, %v202
    %v237 = vpack.c.b16 %v205, %v203
    %270 = vmatpush.bf16.msra.mxu0 %v220
    %271 = vmatpush.bf16.msra.mxu0 %v218
    %272 = vmatpush.bf16.msra.mxu0 %v216
    %273 = vmatpush.bf16.msra.mxu0 %v214
    %274 = vmatpush.bf16.msra.mxu0 %v212
    %275 = vmatpush.bf16.msra.mxu0 %v210
    %276 = vmatpush.bf16.msra.mxu0 %v208
    %277 = vmatpush.bf16.msra.mxu0 %v206
    %278 = vmatmul.bf16.gmra.mxu0 %v62
    %v279 = vpop.f32.mrf.mxu0
    %v280 = vadd.f32 0.0, %v279
    %v281 = vpop.f32.mrf.mxu0
    %v282 = vadd.f32 0.0, %v281
    %283 = vmatmul.bf16.gmra.mxu0 %v64
    %v284 = vpop.f32.mrf.mxu0
    %v285 = vadd.f32 0.0, %v284
    %v286 = vpop.f32.mrf.mxu0
    %v287 = vadd.f32 0.0, %v286
    %288 = vmatmul.bf16.gmra.mxu0 %v66
    %v289 = vpop.f32.mrf.mxu0
    %v290 = vadd.f32 0.0, %v289
    %v291 = vpop.f32.mrf.mxu0
    %v292 = vadd.f32 0.0, %v291
    %293 = vmatmul.bf16.gmra.mxu0 %v68
    %v294 = vpop.f32.mrf.mxu0
    %v295 = vadd.f32 0.0, %v294
    %v296 = vpop.f32.mrf.mxu0
    %v297 = vadd.f32 0.0, %v296
    %298 = vmatmul.bf16.gmra.mxu0 %v70
    %v299 = vpop.f32.mrf.mxu0
    %v300 = vadd.f32 0.0, %v299
    %v301 = vpop.f32.mrf.mxu0
    %v302 = vadd.f32 0.0, %v301
    %303 = vmatmul.bf16.gmra.mxu0 %v72
    %v304 = vpop.f32.mrf.mxu0
    %v305 = vadd.f32 0.0, %v304
    %v306 = vpop.f32.mrf.mxu0
    %v307 = vadd.f32 0.0, %v306
    %308 = vmatmul.bf16.gmra.mxu0 %v74
    %v309 = vpop.f32.mrf.mxu0
    %v310 = vadd.f32 0.0, %v309
    %v311 = vpop.f32.mrf.mxu0
    %v312 = vadd.f32 0.0, %v311
    %313 = vmatmul.bf16.gmra.mxu0 %v76
    %v314 = vpop.f32.mrf.mxu0
    %v315 = vadd.f32 0.0, %v314
    %v316 = vpop.f32.mrf.mxu0
    %v317 = vadd.f32 0.0, %v316
    %318 = vdwg.mxu0
    %319 = vmatpush.bf16.msra.mxu0 %v236
    %320 = vmatpush.bf16.msra.mxu0 %v234
    %321 = vmatpush.bf16.msra.mxu0 %v232
    %322 = vmatpush.bf16.msra.mxu0 %v230
    %323 = vmatpush.bf16.msra.mxu0 %v228
    %324 = vmatpush.bf16.msra.mxu0 %v226
    %325 = vmatpush.bf16.msra.mxu0 %v224
    %326 = vmatpush.bf16.msra.mxu0 %v222
    %327 = vmatmul.bf16.gmra.mxu0 %v63
    %v328 = vpop.f32.mrf.mxu0
    %v329 = vadd.f32 %v280, %v328
    %v330 = vpop.f32.mrf.mxu0
    %v331 = vadd.f32 %v282, %v330
    %332 = vmatmul.bf16.gmra.mxu0 %v65
    %v333 = vpop.f32.mrf.mxu0
    %v334 = vadd.f32 %v285, %v333
    %v335 = vpop.f32.mrf.mxu0
    %v336 = vadd.f32 %v287, %v335
    %337 = vmatmul.bf16.gmra.mxu0 %v67
    %v338 = vpop.f32.mrf.mxu0
    %v339 = vadd.f32 %v290, %v338
    %v340 = vpop.f32.mrf.mxu0
    %v341 = vadd.f32 %v292, %v340
    %342 = vmatmul.bf16.gmra.mxu0 %v69
    %v343 = vpop.f32.mrf.mxu0
    %v344 = vadd.f32 %v295, %v343
    %v345 = vpop.f32.mrf.mxu0
    %v346 = vadd.f32 %v297, %v345
    %347 = vmatmul.bf16.gmra.mxu0 %v71
    %v348 = vpop.f32.mrf.mxu0
    %v349 = vadd.f32 %v300, %v348
    %v350 = vpop.f32.mrf.mxu0
    %v351 = vadd.f32 %v302, %v350
    %352 = vmatmul.bf16.gmra.mxu0 %v73
    %v353 = vpop.f32.mrf.mxu0
    %v354 = vadd.f32 %v305, %v353
    %v355 = vpop.f32.mrf.mxu0
    %v356 = vadd.f32 %v307, %v355
    %357 = vmatmul.bf16.gmra.mxu0 %v75
    %v358 = vpop.f32.mrf.mxu0
    %v359 = vadd.f32 %v310, %v358
    %v360 = vpop.f32.mrf.mxu0
    %v361 = vadd.f32 %v312, %v360
    %362 = vmatmul.bf16.gmra.mxu0 %v77
    %v363 = vpop.f32.mrf.mxu0
    %v364 = vadd.f32 %v315, %v363
    %v365 = vpop.f32.mrf.mxu0
    %v366 = vadd.f32 %v317, %v365
    %367 = vdwg.mxu0
    %368 = vmatpush.bf16.msra.mxu0 %v221
    %369 = vmatpush.bf16.msra.mxu0 %v219
    %370 = vmatpush.bf16.msra.mxu0 %v217
    %371 = vmatpush.bf16.msra.mxu0 %v215
    %372 = vmatpush.bf16.msra.mxu0 %v213
    %373 = vmatpush.bf16.msra.mxu0 %v211
    %374 = vmatpush.bf16.msra.mxu0 %v209
    %375 = vmatpush.bf16.msra.mxu0 %v207
    %376 = vmatmul.bf16.gmra.mxu0 %v62
    %v377 = vpop.f32.mrf.mxu0
    %v378 = vadd.f32 0.0, %v377
    %v379 = vpop.f32.mrf.mxu0
    %v380 = vadd.f32 0.0, %v379
    %381 = vmatmul.bf16.gmra.mxu0 %v64
    %v382 = vpop.f32.mrf.mxu0
    %v383 = vadd.f32 0.0, %v382
    %v384 = vpop.f32.mrf.mxu0
    %v385 = vadd.f32 0.0, %v384
    %386 = vmatmul.bf16.gmra.mxu0 %v66
    %v387 = vpop.f32.mrf.mxu0
    %v388 = vadd.f32 0.0, %v387
    %v389 = vpop.f32.mrf.mxu0
    %v390 = vadd.f32 0.0, %v389
    %391 = vmatmul.bf16.gmra.mxu0 %v68
    %v392 = vpop.f32.mrf.mxu0
    %v393 = vadd.f32 0.0, %v392
    %v394 = vpop.f32.mrf.mxu0
    %v395 = vadd.f32 0.0, %v394
    %396 = vmatmul.bf16.gmra.mxu0 %v70
    %v397 = vpop.f32.mrf.mxu0
    %v398 = vadd.f32 0.0, %v397
    %v399 = vpop.f32.mrf.mxu0
    %v400 = vadd.f32 0.0, %v399
    %401 = vmatmul.bf16.gmra.mxu0 %v72
    %v402 = vpop.f32.mrf.mxu0
    %v403 = vadd.f32 0.0, %v402
    %v404 = vpop.f32.mrf.mxu0
    %v405 = vadd.f32 0.0, %v404
    %406 = vmatmul.bf16.gmra.mxu0 %v74
    %v407 = vpop.f32.mrf.mxu0
    %v408 = vadd.f32 0.0, %v407
    %v409 = vpop.f32.mrf.mxu0
    %v410 = vadd.f32 0.0, %v409
    %411 = vmatmul.bf16.gmra.mxu0 %v76
    %v412 = vpop.f32.mrf.mxu0
    %v413 = vadd.f32 0.0, %v412
    %v414 = vpop.f32.mrf.mxu0
    %v415 = vadd.f32 0.0, %v414
    %416 = vdwg.mxu0
    %417 = vmatpush.bf16.msra.mxu0 %v237
    %418 = vmatpush.bf16.msra.mxu0 %v235
    %419 = vmatpush.bf16.msra.mxu0 %v233
    %420 = vmatpush.bf16.msra.mxu0 %v231
    %421 = vmatpush.bf16.msra.mxu0 %v229
    %422 = vmatpush.bf16.msra.mxu0 %v227
    %423 = vmatpush.bf16.msra.mxu0 %v225
    %424 = vmatpush.bf16.msra.mxu0 %v223
    %425 = vmatmul.bf16.gmra.mxu0 %v63
    %v426 = vpop.f32.mrf.mxu0
    %v427 = vadd.f32 %v378, %v426
    %v428 = vpop.f32.mrf.mxu0
    %v429 = vadd.f32 %v380, %v428
    %430 = vmatmul.bf16.gmra.mxu0 %v65
    %v431 = vpop.f32.mrf.mxu0
    %v432 = vadd.f32 %v383, %v431
    %v433 = vpop.f32.mrf.mxu0
    %v434 = vadd.f32 %v385, %v433
    %435 = vmatmul.bf16.gmra.mxu0 %v67
    %v436 = vpop.f32.mrf.mxu0
    %v437 = vadd.f32 %v388, %v436
    %v438 = vpop.f32.mrf.mxu0
    %v439 = vadd.f32 %v390, %v438
    %440 = vmatmul.bf16.gmra.mxu0 %v69
    %v441 = vpop.f32.mrf.mxu0
    %v442 = vadd.f32 %v393, %v441
    %v443 = vpop.f32.mrf.mxu0
    %v444 = vadd.f32 %v395, %v443
    %445 = vmatmul.bf16.gmra.mxu0 %v71
    %v446 = vpop.f32.mrf.mxu0
    %v447 = vadd.f32 %v398, %v446
    %v448 = vpop.f32.mrf.mxu0
    %v449 = vadd.f32 %v400, %v448
    %450 = vmatmul.bf16.gmra.mxu0 %v73
    %v451 = vpop.f32.mrf.mxu0
    %v452 = vadd.f32 %v403, %v451
    %v453 = vpop.f32.mrf.mxu0
    %v454 = vadd.f32 %v405, %v453
    %455 = vmatmul.bf16.gmra.mxu0 %v75
    %v456 = vpop.f32.mrf.mxu0
    %v457 = vadd.f32 %v408, %v456
    %v458 = vpop.f32.mrf.mxu0
    %v459 = vadd.f32 %v410, %v458
    %460 = vmatmul.bf16.gmra.mxu0 %v77
    %v461 = vpop.f32.mrf.mxu0
    %v462 = vadd.f32 %v413, %v461
    %v463 = vpop.f32.mrf.mxu0
    %v464 = vadd.f32 %v415, %v463
    %465 = vdwg.mxu0
    %v466 = vld [vmem:[%s2] sm:$0xf]
    %v467 = vadd.f32 %v329, %v331
    %v468 = vadd.f32 %v467, %v334
    %v469 = vadd.f32 %v468, %v336
    %v470 = vadd.f32 %v469, %v339
    %v471 = vadd.f32 %v470, %v341
    %v472 = vadd.f32 %v471, %v344
    %v473 = vadd.f32 %v472, %v346
    %v474 = vadd.f32 %v473, %v349
    %v475 = vadd.f32 %v474, %v351
    %v476 = vadd.f32 %v475, %v354
    %v477 = vadd.f32 %v476, %v356
    %v478 = vadd.f32 %v477, %v359
    %v479 = vadd.f32 %v478, %v361
    %v480 = vadd.f32 %v479, %v364
    %v481 = vadd.f32 %v480, %v366
    %v482 = vrot.slane %v481, 4
    %v483 = vadd.f32 %v481, %v482
    %v484 = vrot.slane %v483, 2
    %v485 = vadd.f32 %v483, %v484
    %v486 = vrot.slane %v485, 1
    %v487 = vadd.f32 %v485, %v486
    %v488 = vadd.f32 %v427, %v429
    %v489 = vadd.f32 %v488, %v432
    %v490 = vadd.f32 %v489, %v434
    %v491 = vadd.f32 %v490, %v437
    %v492 = vadd.f32 %v491, %v439
    %v493 = vadd.f32 %v492, %v442
    %v494 = vadd.f32 %v493, %v444
    %v495 = vadd.f32 %v494, %v447
    %v496 = vadd.f32 %v495, %v449
    %v497 = vadd.f32 %v496, %v452
    %v498 = vadd.f32 %v497, %v454
    %v499 = vadd.f32 %v498, %v457
    %v500 = vadd.f32 %v499, %v459
    %v501 = vadd.f32 %v500, %v462
    %v502 = vadd.f32 %v501, %v464
    %v503 = vrot.slane %v502, 4
    %v504 = vadd.f32 %v502, %v503
    %v505 = vrot.slane %v504, 2
    %v506 = vadd.f32 %v504, %v505
    %v507 = vrot.slane %v506, 1
    %v508 = vadd.f32 %v506, %v507
    %v509 = vrcp.pop 128.0
    %v510 = vmul.f32 128.0, %v509
    %v511 = vsub.f32 1.0, %v510
    %v512 = vmul.f32 %v509, %v511
    %v513 = vadd.f32 %v509, %v512
    %vm514 = vweird.f32 %v509
    %v515 = vsel %vm514, %v509, %v513
    %v516 = vmul.f32 %v487, %v515
    %v517 = vmul.f32 %v508, %v515
    %v518 = vsub.f32 %v329, %v516
    %v519 = vsub.f32 %v427, %v517
    %v520 = vsub.f32 %v331, %v516
    %v521 = vsub.f32 %v429, %v517
    %v522 = vsub.f32 %v334, %v516
    %v523 = vsub.f32 %v432, %v517
    %v524 = vsub.f32 %v336, %v516
    %v525 = vsub.f32 %v434, %v517
    %v526 = vsub.f32 %v339, %v516
    %v527 = vsub.f32 %v437, %v517
    %v528 = vsub.f32 %v341, %v516
    %v529 = vsub.f32 %v439, %v517
    %v530 = vsub.f32 %v344, %v516
    %v531 = vsub.f32 %v442, %v517
    %v532 = vsub.f32 %v346, %v516
    %v533 = vsub.f32 %v444, %v517
    %v534 = vsub.f32 %v349, %v516
    %v535 = vsub.f32 %v447, %v517
    %v536 = vsub.f32 %v351, %v516
    %v537 = vsub.f32 %v449, %v517
    %v538 = vsub.f32 %v354, %v516
    %v539 = vsub.f32 %v452, %v517
    %v540 = vsub.f32 %v356, %v516
    %v541 = vsub.f32 %v454, %v517
    %v542 = vsub.f32 %v359, %v516
    %v543 = vsub.f32 %v457, %v517
    %v544 = vsub.f32 %v361, %v516
    %v545 = vsub.f32 %v459, %v517
    %v546 = vsub.f32 %v364, %v516
    %v547 = vsub.f32 %v462, %v517
    %v548 = vsub.f32 %v366, %v516
    %v549 = vsub.f32 %v464, %v517
    %v550 = vmul.f32 %v518, %v518
    %v551 = vmul.f32 %v519, %v519
    %v552 = vmul.f32 %v520, %v520
    %v553 = vmul.f32 %v521, %v521
    %v554 = vmul.f32 %v522, %v522
    %v555 = vmul.f32 %v523, %v523
    %v556 = vmul.f32 %v524, %v524
    %v557 = vmul.f32 %v525, %v525
    %v558 = vmul.f32 %v526, %v526
    %v559 = vmul.f32 %v527, %v527
    %v560 = vmul.f32 %v528, %v528
    %v561 = vmul.f32 %v529, %v529
    %v562 = vmul.f32 %v530, %v530
    %v563 = vmul.f32 %v531, %v531
    %v564 = vmul.f32 %v532, %v532
    %v565 = vmul.f32 %v533, %v533
    %v566 = vmul.f32 %v534, %v534
    %v567 = vmul.f32 %v535, %v535
    %v568 = vmul.f32 %v536, %v536
    %v569 = vmul.f32 %v537, %v537
    %v570 = vmul.f32 %v538, %v538
    %v571 = vmul.f32 %v539, %v539
    %v572 = vmul.f32 %v540, %v540
    %v573 = vmul.f32 %v541, %v541
    %v574 = vmul.f32 %v542, %v542
    %v575 = vmul.f32 %v543, %v543
    %v576 = vmul.f32 %v544, %v544
    %v577 = vmul.f32 %v545, %v545
    %v578 = vmul.f32 %v546, %v546
    %v579 = vmul.f32 %v547, %v547
    %v580 = vmul.f32 %v548, %v548
    %v581 = vmul.f32 %v549, %v549
    %v582 = vadd.f32 %v550, %v552
    %v583 = vadd.f32 %v582, %v554
    %v584 = vadd.f32 %v583, %v556
    %v585 = vadd.f32 %v584, %v558
    %v586 = vadd.f32 %v585, %v560
    %v587 = vadd.f32 %v586, %v562
    %v588 = vadd.f32 %v587, %v564
    %v589 = vadd.f32 %v588, %v566
    %v590 = vadd.f32 %v589, %v568
    %v591 = vadd.f32 %v590, %v570
    %v592 = vadd.f32 %v591, %v572
    %v593 = vadd.f32 %v592, %v574
    %v594 = vadd.f32 %v593, %v576
    %v595 = vadd.f32 %v594, %v578
    %v596 = vadd.f32 %v595, %v580
    %v597 = vrot.slane %v596, 4
    %v598 = vadd.f32 %v596, %v597
    %v599 = vrot.slane %v598, 2
    %v600 = vadd.f32 %v598, %v599
    %v601 = vrot.slane %v600, 1
    %v602 = vadd.f32 %v600, %v601
    %v603 = vadd.f32 %v551, %v553
    %v604 = vadd.f32 %v603, %v555
    %v605 = vadd.f32 %v604, %v557
    %v606 = vadd.f32 %v605, %v559
    %v607 = vadd.f32 %v606, %v561
    %v608 = vadd.f32 %v607, %v563
    %v609 = vadd.f32 %v608, %v565
    %v610 = vadd.f32 %v609, %v567
    %v611 = vadd.f32 %v610, %v569
    %v612 = vadd.f32 %v611, %v571
    %v613 = vadd.f32 %v612, %v573
    %v614 = vadd.f32 %v613, %v575
    %v615 = vadd.f32 %v614, %v577
    %v616 = vadd.f32 %v615, %v579
    %v617 = vadd.f32 %v616, %v581
    %v618 = vrot.slane %v617, 4
    %v619 = vadd.f32 %v617, %v618
    %v620 = vrot.slane %v619, 2
    %v621 = vadd.f32 %v619, %v620
    %v622 = vrot.slane %v621, 1
    %v623 = vadd.f32 %v621, %v622
    %v624 = vmul.f32 %v602, %v515
    %v625 = vmul.f32 %v623, %v515
    %v626 = vadd.f32 %v624, 1e-05
    %v627 = vadd.f32 %v625, 1e-05
    %v628 = vrsqrt.pop %v626
    %v629 = vmul.f32 %v628, %v626
    %v630 = vmul.f32 %v629, %v628
    %v631 = vmul.f32 0.5, %v630
    %v632 = vsub.f32 1.5, %v631
    %v633 = vmul.f32 %v628, %v632
    %vm634 = vweird.f32 %v626
    %vm635 = vweird.f32 %v628
    %vm636 = vmor %vm634, %vm635
    %v637 = vsel %vm636, %v628, %v633
    %v638 = vrsqrt.pop %v627
    %v639 = vmul.f32 %v638, %v627
    %v640 = vmul.f32 %v639, %v638
    %v641 = vmul.f32 0.5, %v640
    %v642 = vsub.f32 1.5, %v641
    %v643 = vmul.f32 %v638, %v642
    %vm644 = vweird.f32 %v627
    %vm645 = vweird.f32 %v638
    %vm646 = vmor %vm644, %vm645
    %v647 = vsel %vm646, %v638, %v643
    %v649 = vperm.slane %v466, 0
    %v650 = vperm.slane %v466, 2
    %v653 = vmul.f32 %v637, %v649
    %v654 = vmul.f32 %v647, %v650
    %v655 = vperm.slane %v653, 0
    %v656 = vperm.slane %v654, 0
    %v657 = vmul.f32 %v518, %v655
    %v658 = vmul.f32 %v519, %v656
    %v659 = vmul.f32 %v520, %v655
    %v660 = vmul.f32 %v521, %v656
    %v661 = vmul.f32 %v522, %v655
    %v662 = vmul.f32 %v523, %v656
    %v663 = vmul.f32 %v524, %v655
    %v664 = vmul.f32 %v525, %v656
    %v665 = vmul.f32 %v526, %v655
    %v666 = vmul.f32 %v527, %v656
    %v667 = vmul.f32 %v528, %v655
    %v668 = vmul.f32 %v529, %v656
    %v669 = vmul.f32 %v530, %v655
    %v670 = vmul.f32 %v531, %v656
    %v671 = vmul.f32 %v532, %v655
    %v672 = vmul.f32 %v533, %v656
    %v673 = vmul.f32 %v534, %v655
    %v674 = vmul.f32 %v535, %v656
    %v675 = vmul.f32 %v536, %v655
    %v676 = vmul.f32 %v537, %v656
    %v677 = vmul.f32 %v538, %v655
    %v678 = vmul.f32 %v539, %v656
    %v679 = vmul.f32 %v540, %v655
    %v680 = vmul.f32 %v541, %v656
    %v681 = vmul.f32 %v542, %v655
    %v682 = vmul.f32 %v543, %v656
    %v683 = vmul.f32 %v544, %v655
    %v684 = vmul.f32 %v545, %v656
    %v685 = vmul.f32 %v546, %v655
    %v686 = vmul.f32 %v547, %v656
    %v687 = vmul.f32 %v548, %v655
    %v688 = vmul.f32 %v549, %v656
    %v689 = vperm.slane %v466, 1
    %v690 = vperm.slane %v466, 3
    %v693 = vperm.slane %v689, 1
    %v694 = vperm.slane %v690, 1
    %v695 = vadd.f32 %v657, %v693
    %v696 = vadd.f32 %v658, %v694
    %v697 = vadd.f32 %v659, %v693
    %v698 = vadd.f32 %v660, %v694
    %v699 = vadd.f32 %v661, %v693
    %v700 = vadd.f32 %v662, %v694
    %v701 = vadd.f32 %v663, %v693
    %v702 = vadd.f32 %v664, %v694
    %v703 = vadd.f32 %v665, %v693
    %v704 = vadd.f32 %v666, %v694
    %v705 = vadd.f32 %v667, %v693
    %v706 = vadd.f32 %v668, %v694
    %v707 = vadd.f32 %v669, %v693
    %v708 = vadd.f32 %v670, %v694
    %v709 = vadd.f32 %v671, %v693
    %v710 = vadd.f32 %v672, %v694
    %v711 = vadd.f32 %v673, %v693
    %v712 = vadd.f32 %v674, %v694
    %v713 = vadd.f32 %v675, %v693
    %v714 = vadd.f32 %v676, %v694
    %v715 = vadd.f32 %v677, %v693
    %v716 = vadd.f32 %v678, %v694
    %v717 = vadd.f32 %v679, %v693
    %v718 = vadd.f32 %v680, %v694
    %v719 = vadd.f32 %v681, %v693
    %v720 = vadd.f32 %v682, %v694
    %v721 = vadd.f32 %v683, %v693
    %v722 = vadd.f32 %v684, %v694
    %v723 = vadd.f32 %v685, %v693
    %v724 = vadd.f32 %v686, %v694
    %v725 = vadd.f32 %v687, %v693
    %v726 = vadd.f32 %v688, %v694
    %v727 = vmul.f32 %v695, 0.01
    %v728 = vmul.f32 %v696, 0.01
    %v729 = vmul.f32 %v697, 0.01
    %v730 = vmul.f32 %v698, 0.01
    %v731 = vmul.f32 %v699, 0.01
    %v732 = vmul.f32 %v700, 0.01
    %v733 = vmul.f32 %v701, 0.01
    %v734 = vmul.f32 %v702, 0.01
    %v735 = vmul.f32 %v703, 0.01
    %v736 = vmul.f32 %v704, 0.01
    %v737 = vmul.f32 %v705, 0.01
    %v738 = vmul.f32 %v706, 0.01
    %v739 = vmul.f32 %v707, 0.01
    %v740 = vmul.f32 %v708, 0.01
    %v741 = vmul.f32 %v709, 0.01
    %v742 = vmul.f32 %v710, 0.01
    %v743 = vmul.f32 %v711, 0.01
    %v744 = vmul.f32 %v712, 0.01
    %v745 = vmul.f32 %v713, 0.01
    %v746 = vmul.f32 %v714, 0.01
    %v747 = vmul.f32 %v715, 0.01
    %v748 = vmul.f32 %v716, 0.01
    %v749 = vmul.f32 %v717, 0.01
    %v750 = vmul.f32 %v718, 0.01
    %v751 = vmul.f32 %v719, 0.01
    %v752 = vmul.f32 %v720, 0.01
    %v753 = vmul.f32 %v721, 0.01
    %v754 = vmul.f32 %v722, 0.01
    %v755 = vmul.f32 %v723, 0.01
    %v756 = vmul.f32 %v724, 0.01
    %v757 = vmul.f32 %v725, 0.01
    %v758 = vmul.f32 %v726, 0.01
    %v759 = vmax.f32 %v695, %v727
    %v760 = vmax.f32 %v696, %v728
    %v761 = vmax.f32 %v697, %v729
    %v762 = vmax.f32 %v698, %v730
    %v763 = vmax.f32 %v699, %v731
    %v764 = vmax.f32 %v700, %v732
    %v765 = vmax.f32 %v701, %v733
    %v766 = vmax.f32 %v702, %v734
    %v767 = vmax.f32 %v703, %v735
    %v768 = vmax.f32 %v704, %v736
    %v769 = vmax.f32 %v705, %v737
    %v770 = vmax.f32 %v706, %v738
    %v771 = vmax.f32 %v707, %v739
    %v772 = vmax.f32 %v708, %v740
    %v773 = vmax.f32 %v709, %v741
    %v774 = vmax.f32 %v710, %v742
    %v775 = vmax.f32 %v711, %v743
    %v776 = vmax.f32 %v712, %v744
    %v777 = vmax.f32 %v713, %v745
    %v778 = vmax.f32 %v714, %v746
    %v779 = vmax.f32 %v715, %v747
    %v780 = vmax.f32 %v716, %v748
    %v781 = vmax.f32 %v717, %v749
    %v782 = vmax.f32 %v718, %v750
    %v783 = vmax.f32 %v719, %v751
    %v784 = vmax.f32 %v720, %v752
    %v785 = vmax.f32 %v721, %v753
    %v786 = vmax.f32 %v722, %v754
    %v787 = vmax.f32 %v723, %v755
    %v788 = vmax.f32 %v724, %v756
    %v789 = vmax.f32 %v725, %v757
    %v790 = vmax.f32 %v726, %v758
    %v791 = vpack.c.bf16 %v761, %v759
    %v792 = vpack.c.bf16 %v762, %v760
    %v793 = vpack.c.bf16 %v765, %v763
    %v794 = vpack.c.bf16 %v766, %v764
    %v795 = vpack.c.bf16 %v769, %v767
    %v796 = vpack.c.bf16 %v770, %v768
    %v797 = vpack.c.bf16 %v773, %v771
    %v798 = vpack.c.bf16 %v774, %v772
    %v799 = vpack.c.bf16 %v777, %v775
    %v800 = vpack.c.bf16 %v778, %v776
    %v801 = vpack.c.bf16 %v781, %v779
    %v802 = vpack.c.bf16 %v782, %v780
    %v803 = vpack.c.bf16 %v785, %v783
    %v804 = vpack.c.bf16 %v786, %v784
    %v805 = vpack.c.bf16 %v789, %v787
    %v806 = vpack.c.bf16 %v790, %v788
    %s807 = scalar_lea.vmem [#allocation2], 256
    %v808 = vld [vmem:[%s807] sm:$0xff]
    %v809 = vld [vmem:[%s807 + $0x8] sm:$0xff]
    %v810 = vld [vmem:[%s807 + $0x10] sm:$0xff]
    %v811 = vld [vmem:[%s807 + $0x18] sm:$0xff]
    %v812 = vld [vmem:[%s807 + $0x20] sm:$0xff]
    %v813 = vld [vmem:[%s807 + $0x28] sm:$0xff]
    %v814 = vld [vmem:[%s807 + $0x30] sm:$0xff]
    %v815 = vld [vmem:[%s807 + $0x38] sm:$0xff]
    %v816 = vld [vmem:[%s807 + $0x40] sm:$0xff]
    %v817 = vld [vmem:[%s807 + $0x48] sm:$0xff]
    %v818 = vld [vmem:[%s807 + $0x50] sm:$0xff]
    %v819 = vld [vmem:[%s807 + $0x58] sm:$0xff]
    %v820 = vld [vmem:[%s807 + $0x60] sm:$0xff]
    %v821 = vld [vmem:[%s807 + $0x68] sm:$0xff]
    %v822 = vld [vmem:[%s807 + $0x70] sm:$0xff]
    %v823 = vld [vmem:[%s807 + $0x78] sm:$0xff]
    %v824 = vld [vmem:[%s807 + $0x80] sm:$0xff]
    %v825 = vld [vmem:[%s807 + $0x88] sm:$0xff]
    %v826 = vld [vmem:[%s807 + $0x90] sm:$0xff]
    %v827 = vld [vmem:[%s807 + $0x98] sm:$0xff]
    %v828 = vld [vmem:[%s807 + $0xa0] sm:$0xff]
    %v829 = vld [vmem:[%s807 + $0xa8] sm:$0xff]
    %v830 = vld [vmem:[%s807 + $0xb0] sm:$0xff]
    %v831 = vld [vmem:[%s807 + $0xb8] sm:$0xff]
    %v832 = vld [vmem:[%s807 + $0xc0] sm:$0xff]
    %v833 = vld [vmem:[%s807 + $0xc8] sm:$0xff]
    %v834 = vld [vmem:[%s807 + $0xd0] sm:$0xff]
    %v835 = vld [vmem:[%s807 + $0xd8] sm:$0xff]
    %v836 = vld [vmem:[%s807 + $0xe0] sm:$0xff]
    %v837 = vld [vmem:[%s807 + $0xe8] sm:$0xff]
    %v838 = vld [vmem:[%s807 + $0xf0] sm:$0xff]
    %v839 = vld [vmem:[%s807 + $0xf8] sm:$0xff]
    %v872 = vunpack.c.l.b16 %v808
    %v873 = vunpack.c.h.b16 %v808
    %v874 = vunpack.c.l.b16 %v809
    %v875 = vunpack.c.h.b16 %v809
    %v876 = vunpack.c.l.b16 %v810
    %v877 = vunpack.c.h.b16 %v810
    %v878 = vunpack.c.l.b16 %v811
    %v879 = vunpack.c.h.b16 %v811
    %v880 = vunpack.c.l.b16 %v812
    %v881 = vunpack.c.h.b16 %v812
    %v882 = vunpack.c.l.b16 %v813
    %v883 = vunpack.c.h.b16 %v813
    %v884 = vunpack.c.l.b16 %v814
    %v885 = vunpack.c.h.b16 %v814
    %v886 = vunpack.c.l.b16 %v815
    %v887 = vunpack.c.h.b16 %v815
    %v888 = vunpack.c.l.b16 %v816
    %v889 = vunpack.c.h.b16 %v816
    %v890 = vunpack.c.l.b16 %v817
    %v891 = vunpack.c.h.b16 %v817
    %v892 = vunpack.c.l.b16 %v818
    %v893 = vunpack.c.h.b16 %v818
    %v894 = vunpack.c.l.b16 %v819
    %v895 = vunpack.c.h.b16 %v819
    %v896 = vunpack.c.l.b16 %v820
    %v897 = vunpack.c.h.b16 %v820
    %v898 = vunpack.c.l.b16 %v821
    %v899 = vunpack.c.h.b16 %v821
    %v900 = vunpack.c.l.b16 %v822
    %v901 = vunpack.c.h.b16 %v822
    %v902 = vunpack.c.l.b16 %v823
    %v903 = vunpack.c.h.b16 %v823
    %v904 = vunpack.c.l.b16 %v824
    %v905 = vunpack.c.h.b16 %v824
    %v906 = vunpack.c.l.b16 %v825
    %v907 = vunpack.c.h.b16 %v825
    %v908 = vunpack.c.l.b16 %v826
    %v909 = vunpack.c.h.b16 %v826
    %v910 = vunpack.c.l.b16 %v827
    %v911 = vunpack.c.h.b16 %v827
    %v912 = vunpack.c.l.b16 %v828
    %v913 = vunpack.c.h.b16 %v828
    %v914 = vunpack.c.l.b16 %v829
    %v915 = vunpack.c.h.b16 %v829
    %v916 = vunpack.c.l.b16 %v830
    %v917 = vunpack.c.h.b16 %v830
    %v918 = vunpack.c.l.b16 %v831
    %v919 = vunpack.c.h.b16 %v831
    %v920 = vunpack.c.l.b16 %v832
    %v921 = vunpack.c.h.b16 %v832
    %v922 = vunpack.c.l.b16 %v833
    %v923 = vunpack.c.h.b16 %v833
    %v924 = vunpack.c.l.b16 %v834
    %v925 = vunpack.c.h.b16 %v834
    %v926 = vunpack.c.l.b16 %v835
    %v927 = vunpack.c.h.b16 %v835
    %v928 = vunpack.c.l.b16 %v836
    %v929 = vunpack.c.h.b16 %v836
    %v930 = vunpack.c.l.b16 %v837
    %v931 = vunpack.c.h.b16 %v837
    %v932 = vunpack.c.l.b16 %v838
    %v933 = vunpack.c.h.b16 %v838
    %v934 = vunpack.c.l.b16 %v839
    %v935 = vunpack.c.h.b16 %v839
    %v936 = vpack.c.b16 %v874, %v872
    %v937 = vpack.c.b16 %v875, %v873
    %v938 = vpack.c.b16 %v878, %v876
    %v939 = vpack.c.b16 %v879, %v877
    %v940 = vpack.c.b16 %v882, %v880
    %v941 = vpack.c.b16 %v883, %v881
    %v942 = vpack.c.b16 %v886, %v884
    %v943 = vpack.c.b16 %v887, %v885
    %v944 = vpack.c.b16 %v890, %v888
    %v945 = vpack.c.b16 %v891, %v889
    %v946 = vpack.c.b16 %v894, %v892
    %v947 = vpack.c.b16 %v895, %v893
    %v948 = vpack.c.b16 %v898, %v896
    %v949 = vpack.c.b16 %v899, %v897
    %v950 = vpack.c.b16 %v902, %v900
    %v951 = vpack.c.b16 %v903, %v901
    %v952 = vpack.c.b16 %v906, %v904
    %v953 = vpack.c.b16 %v907, %v905
    %v954 = vpack.c.b16 %v910, %v908
    %v955 = vpack.c.b16 %v911, %v909
    %v956 = vpack.c.b16 %v914, %v912
    %v957 = vpack.c.b16 %v915, %v913
    %v958 = vpack.c.b16 %v918, %v916
    %v959 = vpack.c.b16 %v919, %v917
    %v960 = vpack.c.b16 %v922, %v920
    %v961 = vpack.c.b16 %v923, %v921
    %v962 = vpack.c.b16 %v926, %v924
    %v963 = vpack.c.b16 %v927, %v925
    %v964 = vpack.c.b16 %v930, %v928
    %v965 = vpack.c.b16 %v931, %v929
    %v966 = vpack.c.b16 %v934, %v932
    %v967 = vpack.c.b16 %v935, %v933
    %1000 = vmatpush.bf16.msra.mxu0 %v950
    %1001 = vmatpush.bf16.msra.mxu0 %v948
    %1002 = vmatpush.bf16.msra.mxu0 %v946
    %1003 = vmatpush.bf16.msra.mxu0 %v944
    %1004 = vmatpush.bf16.msra.mxu0 %v942
    %1005 = vmatpush.bf16.msra.mxu0 %v940
    %1006 = vmatpush.bf16.msra.mxu0 %v938
    %1007 = vmatpush.bf16.msra.mxu0 %v936
    %1008 = vmatmul.bf16.gmra.mxu0 %v791
    %v1009 = vpop.f32.mrf.mxu0
    %v1010 = vadd.f32 0.0, %v1009
    %v1011 = vpop.f32.mrf.mxu0
    %v1012 = vadd.f32 0.0, %v1011
    %1013 = vmatmul.bf16.gmra.mxu0 %v793
    %v1014 = vpop.f32.mrf.mxu0
    %v1015 = vadd.f32 0.0, %v1014
    %v1016 = vpop.f32.mrf.mxu0
    %v1017 = vadd.f32 0.0, %v1016
    %1018 = vmatmul.bf16.gmra.mxu0 %v795
    %v1019 = vpop.f32.mrf.mxu0
    %v1020 = vadd.f32 0.0, %v1019
    %v1021 = vpop.f32.mrf.mxu0
    %v1022 = vadd.f32 0.0, %v1021
    %1023 = vmatmul.bf16.gmra.mxu0 %v797
    %v1024 = vpop.f32.mrf.mxu0
    %v1025 = vadd.f32 0.0, %v1024
    %v1026 = vpop.f32.mrf.mxu0
    %v1027 = vadd.f32 0.0, %v1026
    %1028 = vmatmul.bf16.gmra.mxu0 %v799
    %v1029 = vpop.f32.mrf.mxu0
    %v1030 = vadd.f32 0.0, %v1029
    %v1031 = vpop.f32.mrf.mxu0
    %v1032 = vadd.f32 0.0, %v1031
    %1033 = vmatmul.bf16.gmra.mxu0 %v801
    %v1034 = vpop.f32.mrf.mxu0
    %v1035 = vadd.f32 0.0, %v1034
    %v1036 = vpop.f32.mrf.mxu0
    %v1037 = vadd.f32 0.0, %v1036
    %1038 = vmatmul.bf16.gmra.mxu0 %v803
    %v1039 = vpop.f32.mrf.mxu0
    %v1040 = vadd.f32 0.0, %v1039
    %v1041 = vpop.f32.mrf.mxu0
    %v1042 = vadd.f32 0.0, %v1041
    %1043 = vmatmul.bf16.gmra.mxu0 %v805
    %v1044 = vpop.f32.mrf.mxu0
    %v1045 = vadd.f32 0.0, %v1044
    %v1046 = vpop.f32.mrf.mxu0
    %v1047 = vadd.f32 0.0, %v1046
    %1048 = vdwg.mxu0
    %1049 = vmatpush.bf16.msra.mxu0 %v966
    %1050 = vmatpush.bf16.msra.mxu0 %v964
    %1051 = vmatpush.bf16.msra.mxu0 %v962
    %1052 = vmatpush.bf16.msra.mxu0 %v960
    %1053 = vmatpush.bf16.msra.mxu0 %v958
    %1054 = vmatpush.bf16.msra.mxu0 %v956
    %1055 = vmatpush.bf16.msra.mxu0 %v954
    %1056 = vmatpush.bf16.msra.mxu0 %v952
    %1057 = vmatmul.bf16.gmra.mxu0 %v792
    %v1058 = vpop.f32.mrf.mxu0
    %v1059 = vadd.f32 %v1010, %v1058
    %v1060 = vpop.f32.mrf.mxu0
    %v1061 = vadd.f32 %v1012, %v1060
    %1062 = vmatmul.bf16.gmra.mxu0 %v794
    %v1063 = vpop.f32.mrf.mxu0
    %v1064 = vadd.f32 %v1015, %v1063
    %v1065 = vpop.f32.mrf.mxu0
    %v1066 = vadd.f32 %v1017, %v1065
    %1067 = vmatmul.bf16.gmra.mxu0 %v796
    %v1068 = vpop.f32.mrf.mxu0
    %v1069 = vadd.f32 %v1020, %v1068
    %v1070 = vpop.f32.mrf.mxu0
    %v1071 = vadd.f32 %v1022, %v1070
    %1072 = vmatmul.bf16.gmra.mxu0 %v798
    %v1073 = vpop.f32.mrf.mxu0
    %v1074 = vadd.f32 %v1025, %v1073
    %v1075 = vpop.f32.mrf.mxu0
    %v1076 = vadd.f32 %v1027, %v1075
    %1077 = vmatmul.bf16.gmra.mxu0 %v800
    %v1078 = vpop.f32.mrf.mxu0
    %v1079 = vadd.f32 %v1030, %v1078
    %v1080 = vpop.f32.mrf.mxu0
    %v1081 = vadd.f32 %v1032, %v1080
    %1082 = vmatmul.bf16.gmra.mxu0 %v802
    %v1083 = vpop.f32.mrf.mxu0
    %v1084 = vadd.f32 %v1035, %v1083
    %v1085 = vpop.f32.mrf.mxu0
    %v1086 = vadd.f32 %v1037, %v1085
    %1087 = vmatmul.bf16.gmra.mxu0 %v804
    %v1088 = vpop.f32.mrf.mxu0
    %v1089 = vadd.f32 %v1040, %v1088
    %v1090 = vpop.f32.mrf.mxu0
    %v1091 = vadd.f32 %v1042, %v1090
    %1092 = vmatmul.bf16.gmra.mxu0 %v806
    %v1093 = vpop.f32.mrf.mxu0
    %v1094 = vadd.f32 %v1045, %v1093
    %v1095 = vpop.f32.mrf.mxu0
    %v1096 = vadd.f32 %v1047, %v1095
    %1097 = vdwg.mxu0
    %1098 = vmatpush.bf16.msra.mxu0 %v951
    %1099 = vmatpush.bf16.msra.mxu0 %v949
    %1100 = vmatpush.bf16.msra.mxu0 %v947
    %1101 = vmatpush.bf16.msra.mxu0 %v945
    %1102 = vmatpush.bf16.msra.mxu0 %v943
    %1103 = vmatpush.bf16.msra.mxu0 %v941
    %1104 = vmatpush.bf16.msra.mxu0 %v939
    %1105 = vmatpush.bf16.msra.mxu0 %v937
    %1106 = vmatmul.bf16.gmra.mxu0 %v791
    %v1107 = vpop.f32.mrf.mxu0
    %v1108 = vadd.f32 0.0, %v1107
    %v1109 = vpop.f32.mrf.mxu0
    %v1110 = vadd.f32 0.0, %v1109
    %1111 = vmatmul.bf16.gmra.mxu0 %v793
    %v1112 = vpop.f32.mrf.mxu0
    %v1113 = vadd.f32 0.0, %v1112
    %v1114 = vpop.f32.mrf.mxu0
    %v1115 = vadd.f32 0.0, %v1114
    %1116 = vmatmul.bf16.gmra.mxu0 %v795
    %v1117 = vpop.f32.mrf.mxu0
    %v1118 = vadd.f32 0.0, %v1117
    %v1119 = vpop.f32.mrf.mxu0
    %v1120 = vadd.f32 0.0, %v1119
    %1121 = vmatmul.bf16.gmra.mxu0 %v797
    %v1122 = vpop.f32.mrf.mxu0
    %v1123 = vadd.f32 0.0, %v1122
    %v1124 = vpop.f32.mrf.mxu0
    %v1125 = vadd.f32 0.0, %v1124
    %1126 = vmatmul.bf16.gmra.mxu0 %v799
    %v1127 = vpop.f32.mrf.mxu0
    %v1128 = vadd.f32 0.0, %v1127
    %v1129 = vpop.f32.mrf.mxu0
    %v1130 = vadd.f32 0.0, %v1129
    %1131 = vmatmul.bf16.gmra.mxu0 %v801
    %v1132 = vpop.f32.mrf.mxu0
    %v1133 = vadd.f32 0.0, %v1132
    %v1134 = vpop.f32.mrf.mxu0
    %v1135 = vadd.f32 0.0, %v1134
    %1136 = vmatmul.bf16.gmra.mxu0 %v803
    %v1137 = vpop.f32.mrf.mxu0
    %v1138 = vadd.f32 0.0, %v1137
    %v1139 = vpop.f32.mrf.mxu0
    %v1140 = vadd.f32 0.0, %v1139
    %1141 = vmatmul.bf16.gmra.mxu0 %v805
    %v1142 = vpop.f32.mrf.mxu0
    %v1143 = vadd.f32 0.0, %v1142
    %v1144 = vpop.f32.mrf.mxu0
    %v1145 = vadd.f32 0.0, %v1144
    %1146 = vdwg.mxu0
    %1147 = vmatpush.bf16.msra.mxu0 %v967
    %1148 = vmatpush.bf16.msra.mxu0 %v965
    %1149 = vmatpush.bf16.msra.mxu0 %v963
    %1150 = vmatpush.bf16.msra.mxu0 %v961
    %1151 = vmatpush.bf16.msra.mxu0 %v959
    %1152 = vmatpush.bf16.msra.mxu0 %v957
    %1153 = vmatpush.bf16.msra.mxu0 %v955
    %1154 = vmatpush.bf16.msra.mxu0 %v953
    %1155 = vmatmul.bf16.gmra.mxu0 %v792
    %v1156 = vpop.f32.mrf.mxu0
    %v1157 = vadd.f32 %v1108, %v1156
    %v1158 = vpop.f32.mrf.mxu0
    %v1159 = vadd.f32 %v1110, %v1158
    %1160 = vmatmul.bf16.gmra.mxu0 %v794
    %v1161 = vpop.f32.mrf.mxu0
    %v1162 = vadd.f32 %v1113, %v1161
    %v1163 = vpop.f32.mrf.mxu0
    %v1164 = vadd.f32 %v1115, %v1163
    %1165 = vmatmul.bf16.gmra.mxu0 %v796
    %v1166 = vpop.f32.mrf.mxu0
    %v1167 = vadd.f32 %v1118, %v1166
    %v1168 = vpop.f32.mrf.mxu0
    %v1169 = vadd.f32 %v1120, %v1168
    %1170 = vmatmul.bf16.gmra.mxu0 %v798
    %v1171 = vpop.f32.mrf.mxu0
    %v1172 = vadd.f32 %v1123, %v1171
    %v1173 = vpop.f32.mrf.mxu0
    %v1174 = vadd.f32 %v1125, %v1173
    %1175 = vmatmul.bf16.gmra.mxu0 %v800
    %v1176 = vpop.f32.mrf.mxu0
    %v1177 = vadd.f32 %v1128, %v1176
    %v1178 = vpop.f32.mrf.mxu0
    %v1179 = vadd.f32 %v1130, %v1178
    %1180 = vmatmul.bf16.gmra.mxu0 %v802
    %v1181 = vpop.f32.mrf.mxu0
    %v1182 = vadd.f32 %v1133, %v1181
    %v1183 = vpop.f32.mrf.mxu0
    %v1184 = vadd.f32 %v1135, %v1183
    %1185 = vmatmul.bf16.gmra.mxu0 %v804
    %v1186 = vpop.f32.mrf.mxu0
    %v1187 = vadd.f32 %v1138, %v1186
    %v1188 = vpop.f32.mrf.mxu0
    %v1189 = vadd.f32 %v1140, %v1188
    %1190 = vmatmul.bf16.gmra.mxu0 %v806
    %v1191 = vpop.f32.mrf.mxu0
    %v1192 = vadd.f32 %v1143, %v1191
    %v1193 = vpop.f32.mrf.mxu0
    %v1194 = vadd.f32 %v1145, %v1193
    %1195 = vdwg.mxu0
    %s1196 = scalar_lea.vmem %s2, 4
    %v1197 = vld [vmem:[%s1196] sm:$0xf]
    %v1198 = vadd.f32 %v1059, %v1061
    %v1199 = vadd.f32 %v1198, %v1064
    %v1200 = vadd.f32 %v1199, %v1066
    %v1201 = vadd.f32 %v1200, %v1069
    %v1202 = vadd.f32 %v1201, %v1071
    %v1203 = vadd.f32 %v1202, %v1074
    %v1204 = vadd.f32 %v1203, %v1076
    %v1205 = vadd.f32 %v1204, %v1079
    %v1206 = vadd.f32 %v1205, %v1081
    %v1207 = vadd.f32 %v1206, %v1084
    %v1208 = vadd.f32 %v1207, %v1086
    %v1209 = vadd.f32 %v1208, %v1089
    %v1210 = vadd.f32 %v1209, %v1091
    %v1211 = vadd.f32 %v1210, %v1094
    %v1212 = vadd.f32 %v1211, %v1096
    %v1213 = vrot.slane %v1212, 4
    %v1214 = vadd.f32 %v1212, %v1213
    %v1215 = vrot.slane %v1214, 2
    %v1216 = vadd.f32 %v1214, %v1215
    %v1217 = vrot.slane %v1216, 1
    %v1218 = vadd.f32 %v1216, %v1217
    %v1219 = vadd.f32 %v1157, %v1159
    %v1220 = vadd.f32 %v1219, %v1162
    %v1221 = vadd.f32 %v1220, %v1164
    %v1222 = vadd.f32 %v1221, %v1167
    %v1223 = vadd.f32 %v1222, %v1169
    %v1224 = vadd.f32 %v1223, %v1172
    %v1225 = vadd.f32 %v1224, %v1174
    %v1226 = vadd.f32 %v1225, %v1177
    %v1227 = vadd.f32 %v1226, %v1179
    %v1228 = vadd.f32 %v1227, %v1182
    %v1229 = vadd.f32 %v1228, %v1184
    %v1230 = vadd.f32 %v1229, %v1187
    %v1231 = vadd.f32 %v1230, %v1189
    %v1232 = vadd.f32 %v1231, %v1192
    %v1233 = vadd.f32 %v1232, %v1194
    %v1234 = vrot.slane %v1233, 4
    %v1235 = vadd.f32 %v1233, %v1234
    %v1236 = vrot.slane %v1235, 2
    %v1237 = vadd.f32 %v1235, %v1236
    %v1238 = vrot.slane %v1237, 1
    %v1239 = vadd.f32 %v1237, %v1238
    %v1240 = vmul.f32 %v1218, %v515
    %v1241 = vmul.f32 %v1239, %v515
    %v1242 = vsub.f32 %v1059, %v1240
    %v1243 = vsub.f32 %v1157, %v1241
    %v1244 = vsub.f32 %v1061, %v1240
    %v1245 = vsub.f32 %v1159, %v1241
    %v1246 = vsub.f32 %v1064, %v1240
    %v1247 = vsub.f32 %v1162, %v1241
    %v1248 = vsub.f32 %v1066, %v1240
    %v1249 = vsub.f32 %v1164, %v1241
    %v1250 = vsub.f32 %v1069, %v1240
    %v1251 = vsub.f32 %v1167, %v1241
    %v1252 = vsub.f32 %v1071, %v1240
    %v1253 = vsub.f32 %v1169, %v1241
    %v1254 = vsub.f32 %v1074, %v1240
    %v1255 = vsub.f32 %v1172, %v1241
    %v1256 = vsub.f32 %v1076, %v1240
    %v1257 = vsub.f32 %v1174, %v1241
    %v1258 = vsub.f32 %v1079, %v1240
    %v1259 = vsub.f32 %v1177, %v1241
    %v1260 = vsub.f32 %v1081, %v1240
    %v1261 = vsub.f32 %v1179, %v1241
    %v1262 = vsub.f32 %v1084, %v1240
    %v1263 = vsub.f32 %v1182, %v1241
    %v1264 = vsub.f32 %v1086, %v1240
    %v1265 = vsub.f32 %v1184, %v1241
    %v1266 = vsub.f32 %v1089, %v1240
    %v1267 = vsub.f32 %v1187, %v1241
    %v1268 = vsub.f32 %v1091, %v1240
    %v1269 = vsub.f32 %v1189, %v1241
    %v1270 = vsub.f32 %v1094, %v1240
    %v1271 = vsub.f32 %v1192, %v1241
    %v1272 = vsub.f32 %v1096, %v1240
    %v1273 = vsub.f32 %v1194, %v1241
    %v1274 = vmul.f32 %v1242, %v1242
    %v1275 = vmul.f32 %v1243, %v1243
    %v1276 = vmul.f32 %v1244, %v1244
    %v1277 = vmul.f32 %v1245, %v1245
    %v1278 = vmul.f32 %v1246, %v1246
    %v1279 = vmul.f32 %v1247, %v1247
    %v1280 = vmul.f32 %v1248, %v1248
    %v1281 = vmul.f32 %v1249, %v1249
    %v1282 = vmul.f32 %v1250, %v1250
    %v1283 = vmul.f32 %v1251, %v1251
    %v1284 = vmul.f32 %v1252, %v1252
    %v1285 = vmul.f32 %v1253, %v1253
    %v1286 = vmul.f32 %v1254, %v1254
    %v1287 = vmul.f32 %v1255, %v1255
    %v1288 = vmul.f32 %v1256, %v1256
    %v1289 = vmul.f32 %v1257, %v1257
    %v1290 = vmul.f32 %v1258, %v1258
    %v1291 = vmul.f32 %v1259, %v1259
    %v1292 = vmul.f32 %v1260, %v1260
    %v1293 = vmul.f32 %v1261, %v1261
    %v1294 = vmul.f32 %v1262, %v1262
    %v1295 = vmul.f32 %v1263, %v1263
    %v1296 = vmul.f32 %v1264, %v1264
    %v1297 = vmul.f32 %v1265, %v1265
    %v1298 = vmul.f32 %v1266, %v1266
    %v1299 = vmul.f32 %v1267, %v1267
    %v1300 = vmul.f32 %v1268, %v1268
    %v1301 = vmul.f32 %v1269, %v1269
    %v1302 = vmul.f32 %v1270, %v1270
    %v1303 = vmul.f32 %v1271, %v1271
    %v1304 = vmul.f32 %v1272, %v1272
    %v1305 = vmul.f32 %v1273, %v1273
    %v1306 = vadd.f32 %v1274, %v1276
    %v1307 = vadd.f32 %v1306, %v1278
    %v1308 = vadd.f32 %v1307, %v1280
    %v1309 = vadd.f32 %v1308, %v1282
    %v1310 = vadd.f32 %v1309, %v1284
    %v1311 = vadd.f32 %v1310, %v1286
    %v1312 = vadd.f32 %v1311, %v1288
    %v1313 = vadd.f32 %v1312, %v1290
    %v1314 = vadd.f32 %v1313, %v1292
    %v1315 = vadd.f32 %v1314, %v1294
    %v1316 = vadd.f32 %v1315, %v1296
    %v1317 = vadd.f32 %v1316, %v1298
    %v1318 = vadd.f32 %v1317, %v1300
    %v1319 = vadd.f32 %v1318, %v1302
    %v1320 = vadd.f32 %v1319, %v1304
    %v1321 = vrot.slane %v1320, 4
    %v1322 = vadd.f32 %v1320, %v1321
    %v1323 = vrot.slane %v1322, 2
    %v1324 = vadd.f32 %v1322, %v1323
    %v1325 = vrot.slane %v1324, 1
    %v1326 = vadd.f32 %v1324, %v1325
    %v1327 = vadd.f32 %v1275, %v1277
    %v1328 = vadd.f32 %v1327, %v1279
    %v1329 = vadd.f32 %v1328, %v1281
    %v1330 = vadd.f32 %v1329, %v1283
    %v1331 = vadd.f32 %v1330, %v1285
    %v1332 = vadd.f32 %v1331, %v1287
    %v1333 = vadd.f32 %v1332, %v1289
    %v1334 = vadd.f32 %v1333, %v1291
    %v1335 = vadd.f32 %v1334, %v1293
    %v1336 = vadd.f32 %v1335, %v1295
    %v1337 = vadd.f32 %v1336, %v1297
    %v1338 = vadd.f32 %v1337, %v1299
    %v1339 = vadd.f32 %v1338, %v1301
    %v1340 = vadd.f32 %v1339, %v1303
    %v1341 = vadd.f32 %v1340, %v1305
    %v1342 = vrot.slane %v1341, 4
    %v1343 = vadd.f32 %v1341, %v1342
    %v1344 = vrot.slane %v1343, 2
    %v1345 = vadd.f32 %v1343, %v1344
    %v1346 = vrot.slane %v1345, 1
    %v1347 = vadd.f32 %v1345, %v1346
    %v1348 = vmul.f32 %v1326, %v515
    %v1349 = vmul.f32 %v1347, %v515
    %v1350 = vadd.f32 %v1348, 1e-05
    %v1351 = vadd.f32 %v1349, 1e-05
    %v1352 = vrsqrt.pop %v1350
    %v1353 = vmul.f32 %v1352, %v1350
    %v1354 = vmul.f32 %v1353, %v1352
    %v1355 = vmul.f32 0.5, %v1354
    %v1356 = vsub.f32 1.5, %v1355
    %v1357 = vmul.f32 %v1352, %v1356
    %vm1358 = vweird.f32 %v1350
    %vm1359 = vweird.f32 %v1352
    %vm1360 = vmor %vm1358, %vm1359
    %v1361 = vsel %vm1360, %v1352, %v1357
    %v1362 = vrsqrt.pop %v1351
    %v1363 = vmul.f32 %v1362, %v1351
    %v1364 = vmul.f32 %v1363, %v1362
    %v1365 = vmul.f32 0.5, %v1364
    %v1366 = vsub.f32 1.5, %v1365
    %v1367 = vmul.f32 %v1362, %v1366
    %vm1368 = vweird.f32 %v1351
    %vm1369 = vweird.f32 %v1362
    %vm1370 = vmor %vm1368, %vm1369
    %v1371 = vsel %vm1370, %v1362, %v1367
    %v1373 = vperm.slane %v1197, 0
    %v1374 = vperm.slane %v1197, 2
    %v1377 = vmul.f32 %v1361, %v1373
    %v1378 = vmul.f32 %v1371, %v1374
    %v1379 = vperm.slane %v1377, 0
    %v1380 = vperm.slane %v1378, 0
    %v1381 = vmul.f32 %v1242, %v1379
    %v1382 = vmul.f32 %v1243, %v1380
    %v1383 = vmul.f32 %v1244, %v1379
    %v1384 = vmul.f32 %v1245, %v1380
    %v1385 = vmul.f32 %v1246, %v1379
    %v1386 = vmul.f32 %v1247, %v1380
    %v1387 = vmul.f32 %v1248, %v1379
    %v1388 = vmul.f32 %v1249, %v1380
    %v1389 = vmul.f32 %v1250, %v1379
    %v1390 = vmul.f32 %v1251, %v1380
    %v1391 = vmul.f32 %v1252, %v1379
    %v1392 = vmul.f32 %v1253, %v1380
    %v1393 = vmul.f32 %v1254, %v1379
    %v1394 = vmul.f32 %v1255, %v1380
    %v1395 = vmul.f32 %v1256, %v1379
    %v1396 = vmul.f32 %v1257, %v1380
    %v1397 = vmul.f32 %v1258, %v1379
    %v1398 = vmul.f32 %v1259, %v1380
    %v1399 = vmul.f32 %v1260, %v1379
    %v1400 = vmul.f32 %v1261, %v1380
    %v1401 = vmul.f32 %v1262, %v1379
    %v1402 = vmul.f32 %v1263, %v1380
    %v1403 = vmul.f32 %v1264, %v1379
    %v1404 = vmul.f32 %v1265, %v1380
    %v1405 = vmul.f32 %v1266, %v1379
    %v1406 = vmul.f32 %v1267, %v1380
    %v1407 = vmul.f32 %v1268, %v1379
    %v1408 = vmul.f32 %v1269, %v1380
    %v1409 = vmul.f32 %v1270, %v1379
    %v1410 = vmul.f32 %v1271, %v1380
    %v1411 = vmul.f32 %v1272, %v1379
    %v1412 = vmul.f32 %v1273, %v1380
    %v1413 = vperm.slane %v1197, 1
    %v1414 = vperm.slane %v1197, 3
    %v1417 = vperm.slane %v1413, 1
    %v1418 = vperm.slane %v1414, 1
    %v1419 = vadd.f32 %v1381, %v1417
    %v1420 = vadd.f32 %v1382, %v1418
    %v1421 = vadd.f32 %v1383, %v1417
    %v1422 = vadd.f32 %v1384, %v1418
    %v1423 = vadd.f32 %v1385, %v1417
    %v1424 = vadd.f32 %v1386, %v1418
    %v1425 = vadd.f32 %v1387, %v1417
    %v1426 = vadd.f32 %v1388, %v1418
    %v1427 = vadd.f32 %v1389, %v1417
    %v1428 = vadd.f32 %v1390, %v1418
    %v1429 = vadd.f32 %v1391, %v1417
    %v1430 = vadd.f32 %v1392, %v1418
    %v1431 = vadd.f32 %v1393, %v1417
    %v1432 = vadd.f32 %v1394, %v1418
    %v1433 = vadd.f32 %v1395, %v1417
    %v1434 = vadd.f32 %v1396, %v1418
    %v1435 = vadd.f32 %v1397, %v1417
    %v1436 = vadd.f32 %v1398, %v1418
    %v1437 = vadd.f32 %v1399, %v1417
    %v1438 = vadd.f32 %v1400, %v1418
    %v1439 = vadd.f32 %v1401, %v1417
    %v1440 = vadd.f32 %v1402, %v1418
    %v1441 = vadd.f32 %v1403, %v1417
    %v1442 = vadd.f32 %v1404, %v1418
    %v1443 = vadd.f32 %v1405, %v1417
    %v1444 = vadd.f32 %v1406, %v1418
    %v1445 = vadd.f32 %v1407, %v1417
    %v1446 = vadd.f32 %v1408, %v1418
    %v1447 = vadd.f32 %v1409, %v1417
    %v1448 = vadd.f32 %v1410, %v1418
    %v1449 = vadd.f32 %v1411, %v1417
    %v1450 = vadd.f32 %v1412, %v1418
    %v1451 = vmul.f32 %v1419, 0.01
    %v1452 = vmul.f32 %v1420, 0.01
    %v1453 = vmul.f32 %v1421, 0.01
    %v1454 = vmul.f32 %v1422, 0.01
    %v1455 = vmul.f32 %v1423, 0.01
    %v1456 = vmul.f32 %v1424, 0.01
    %v1457 = vmul.f32 %v1425, 0.01
    %v1458 = vmul.f32 %v1426, 0.01
    %v1459 = vmul.f32 %v1427, 0.01
    %v1460 = vmul.f32 %v1428, 0.01
    %v1461 = vmul.f32 %v1429, 0.01
    %v1462 = vmul.f32 %v1430, 0.01
    %v1463 = vmul.f32 %v1431, 0.01
    %v1464 = vmul.f32 %v1432, 0.01
    %v1465 = vmul.f32 %v1433, 0.01
    %v1466 = vmul.f32 %v1434, 0.01
    %v1467 = vmul.f32 %v1435, 0.01
    %v1468 = vmul.f32 %v1436, 0.01
    %v1469 = vmul.f32 %v1437, 0.01
    %v1470 = vmul.f32 %v1438, 0.01
    %v1471 = vmul.f32 %v1439, 0.01
    %v1472 = vmul.f32 %v1440, 0.01
    %v1473 = vmul.f32 %v1441, 0.01
    %v1474 = vmul.f32 %v1442, 0.01
    %v1475 = vmul.f32 %v1443, 0.01
    %v1476 = vmul.f32 %v1444, 0.01
    %v1477 = vmul.f32 %v1445, 0.01
    %v1478 = vmul.f32 %v1446, 0.01
    %v1479 = vmul.f32 %v1447, 0.01
    %v1480 = vmul.f32 %v1448, 0.01
    %v1481 = vmul.f32 %v1449, 0.01
    %v1482 = vmul.f32 %v1450, 0.01
    %v1483 = vmax.f32 %v1419, %v1451
    %v1484 = vmax.f32 %v1420, %v1452
    %v1485 = vmax.f32 %v1421, %v1453
    %v1486 = vmax.f32 %v1422, %v1454
    %v1487 = vmax.f32 %v1423, %v1455
    %v1488 = vmax.f32 %v1424, %v1456
    %v1489 = vmax.f32 %v1425, %v1457
    %v1490 = vmax.f32 %v1426, %v1458
    %v1491 = vmax.f32 %v1427, %v1459
    %v1492 = vmax.f32 %v1428, %v1460
    %v1493 = vmax.f32 %v1429, %v1461
    %v1494 = vmax.f32 %v1430, %v1462
    %v1495 = vmax.f32 %v1431, %v1463
    %v1496 = vmax.f32 %v1432, %v1464
    %v1497 = vmax.f32 %v1433, %v1465
    %v1498 = vmax.f32 %v1434, %v1466
    %v1499 = vmax.f32 %v1435, %v1467
    %v1500 = vmax.f32 %v1436, %v1468
    %v1501 = vmax.f32 %v1437, %v1469
    %v1502 = vmax.f32 %v1438, %v1470
    %v1503 = vmax.f32 %v1439, %v1471
    %v1504 = vmax.f32 %v1440, %v1472
    %v1505 = vmax.f32 %v1441, %v1473
    %v1506 = vmax.f32 %v1442, %v1474
    %v1507 = vmax.f32 %v1443, %v1475
    %v1508 = vmax.f32 %v1444, %v1476
    %v1509 = vmax.f32 %v1445, %v1477
    %v1510 = vmax.f32 %v1446, %v1478
    %v1511 = vmax.f32 %v1447, %v1479
    %v1512 = vmax.f32 %v1448, %v1480
    %v1513 = vmax.f32 %v1449, %v1481
    %v1514 = vmax.f32 %v1450, %v1482
    %v1515 = vpack.c.bf16 %v1485, %v1483
    %v1516 = vpack.c.bf16 %v1486, %v1484
    %v1517 = vpack.c.bf16 %v1489, %v1487
    %v1518 = vpack.c.bf16 %v1490, %v1488
    %v1519 = vpack.c.bf16 %v1493, %v1491
    %v1520 = vpack.c.bf16 %v1494, %v1492
    %v1521 = vpack.c.bf16 %v1497, %v1495
    %v1522 = vpack.c.bf16 %v1498, %v1496
    %v1523 = vpack.c.bf16 %v1501, %v1499
    %v1524 = vpack.c.bf16 %v1502, %v1500
    %v1525 = vpack.c.bf16 %v1505, %v1503
    %v1526 = vpack.c.bf16 %v1506, %v1504
    %v1527 = vpack.c.bf16 %v1509, %v1507
    %v1528 = vpack.c.bf16 %v1510, %v1508
    %v1529 = vpack.c.bf16 %v1513, %v1511
    %v1530 = vpack.c.bf16 %v1514, %v1512
    %s1531 = scalar_lea.vmem [#allocation2], 512
    %v1532 = vld [vmem:[%s1531] sm:$0xff]
    %v1533 = vld [vmem:[%s1531 + $0x8] sm:$0xff]
    %v1534 = vld [vmem:[%s1531 + $0x10] sm:$0xff]
    %v1535 = vld [vmem:[%s1531 + $0x18] sm:$0xff]
    %v1536 = vld [vmem:[%s1531 + $0x20] sm:$0xff]
    %v1537 = vld [vmem:[%s1531 + $0x28] sm:$0xff]
    %v1538 = vld [vmem:[%s1531 + $0x30] sm:$0xff]
    %v1539 = vld [vmem:[%s1531 + $0x38] sm:$0xff]
    %v1540 = vld [vmem:[%s1531 + $0x40] sm:$0xff]
    %v1541 = vld [vmem:[%s1531 + $0x48] sm:$0xff]
    %v1542 = vld [vmem:[%s1531 + $0x50] sm:$0xff]
    %v1543 = vld [vmem:[%s1531 + $0x58] sm:$0xff]
    %v1544 = vld [vmem:[%s1531 + $0x60] sm:$0xff]
    %v1545 = vld [vmem:[%s1531 + $0x68] sm:$0xff]
    %v1546 = vld [vmem:[%s1531 + $0x70] sm:$0xff]
    %v1547 = vld [vmem:[%s1531 + $0x78] sm:$0xff]
    %v1548 = vld [vmem:[%s1531 + $0x80] sm:$0xff]
    %v1549 = vld [vmem:[%s1531 + $0x88] sm:$0xff]
    %v1550 = vld [vmem:[%s1531 + $0x90] sm:$0xff]
    %v1551 = vld [vmem:[%s1531 + $0x98] sm:$0xff]
    %v1552 = vld [vmem:[%s1531 + $0xa0] sm:$0xff]
    %v1553 = vld [vmem:[%s1531 + $0xa8] sm:$0xff]
    %v1554 = vld [vmem:[%s1531 + $0xb0] sm:$0xff]
    %v1555 = vld [vmem:[%s1531 + $0xb8] sm:$0xff]
    %v1556 = vld [vmem:[%s1531 + $0xc0] sm:$0xff]
    %v1557 = vld [vmem:[%s1531 + $0xc8] sm:$0xff]
    %v1558 = vld [vmem:[%s1531 + $0xd0] sm:$0xff]
    %v1559 = vld [vmem:[%s1531 + $0xd8] sm:$0xff]
    %v1560 = vld [vmem:[%s1531 + $0xe0] sm:$0xff]
    %v1561 = vld [vmem:[%s1531 + $0xe8] sm:$0xff]
    %v1562 = vld [vmem:[%s1531 + $0xf0] sm:$0xff]
    %v1563 = vld [vmem:[%s1531 + $0xf8] sm:$0xff]
    %v1596 = vunpack.c.l.b16 %v1532
    %v1597 = vunpack.c.h.b16 %v1532
    %v1598 = vunpack.c.l.b16 %v1533
    %v1599 = vunpack.c.h.b16 %v1533
    %v1600 = vunpack.c.l.b16 %v1534
    %v1601 = vunpack.c.h.b16 %v1534
    %v1602 = vunpack.c.l.b16 %v1535
    %v1603 = vunpack.c.h.b16 %v1535
    %v1604 = vunpack.c.l.b16 %v1536
    %v1605 = vunpack.c.h.b16 %v1536
    %v1606 = vunpack.c.l.b16 %v1537
    %v1607 = vunpack.c.h.b16 %v1537
    %v1608 = vunpack.c.l.b16 %v1538
    %v1609 = vunpack.c.h.b16 %v1538
    %v1610 = vunpack.c.l.b16 %v1539
    %v1611 = vunpack.c.h.b16 %v1539
    %v1612 = vunpack.c.l.b16 %v1540
    %v1613 = vunpack.c.h.b16 %v1540
    %v1614 = vunpack.c.l.b16 %v1541
    %v1615 = vunpack.c.h.b16 %v1541
    %v1616 = vunpack.c.l.b16 %v1542
    %v1617 = vunpack.c.h.b16 %v1542
    %v1618 = vunpack.c.l.b16 %v1543
    %v1619 = vunpack.c.h.b16 %v1543
    %v1620 = vunpack.c.l.b16 %v1544
    %v1621 = vunpack.c.h.b16 %v1544
    %v1622 = vunpack.c.l.b16 %v1545
    %v1623 = vunpack.c.h.b16 %v1545
    %v1624 = vunpack.c.l.b16 %v1546
    %v1625 = vunpack.c.h.b16 %v1546
    %v1626 = vunpack.c.l.b16 %v1547
    %v1627 = vunpack.c.h.b16 %v1547
    %v1628 = vunpack.c.l.b16 %v1548
    %v1629 = vunpack.c.h.b16 %v1548
    %v1630 = vunpack.c.l.b16 %v1549
    %v1631 = vunpack.c.h.b16 %v1549
    %v1632 = vunpack.c.l.b16 %v1550
    %v1633 = vunpack.c.h.b16 %v1550
    %v1634 = vunpack.c.l.b16 %v1551
    %v1635 = vunpack.c.h.b16 %v1551
    %v1636 = vunpack.c.l.b16 %v1552
    %v1637 = vunpack.c.h.b16 %v1552
    %v1638 = vunpack.c.l.b16 %v1553
    %v1639 = vunpack.c.h.b16 %v1553
    %v1640 = vunpack.c.l.b16 %v1554
    %v1641 = vunpack.c.h.b16 %v1554
    %v1642 = vunpack.c.l.b16 %v1555
    %v1643 = vunpack.c.h.b16 %v1555
    %v1644 = vunpack.c.l.b16 %v1556
    %v1645 = vunpack.c.h.b16 %v1556
    %v1646 = vunpack.c.l.b16 %v1557
    %v1647 = vunpack.c.h.b16 %v1557
    %v1648 = vunpack.c.l.b16 %v1558
    %v1649 = vunpack.c.h.b16 %v1558
    %v1650 = vunpack.c.l.b16 %v1559
    %v1651 = vunpack.c.h.b16 %v1559
    %v1652 = vunpack.c.l.b16 %v1560
    %v1653 = vunpack.c.h.b16 %v1560
    %v1654 = vunpack.c.l.b16 %v1561
    %v1655 = vunpack.c.h.b16 %v1561
    %v1656 = vunpack.c.l.b16 %v1562
    %v1657 = vunpack.c.h.b16 %v1562
    %v1658 = vunpack.c.l.b16 %v1563
    %v1659 = vunpack.c.h.b16 %v1563
    %v1660 = vpack.c.b16 %v1598, %v1596
    %v1661 = vpack.c.b16 %v1599, %v1597
    %v1662 = vpack.c.b16 %v1602, %v1600
    %v1663 = vpack.c.b16 %v1603, %v1601
    %v1664 = vpack.c.b16 %v1606, %v1604
    %v1665 = vpack.c.b16 %v1607, %v1605
    %v1666 = vpack.c.b16 %v1610, %v1608
    %v1667 = vpack.c.b16 %v1611, %v1609
    %v1668 = vpack.c.b16 %v1614, %v1612
    %v1669 = vpack.c.b16 %v1615, %v1613
    %v1670 = vpack.c.b16 %v1618, %v1616
    %v1671 = vpack.c.b16 %v1619, %v1617
    %v1672 = vpack.c.b16 %v1622, %v1620
    %v1673 = vpack.c.b16 %v1623, %v1621
    %v1674 = vpack.c.b16 %v1626, %v1624
    %v1675 = vpack.c.b16 %v1627, %v1625
    %v1676 = vpack.c.b16 %v1630, %v1628
    %v1677 = vpack.c.b16 %v1631, %v1629
    %v1678 = vpack.c.b16 %v1634, %v1632
    %v1679 = vpack.c.b16 %v1635, %v1633
    %v1680 = vpack.c.b16 %v1638, %v1636
    %v1681 = vpack.c.b16 %v1639, %v1637
    %v1682 = vpack.c.b16 %v1642, %v1640
    %v1683 = vpack.c.b16 %v1643, %v1641
    %v1684 = vpack.c.b16 %v1646, %v1644
    %v1685 = vpack.c.b16 %v1647, %v1645
    %v1686 = vpack.c.b16 %v1650, %v1648
    %v1687 = vpack.c.b16 %v1651, %v1649
    %v1688 = vpack.c.b16 %v1654, %v1652
    %v1689 = vpack.c.b16 %v1655, %v1653
    %v1690 = vpack.c.b16 %v1658, %v1656
    %v1691 = vpack.c.b16 %v1659, %v1657
    %1724 = vmatpush.bf16.msra.mxu0 %v1674
    %1725 = vmatpush.bf16.msra.mxu0 %v1672
    %1726 = vmatpush.bf16.msra.mxu0 %v1670
    %1727 = vmatpush.bf16.msra.mxu0 %v1668
    %1728 = vmatpush.bf16.msra.mxu0 %v1666
    %1729 = vmatpush.bf16.msra.mxu0 %v1664
    %1730 = vmatpush.bf16.msra.mxu0 %v1662
    %1731 = vmatpush.bf16.msra.mxu0 %v1660
    %1732 = vmatmul.bf16.gmra.mxu0 %v1515
    %v1733 = vpop.f32.mrf.mxu0
    %v1734 = vadd.f32 0.0, %v1733
    %v1735 = vpop.f32.mrf.mxu0
    %v1736 = vadd.f32 0.0, %v1735
    %1737 = vmatmul.bf16.gmra.mxu0 %v1517
    %v1738 = vpop.f32.mrf.mxu0
    %v1739 = vadd.f32 0.0, %v1738
    %v1740 = vpop.f32.mrf.mxu0
    %v1741 = vadd.f32 0.0, %v1740
    %1742 = vmatmul.bf16.gmra.mxu0 %v1519
    %v1743 = vpop.f32.mrf.mxu0
    %v1744 = vadd.f32 0.0, %v1743
    %v1745 = vpop.f32.mrf.mxu0
    %v1746 = vadd.f32 0.0, %v1745
    %1747 = vmatmul.bf16.gmra.mxu0 %v1521
    %v1748 = vpop.f32.mrf.mxu0
    %v1749 = vadd.f32 0.0, %v1748
    %v1750 = vpop.f32.mrf.mxu0
    %v1751 = vadd.f32 0.0, %v1750
    %1752 = vmatmul.bf16.gmra.mxu0 %v1523
    %v1753 = vpop.f32.mrf.mxu0
    %v1754 = vadd.f32 0.0, %v1753
    %v1755 = vpop.f32.mrf.mxu0
    %v1756 = vadd.f32 0.0, %v1755
    %1757 = vmatmul.bf16.gmra.mxu0 %v1525
    %v1758 = vpop.f32.mrf.mxu0
    %v1759 = vadd.f32 0.0, %v1758
    %v1760 = vpop.f32.mrf.mxu0
    %v1761 = vadd.f32 0.0, %v1760
    %1762 = vmatmul.bf16.gmra.mxu0 %v1527
    %v1763 = vpop.f32.mrf.mxu0
    %v1764 = vadd.f32 0.0, %v1763
    %v1765 = vpop.f32.mrf.mxu0
    %v1766 = vadd.f32 0.0, %v1765
    %1767 = vmatmul.bf16.gmra.mxu0 %v1529
    %v1768 = vpop.f32.mrf.mxu0
    %v1769 = vadd.f32 0.0, %v1768
    %v1770 = vpop.f32.mrf.mxu0
    %v1771 = vadd.f32 0.0, %v1770
    %1772 = vdwg.mxu0
    %1773 = vmatpush.bf16.msra.mxu0 %v1690
    %1774 = vmatpush.bf16.msra.mxu0 %v1688
    %1775 = vmatpush.bf16.msra.mxu0 %v1686
    %1776 = vmatpush.bf16.msra.mxu0 %v1684
    %1777 = vmatpush.bf16.msra.mxu0 %v1682
    %1778 = vmatpush.bf16.msra.mxu0 %v1680
    %1779 = vmatpush.bf16.msra.mxu0 %v1678
    %1780 = vmatpush.bf16.msra.mxu0 %v1676
    %1781 = vmatmul.bf16.gmra.mxu0 %v1516
    %v1782 = vpop.f32.mrf.mxu0
    %v1783 = vadd.f32 %v1734, %v1782
    %v1784 = vpop.f32.mrf.mxu0
    %v1785 = vadd.f32 %v1736, %v1784
    %1786 = vmatmul.bf16.gmra.mxu0 %v1518
    %v1787 = vpop.f32.mrf.mxu0
    %v1788 = vadd.f32 %v1739, %v1787
    %v1789 = vpop.f32.mrf.mxu0
    %v1790 = vadd.f32 %v1741, %v1789
    %1791 = vmatmul.bf16.gmra.mxu0 %v1520
    %v1792 = vpop.f32.mrf.mxu0
    %v1793 = vadd.f32 %v1744, %v1792
    %v1794 = vpop.f32.mrf.mxu0
    %v1795 = vadd.f32 %v1746, %v1794
    %1796 = vmatmul.bf16.gmra.mxu0 %v1522
    %v1797 = vpop.f32.mrf.mxu0
    %v1798 = vadd.f32 %v1749, %v1797
    %v1799 = vpop.f32.mrf.mxu0
    %v1800 = vadd.f32 %v1751, %v1799
    %1801 = vmatmul.bf16.gmra.mxu0 %v1524
    %v1802 = vpop.f32.mrf.mxu0
    %v1803 = vadd.f32 %v1754, %v1802
    %v1804 = vpop.f32.mrf.mxu0
    %v1805 = vadd.f32 %v1756, %v1804
    %1806 = vmatmul.bf16.gmra.mxu0 %v1526
    %v1807 = vpop.f32.mrf.mxu0
    %v1808 = vadd.f32 %v1759, %v1807
    %v1809 = vpop.f32.mrf.mxu0
    %v1810 = vadd.f32 %v1761, %v1809
    %1811 = vmatmul.bf16.gmra.mxu0 %v1528
    %v1812 = vpop.f32.mrf.mxu0
    %v1813 = vadd.f32 %v1764, %v1812
    %v1814 = vpop.f32.mrf.mxu0
    %v1815 = vadd.f32 %v1766, %v1814
    %1816 = vmatmul.bf16.gmra.mxu0 %v1530
    %v1817 = vpop.f32.mrf.mxu0
    %v1818 = vadd.f32 %v1769, %v1817
    %v1819 = vpop.f32.mrf.mxu0
    %v1820 = vadd.f32 %v1771, %v1819
    %1821 = vdwg.mxu0
    %1822 = vmatpush.bf16.msra.mxu0 %v1675
    %1823 = vmatpush.bf16.msra.mxu0 %v1673
    %1824 = vmatpush.bf16.msra.mxu0 %v1671
    %1825 = vmatpush.bf16.msra.mxu0 %v1669
    %1826 = vmatpush.bf16.msra.mxu0 %v1667
    %1827 = vmatpush.bf16.msra.mxu0 %v1665
    %1828 = vmatpush.bf16.msra.mxu0 %v1663
    %1829 = vmatpush.bf16.msra.mxu0 %v1661
    %1830 = vmatmul.bf16.gmra.mxu0 %v1515
    %v1831 = vpop.f32.mrf.mxu0
    %v1832 = vadd.f32 0.0, %v1831
    %v1833 = vpop.f32.mrf.mxu0
    %v1834 = vadd.f32 0.0, %v1833
    %1835 = vmatmul.bf16.gmra.mxu0 %v1517
    %v1836 = vpop.f32.mrf.mxu0
    %v1837 = vadd.f32 0.0, %v1836
    %v1838 = vpop.f32.mrf.mxu0
    %v1839 = vadd.f32 0.0, %v1838
    %1840 = vmatmul.bf16.gmra.mxu0 %v1519
    %v1841 = vpop.f32.mrf.mxu0
    %v1842 = vadd.f32 0.0, %v1841
    %v1843 = vpop.f32.mrf.mxu0
    %v1844 = vadd.f32 0.0, %v1843
    %1845 = vmatmul.bf16.gmra.mxu0 %v1521
    %v1846 = vpop.f32.mrf.mxu0
    %v1847 = vadd.f32 0.0, %v1846
    %v1848 = vpop.f32.mrf.mxu0
    %v1849 = vadd.f32 0.0, %v1848
    %1850 = vmatmul.bf16.gmra.mxu0 %v1523
    %v1851 = vpop.f32.mrf.mxu0
    %v1852 = vadd.f32 0.0, %v1851
    %v1853 = vpop.f32.mrf.mxu0
    %v1854 = vadd.f32 0.0, %v1853
    %1855 = vmatmul.bf16.gmra.mxu0 %v1525
    %v1856 = vpop.f32.mrf.mxu0
    %v1857 = vadd.f32 0.0, %v1856
    %v1858 = vpop.f32.mrf.mxu0
    %v1859 = vadd.f32 0.0, %v1858
    %1860 = vmatmul.bf16.gmra.mxu0 %v1527
    %v1861 = vpop.f32.mrf.mxu0
    %v1862 = vadd.f32 0.0, %v1861
    %v1863 = vpop.f32.mrf.mxu0
    %v1864 = vadd.f32 0.0, %v1863
    %1865 = vmatmul.bf16.gmra.mxu0 %v1529
    %v1866 = vpop.f32.mrf.mxu0
    %v1867 = vadd.f32 0.0, %v1866
    %v1868 = vpop.f32.mrf.mxu0
    %v1869 = vadd.f32 0.0, %v1868
    %1870 = vdwg.mxu0
    %1871 = vmatpush.bf16.msra.mxu0 %v1691
    %1872 = vmatpush.bf16.msra.mxu0 %v1689
    %1873 = vmatpush.bf16.msra.mxu0 %v1687
    %1874 = vmatpush.bf16.msra.mxu0 %v1685
    %1875 = vmatpush.bf16.msra.mxu0 %v1683
    %1876 = vmatpush.bf16.msra.mxu0 %v1681
    %1877 = vmatpush.bf16.msra.mxu0 %v1679
    %1878 = vmatpush.bf16.msra.mxu0 %v1677
    %1879 = vmatmul.bf16.gmra.mxu0 %v1516
    %v1880 = vpop.f32.mrf.mxu0
    %v1881 = vadd.f32 %v1832, %v1880
    %v1882 = vpop.f32.mrf.mxu0
    %v1883 = vadd.f32 %v1834, %v1882
    %1884 = vmatmul.bf16.gmra.mxu0 %v1518
    %v1885 = vpop.f32.mrf.mxu0
    %v1886 = vadd.f32 %v1837, %v1885
    %v1887 = vpop.f32.mrf.mxu0
    %v1888 = vadd.f32 %v1839, %v1887
    %1889 = vmatmul.bf16.gmra.mxu0 %v1520
    %v1890 = vpop.f32.mrf.mxu0
    %v1891 = vadd.f32 %v1842, %v1890
    %v1892 = vpop.f32.mrf.mxu0
    %v1893 = vadd.f32 %v1844, %v1892
    %1894 = vmatmul.bf16.gmra.mxu0 %v1522
    %v1895 = vpop.f32.mrf.mxu0
    %v1896 = vadd.f32 %v1847, %v1895
    %v1897 = vpop.f32.mrf.mxu0
    %v1898 = vadd.f32 %v1849, %v1897
    %1899 = vmatmul.bf16.gmra.mxu0 %v1524
    %v1900 = vpop.f32.mrf.mxu0
    %v1901 = vadd.f32 %v1852, %v1900
    %v1902 = vpop.f32.mrf.mxu0
    %v1903 = vadd.f32 %v1854, %v1902
    %1904 = vmatmul.bf16.gmra.mxu0 %v1526
    %v1905 = vpop.f32.mrf.mxu0
    %v1906 = vadd.f32 %v1857, %v1905
    %v1907 = vpop.f32.mrf.mxu0
    %v1908 = vadd.f32 %v1859, %v1907
    %1909 = vmatmul.bf16.gmra.mxu0 %v1528
    %v1910 = vpop.f32.mrf.mxu0
    %v1911 = vadd.f32 %v1862, %v1910
    %v1912 = vpop.f32.mrf.mxu0
    %v1913 = vadd.f32 %v1864, %v1912
    %1914 = vmatmul.bf16.gmra.mxu0 %v1530
    %v1915 = vpop.f32.mrf.mxu0
    %v1916 = vadd.f32 %v1867, %v1915
    %v1917 = vpop.f32.mrf.mxu0
    %v1918 = vadd.f32 %v1869, %v1917
    %1919 = vdwg.mxu0
    %s1920 = scalar_lea.vmem %s2, 8
    %v1921 = vld [vmem:[%s1920] sm:$0xf]
    %v1922 = vadd.f32 %v1783, %v1785
    %v1923 = vadd.f32 %v1922, %v1788
    %v1924 = vadd.f32 %v1923, %v1790
    %v1925 = vadd.f32 %v1924, %v1793
    %v1926 = vadd.f32 %v1925, %v1795
    %v1927 = vadd.f32 %v1926, %v1798
    %v1928 = vadd.f32 %v1927, %v1800
    %v1929 = vadd.f32 %v1928, %v1803
    %v1930 = vadd.f32 %v1929, %v1805
    %v1931 = vadd.f32 %v1930, %v1808
    %v1932 = vadd.f32 %v1931, %v1810
    %v1933 = vadd.f32 %v1932, %v1813
    %v1934 = vadd.f32 %v1933, %v1815
    %v1935 = vadd.f32 %v1934, %v1818
    %v1936 = vadd.f32 %v1935, %v1820
    %v1937 = vrot.slane %v1936, 4
    %v1938 = vadd.f32 %v1936, %v1937
    %v1939 = vrot.slane %v1938, 2
    %v1940 = vadd.f32 %v1938, %v1939
    %v1941 = vrot.slane %v1940, 1
    %v1942 = vadd.f32 %v1940, %v1941
    %v1943 = vadd.f32 %v1881, %v1883
    %v1944 = vadd.f32 %v1943, %v1886
    %v1945 = vadd.f32 %v1944, %v1888
    %v1946 = vadd.f32 %v1945, %v1891
    %v1947 = vadd.f32 %v1946, %v1893
    %v1948 = vadd.f32 %v1947, %v1896
    %v1949 = vadd.f32 %v1948, %v1898
    %v1950 = vadd.f32 %v1949, %v1901
    %v1951 = vadd.f32 %v1950, %v1903
    %v1952 = vadd.f32 %v1951, %v1906
    %v1953 = vadd.f32 %v1952, %v1908
    %v1954 = vadd.f32 %v1953, %v1911
    %v1955 = vadd.f32 %v1954, %v1913
    %v1956 = vadd.f32 %v1955, %v1916
    %v1957 = vadd.f32 %v1956, %v1918
    %v1958 = vrot.slane %v1957, 4
    %v1959 = vadd.f32 %v1957, %v1958
    %v1960 = vrot.slane %v1959, 2
    %v1961 = vadd.f32 %v1959, %v1960
    %v1962 = vrot.slane %v1961, 1
    %v1963 = vadd.f32 %v1961, %v1962
    %v1964 = vmul.f32 %v1942, %v515
    %v1965 = vmul.f32 %v1963, %v515
    %v1966 = vsub.f32 %v1783, %v1964
    %v1967 = vsub.f32 %v1881, %v1965
    %v1968 = vsub.f32 %v1785, %v1964
    %v1969 = vsub.f32 %v1883, %v1965
    %v1970 = vsub.f32 %v1788, %v1964
    %v1971 = vsub.f32 %v1886, %v1965
    %v1972 = vsub.f32 %v1790, %v1964
    %v1973 = vsub.f32 %v1888, %v1965
    %v1974 = vsub.f32 %v1793, %v1964
    %v1975 = vsub.f32 %v1891, %v1965
    %v1976 = vsub.f32 %v1795, %v1964
    %v1977 = vsub.f32 %v1893, %v1965
    %v1978 = vsub.f32 %v1798, %v1964
    %v1979 = vsub.f32 %v1896, %v1965
    %v1980 = vsub.f32 %v1800, %v1964
    %v1981 = vsub.f32 %v1898, %v1965
    %v1982 = vsub.f32 %v1803, %v1964
    %v1983 = vsub.f32 %v1901, %v1965
    %v1984 = vsub.f32 %v1805, %v1964
    %v1985 = vsub.f32 %v1903, %v1965
    %v1986 = vsub.f32 %v1808, %v1964
    %v1987 = vsub.f32 %v1906, %v1965
    %v1988 = vsub.f32 %v1810, %v1964
    %v1989 = vsub.f32 %v1908, %v1965
    %v1990 = vsub.f32 %v1813, %v1964
    %v1991 = vsub.f32 %v1911, %v1965
    %v1992 = vsub.f32 %v1815, %v1964
    %v1993 = vsub.f32 %v1913, %v1965
    %v1994 = vsub.f32 %v1818, %v1964
    %v1995 = vsub.f32 %v1916, %v1965
    %v1996 = vsub.f32 %v1820, %v1964
    %v1997 = vsub.f32 %v1918, %v1965
    %v1998 = vmul.f32 %v1966, %v1966
    %v1999 = vmul.f32 %v1967, %v1967
    %v2000 = vmul.f32 %v1968, %v1968
    %v2001 = vmul.f32 %v1969, %v1969
    %v2002 = vmul.f32 %v1970, %v1970
    %v2003 = vmul.f32 %v1971, %v1971
    %v2004 = vmul.f32 %v1972, %v1972
    %v2005 = vmul.f32 %v1973, %v1973
    %v2006 = vmul.f32 %v1974, %v1974
    %v2007 = vmul.f32 %v1975, %v1975
    %v2008 = vmul.f32 %v1976, %v1976
    %v2009 = vmul.f32 %v1977, %v1977
    %v2010 = vmul.f32 %v1978, %v1978
    %v2011 = vmul.f32 %v1979, %v1979
    %v2012 = vmul.f32 %v1980, %v1980
    %v2013 = vmul.f32 %v1981, %v1981
    %v2014 = vmul.f32 %v1982, %v1982
    %v2015 = vmul.f32 %v1983, %v1983
    %v2016 = vmul.f32 %v1984, %v1984
    %v2017 = vmul.f32 %v1985, %v1985
    %v2018 = vmul.f32 %v1986, %v1986
    %v2019 = vmul.f32 %v1987, %v1987
    %v2020 = vmul.f32 %v1988, %v1988
    %v2021 = vmul.f32 %v1989, %v1989
    %v2022 = vmul.f32 %v1990, %v1990
    %v2023 = vmul.f32 %v1991, %v1991
    %v2024 = vmul.f32 %v1992, %v1992
    %v2025 = vmul.f32 %v1993, %v1993
    %v2026 = vmul.f32 %v1994, %v1994
    %v2027 = vmul.f32 %v1995, %v1995
    %v2028 = vmul.f32 %v1996, %v1996
    %v2029 = vmul.f32 %v1997, %v1997
    %v2030 = vadd.f32 %v1998, %v2000
    %v2031 = vadd.f32 %v2030, %v2002
    %v2032 = vadd.f32 %v2031, %v2004
    %v2033 = vadd.f32 %v2032, %v2006
    %v2034 = vadd.f32 %v2033, %v2008
    %v2035 = vadd.f32 %v2034, %v2010
    %v2036 = vadd.f32 %v2035, %v2012
    %v2037 = vadd.f32 %v2036, %v2014
    %v2038 = vadd.f32 %v2037, %v2016
    %v2039 = vadd.f32 %v2038, %v2018
    %v2040 = vadd.f32 %v2039, %v2020
    %v2041 = vadd.f32 %v2040, %v2022
    %v2042 = vadd.f32 %v2041, %v2024
    %v2043 = vadd.f32 %v2042, %v2026
    %v2044 = vadd.f32 %v2043, %v2028
    %v2045 = vrot.slane %v2044, 4
    %v2046 = vadd.f32 %v2044, %v2045
    %v2047 = vrot.slane %v2046, 2
    %v2048 = vadd.f32 %v2046, %v2047
    %v2049 = vrot.slane %v2048, 1
    %v2050 = vadd.f32 %v2048, %v2049
    %v2051 = vadd.f32 %v1999, %v2001
    %v2052 = vadd.f32 %v2051, %v2003
    %v2053 = vadd.f32 %v2052, %v2005
    %v2054 = vadd.f32 %v2053, %v2007
    %v2055 = vadd.f32 %v2054, %v2009
    %v2056 = vadd.f32 %v2055, %v2011
    %v2057 = vadd.f32 %v2056, %v2013
    %v2058 = vadd.f32 %v2057, %v2015
    %v2059 = vadd.f32 %v2058, %v2017
    %v2060 = vadd.f32 %v2059, %v2019
    %v2061 = vadd.f32 %v2060, %v2021
    %v2062 = vadd.f32 %v2061, %v2023
    %v2063 = vadd.f32 %v2062, %v2025
    %v2064 = vadd.f32 %v2063, %v2027
    %v2065 = vadd.f32 %v2064, %v2029
    %v2066 = vrot.slane %v2065, 4
    %v2067 = vadd.f32 %v2065, %v2066
    %v2068 = vrot.slane %v2067, 2
    %v2069 = vadd.f32 %v2067, %v2068
    %v2070 = vrot.slane %v2069, 1
    %v2071 = vadd.f32 %v2069, %v2070
    %v2072 = vmul.f32 %v2050, %v515
    %v2073 = vmul.f32 %v2071, %v515
    %v2074 = vadd.f32 %v2072, 1e-05
    %v2075 = vadd.f32 %v2073, 1e-05
    %v2076 = vrsqrt.pop %v2074
    %v2077 = vmul.f32 %v2076, %v2074
    %v2078 = vmul.f32 %v2077, %v2076
    %v2079 = vmul.f32 0.5, %v2078
    %v2080 = vsub.f32 1.5, %v2079
    %v2081 = vmul.f32 %v2076, %v2080
    %vm2082 = vweird.f32 %v2074
    %vm2083 = vweird.f32 %v2076
    %vm2084 = vmor %vm2082, %vm2083
    %v2085 = vsel %vm2084, %v2076, %v2081
    %v2086 = vrsqrt.pop %v2075
    %v2087 = vmul.f32 %v2086, %v2075
    %v2088 = vmul.f32 %v2087, %v2086
    %v2089 = vmul.f32 0.5, %v2088
    %v2090 = vsub.f32 1.5, %v2089
    %v2091 = vmul.f32 %v2086, %v2090
    %vm2092 = vweird.f32 %v2075
    %vm2093 = vweird.f32 %v2086
    %vm2094 = vmor %vm2092, %vm2093
    %v2095 = vsel %vm2094, %v2086, %v2091
    %v2097 = vperm.slane %v1921, 0
    %v2098 = vperm.slane %v1921, 2
    %v2101 = vmul.f32 %v2085, %v2097
    %v2102 = vmul.f32 %v2095, %v2098
    %v2103 = vperm.slane %v2101, 0
    %v2104 = vperm.slane %v2102, 0
    %v2105 = vmul.f32 %v1966, %v2103
    %v2106 = vmul.f32 %v1967, %v2104
    %v2107 = vmul.f32 %v1968, %v2103
    %v2108 = vmul.f32 %v1969, %v2104
    %v2109 = vmul.f32 %v1970, %v2103
    %v2110 = vmul.f32 %v1971, %v2104
    %v2111 = vmul.f32 %v1972, %v2103
    %v2112 = vmul.f32 %v1973, %v2104
    %v2113 = vmul.f32 %v1974, %v2103
    %v2114 = vmul.f32 %v1975, %v2104
    %v2115 = vmul.f32 %v1976, %v2103
    %v2116 = vmul.f32 %v1977, %v2104
    %v2117 = vmul.f32 %v1978, %v2103
    %v2118 = vmul.f32 %v1979, %v2104
    %v2119 = vmul.f32 %v1980, %v2103
    %v2120 = vmul.f32 %v1981, %v2104
    %v2121 = vmul.f32 %v1982, %v2103
    %v2122 = vmul.f32 %v1983, %v2104
    %v2123 = vmul.f32 %v1984, %v2103
    %v2124 = vmul.f32 %v1985, %v2104
    %v2125 = vmul.f32 %v1986, %v2103
    %v2126 = vmul.f32 %v1987, %v2104
    %v2127 = vmul.f32 %v1988, %v2103
    %v2128 = vmul.f32 %v1989, %v2104
    %v2129 = vmul.f32 %v1990, %v2103
    %v2130 = vmul.f32 %v1991, %v2104
    %v2131 = vmul.f32 %v1992, %v2103
    %v2132 = vmul.f32 %v1993, %v2104
    %v2133 = vmul.f32 %v1994, %v2103
    %v2134 = vmul.f32 %v1995, %v2104
    %v2135 = vmul.f32 %v1996, %v2103
    %v2136 = vmul.f32 %v1997, %v2104
    %v2137 = vperm.slane %v1921, 1
    %v2138 = vperm.slane %v1921, 3
    %v2141 = vperm.slane %v2137, 1
    %v2142 = vperm.slane %v2138, 1
    %v2143 = vadd.f32 %v2105, %v2141
    %v2144 = vadd.f32 %v2106, %v2142
    %v2145 = vadd.f32 %v2107, %v2141
    %v2146 = vadd.f32 %v2108, %v2142
    %v2147 = vadd.f32 %v2109, %v2141
    %v2148 = vadd.f32 %v2110, %v2142
    %v2149 = vadd.f32 %v2111, %v2141
    %v2150 = vadd.f32 %v2112, %v2142
    %v2151 = vadd.f32 %v2113, %v2141
    %v2152 = vadd.f32 %v2114, %v2142
    %v2153 = vadd.f32 %v2115, %v2141
    %v2154 = vadd.f32 %v2116, %v2142
    %v2155 = vadd.f32 %v2117, %v2141
    %v2156 = vadd.f32 %v2118, %v2142
    %v2157 = vadd.f32 %v2119, %v2141
    %v2158 = vadd.f32 %v2120, %v2142
    %v2159 = vadd.f32 %v2121, %v2141
    %v2160 = vadd.f32 %v2122, %v2142
    %v2161 = vadd.f32 %v2123, %v2141
    %v2162 = vadd.f32 %v2124, %v2142
    %v2163 = vadd.f32 %v2125, %v2141
    %v2164 = vadd.f32 %v2126, %v2142
    %v2165 = vadd.f32 %v2127, %v2141
    %v2166 = vadd.f32 %v2128, %v2142
    %v2167 = vadd.f32 %v2129, %v2141
    %v2168 = vadd.f32 %v2130, %v2142
    %v2169 = vadd.f32 %v2131, %v2141
    %v2170 = vadd.f32 %v2132, %v2142
    %v2171 = vadd.f32 %v2133, %v2141
    %v2172 = vadd.f32 %v2134, %v2142
    %v2173 = vadd.f32 %v2135, %v2141
    %v2174 = vadd.f32 %v2136, %v2142
    %v2175 = vmul.f32 %v2143, 0.01
    %v2176 = vmul.f32 %v2144, 0.01
    %v2177 = vmul.f32 %v2145, 0.01
    %v2178 = vmul.f32 %v2146, 0.01
    %v2179 = vmul.f32 %v2147, 0.01
    %v2180 = vmul.f32 %v2148, 0.01
    %v2181 = vmul.f32 %v2149, 0.01
    %v2182 = vmul.f32 %v2150, 0.01
    %v2183 = vmul.f32 %v2151, 0.01
    %v2184 = vmul.f32 %v2152, 0.01
    %v2185 = vmul.f32 %v2153, 0.01
    %v2186 = vmul.f32 %v2154, 0.01
    %v2187 = vmul.f32 %v2155, 0.01
    %v2188 = vmul.f32 %v2156, 0.01
    %v2189 = vmul.f32 %v2157, 0.01
    %v2190 = vmul.f32 %v2158, 0.01
    %v2191 = vmul.f32 %v2159, 0.01
    %v2192 = vmul.f32 %v2160, 0.01
    %v2193 = vmul.f32 %v2161, 0.01
    %v2194 = vmul.f32 %v2162, 0.01
    %v2195 = vmul.f32 %v2163, 0.01
    %v2196 = vmul.f32 %v2164, 0.01
    %v2197 = vmul.f32 %v2165, 0.01
    %v2198 = vmul.f32 %v2166, 0.01
    %v2199 = vmul.f32 %v2167, 0.01
    %v2200 = vmul.f32 %v2168, 0.01
    %v2201 = vmul.f32 %v2169, 0.01
    %v2202 = vmul.f32 %v2170, 0.01
    %v2203 = vmul.f32 %v2171, 0.01
    %v2204 = vmul.f32 %v2172, 0.01
    %v2205 = vmul.f32 %v2173, 0.01
    %v2206 = vmul.f32 %v2174, 0.01
    %v2207 = vmax.f32 %v2143, %v2175
    %v2208 = vmax.f32 %v2144, %v2176
    %v2209 = vmax.f32 %v2145, %v2177
    %v2210 = vmax.f32 %v2146, %v2178
    %v2211 = vmax.f32 %v2147, %v2179
    %v2212 = vmax.f32 %v2148, %v2180
    %v2213 = vmax.f32 %v2149, %v2181
    %v2214 = vmax.f32 %v2150, %v2182
    %v2215 = vmax.f32 %v2151, %v2183
    %v2216 = vmax.f32 %v2152, %v2184
    %v2217 = vmax.f32 %v2153, %v2185
    %v2218 = vmax.f32 %v2154, %v2186
    %v2219 = vmax.f32 %v2155, %v2187
    %v2220 = vmax.f32 %v2156, %v2188
    %v2221 = vmax.f32 %v2157, %v2189
    %v2222 = vmax.f32 %v2158, %v2190
    %v2223 = vmax.f32 %v2159, %v2191
    %v2224 = vmax.f32 %v2160, %v2192
    %v2225 = vmax.f32 %v2161, %v2193
    %v2226 = vmax.f32 %v2162, %v2194
    %v2227 = vmax.f32 %v2163, %v2195
    %v2228 = vmax.f32 %v2164, %v2196
    %v2229 = vmax.f32 %v2165, %v2197
    %v2230 = vmax.f32 %v2166, %v2198
    %v2231 = vmax.f32 %v2167, %v2199
    %v2232 = vmax.f32 %v2168, %v2200
    %v2233 = vmax.f32 %v2169, %v2201
    %v2234 = vmax.f32 %v2170, %v2202
    %v2235 = vmax.f32 %v2171, %v2203
    %v2236 = vmax.f32 %v2172, %v2204
    %v2237 = vmax.f32 %v2173, %v2205
    %v2238 = vmax.f32 %v2174, %v2206
    %v2239 = vpack.c.bf16 %v2209, %v2207
    %v2240 = vpack.c.bf16 %v2210, %v2208
    %v2241 = vpack.c.bf16 %v2213, %v2211
    %v2242 = vpack.c.bf16 %v2214, %v2212
    %v2243 = vpack.c.bf16 %v2217, %v2215
    %v2244 = vpack.c.bf16 %v2218, %v2216
    %v2245 = vpack.c.bf16 %v2221, %v2219
    %v2246 = vpack.c.bf16 %v2222, %v2220
    %v2247 = vpack.c.bf16 %v2225, %v2223
    %v2248 = vpack.c.bf16 %v2226, %v2224
    %v2249 = vpack.c.bf16 %v2229, %v2227
    %v2250 = vpack.c.bf16 %v2230, %v2228
    %v2251 = vpack.c.bf16 %v2233, %v2231
    %v2252 = vpack.c.bf16 %v2234, %v2232
    %v2253 = vpack.c.bf16 %v2237, %v2235
    %v2254 = vpack.c.bf16 %v2238, %v2236
    %s2255 = scalar_lea.vmem [#allocation2], 768
    %v2256 = vld [vmem:[%s2255] sm:$0xff]
    %v2257 = vld [vmem:[%s2255 + $0x8] sm:$0xff]
    %v2258 = vld [vmem:[%s2255 + $0x10] sm:$0xff]
    %v2259 = vld [vmem:[%s2255 + $0x18] sm:$0xff]
    %v2260 = vld [vmem:[%s2255 + $0x20] sm:$0xff]
    %v2261 = vld [vmem:[%s2255 + $0x28] sm:$0xff]
    %v2262 = vld [vmem:[%s2255 + $0x30] sm:$0xff]
    %v2263 = vld [vmem:[%s2255 + $0x38] sm:$0xff]
    %v2264 = vld [vmem:[%s2255 + $0x40] sm:$0xff]
    %v2265 = vld [vmem:[%s2255 + $0x48] sm:$0xff]
    %v2266 = vld [vmem:[%s2255 + $0x50] sm:$0xff]
    %v2267 = vld [vmem:[%s2255 + $0x58] sm:$0xff]
    %v2268 = vld [vmem:[%s2255 + $0x60] sm:$0xff]
    %v2269 = vld [vmem:[%s2255 + $0x68] sm:$0xff]
    %v2270 = vld [vmem:[%s2255 + $0x70] sm:$0xff]
    %v2271 = vld [vmem:[%s2255 + $0x78] sm:$0xff]
    %v2272 = vld [vmem:[%s2255 + $0x80] sm:$0xff]
    %v2273 = vld [vmem:[%s2255 + $0x88] sm:$0xff]
    %v2274 = vld [vmem:[%s2255 + $0x90] sm:$0xff]
    %v2275 = vld [vmem:[%s2255 + $0x98] sm:$0xff]
    %v2276 = vld [vmem:[%s2255 + $0xa0] sm:$0xff]
    %v2277 = vld [vmem:[%s2255 + $0xa8] sm:$0xff]
    %v2278 = vld [vmem:[%s2255 + $0xb0] sm:$0xff]
    %v2279 = vld [vmem:[%s2255 + $0xb8] sm:$0xff]
    %v2280 = vld [vmem:[%s2255 + $0xc0] sm:$0xff]
    %v2281 = vld [vmem:[%s2255 + $0xc8] sm:$0xff]
    %v2282 = vld [vmem:[%s2255 + $0xd0] sm:$0xff]
    %v2283 = vld [vmem:[%s2255 + $0xd8] sm:$0xff]
    %v2284 = vld [vmem:[%s2255 + $0xe0] sm:$0xff]
    %v2285 = vld [vmem:[%s2255 + $0xe8] sm:$0xff]
    %v2286 = vld [vmem:[%s2255 + $0xf0] sm:$0xff]
    %v2287 = vld [vmem:[%s2255 + $0xf8] sm:$0xff]
    %v2320 = vunpack.c.l.b16 %v2256
    %v2321 = vunpack.c.h.b16 %v2256
    %v2322 = vunpack.c.l.b16 %v2257
    %v2323 = vunpack.c.h.b16 %v2257
    %v2324 = vunpack.c.l.b16 %v2258
    %v2325 = vunpack.c.h.b16 %v2258
    %v2326 = vunpack.c.l.b16 %v2259
    %v2327 = vunpack.c.h.b16 %v2259
    %v2328 = vunpack.c.l.b16 %v2260
    %v2329 = vunpack.c.h.b16 %v2260
    %v2330 = vunpack.c.l.b16 %v2261
    %v2331 = vunpack.c.h.b16 %v2261
    %v2332 = vunpack.c.l.b16 %v2262
    %v2333 = vunpack.c.h.b16 %v2262
    %v2334 = vunpack.c.l.b16 %v2263
    %v2335 = vunpack.c.h.b16 %v2263
    %v2336 = vunpack.c.l.b16 %v2264
    %v2337 = vunpack.c.h.b16 %v2264
    %v2338 = vunpack.c.l.b16 %v2265
    %v2339 = vunpack.c.h.b16 %v2265
    %v2340 = vunpack.c.l.b16 %v2266
    %v2341 = vunpack.c.h.b16 %v2266
    %v2342 = vunpack.c.l.b16 %v2267
    %v2343 = vunpack.c.h.b16 %v2267
    %v2344 = vunpack.c.l.b16 %v2268
    %v2345 = vunpack.c.h.b16 %v2268
    %v2346 = vunpack.c.l.b16 %v2269
    %v2347 = vunpack.c.h.b16 %v2269
    %v2348 = vunpack.c.l.b16 %v2270
    %v2349 = vunpack.c.h.b16 %v2270
    %v2350 = vunpack.c.l.b16 %v2271
    %v2351 = vunpack.c.h.b16 %v2271
    %v2352 = vunpack.c.l.b16 %v2272
    %v2353 = vunpack.c.h.b16 %v2272
    %v2354 = vunpack.c.l.b16 %v2273
    %v2355 = vunpack.c.h.b16 %v2273
    %v2356 = vunpack.c.l.b16 %v2274
    %v2357 = vunpack.c.h.b16 %v2274
    %v2358 = vunpack.c.l.b16 %v2275
    %v2359 = vunpack.c.h.b16 %v2275
    %v2360 = vunpack.c.l.b16 %v2276
    %v2361 = vunpack.c.h.b16 %v2276
    %v2362 = vunpack.c.l.b16 %v2277
    %v2363 = vunpack.c.h.b16 %v2277
    %v2364 = vunpack.c.l.b16 %v2278
    %v2365 = vunpack.c.h.b16 %v2278
    %v2366 = vunpack.c.l.b16 %v2279
    %v2367 = vunpack.c.h.b16 %v2279
    %v2368 = vunpack.c.l.b16 %v2280
    %v2369 = vunpack.c.h.b16 %v2280
    %v2370 = vunpack.c.l.b16 %v2281
    %v2371 = vunpack.c.h.b16 %v2281
    %v2372 = vunpack.c.l.b16 %v2282
    %v2373 = vunpack.c.h.b16 %v2282
    %v2374 = vunpack.c.l.b16 %v2283
    %v2375 = vunpack.c.h.b16 %v2283
    %v2376 = vunpack.c.l.b16 %v2284
    %v2377 = vunpack.c.h.b16 %v2284
    %v2378 = vunpack.c.l.b16 %v2285
    %v2379 = vunpack.c.h.b16 %v2285
    %v2380 = vunpack.c.l.b16 %v2286
    %v2381 = vunpack.c.h.b16 %v2286
    %v2382 = vunpack.c.l.b16 %v2287
    %v2383 = vunpack.c.h.b16 %v2287
    %v2384 = vpack.c.b16 %v2322, %v2320
    %v2385 = vpack.c.b16 %v2323, %v2321
    %v2386 = vpack.c.b16 %v2326, %v2324
    %v2387 = vpack.c.b16 %v2327, %v2325
    %v2388 = vpack.c.b16 %v2330, %v2328
    %v2389 = vpack.c.b16 %v2331, %v2329
    %v2390 = vpack.c.b16 %v2334, %v2332
    %v2391 = vpack.c.b16 %v2335, %v2333
    %v2392 = vpack.c.b16 %v2338, %v2336
    %v2393 = vpack.c.b16 %v2339, %v2337
    %v2394 = vpack.c.b16 %v2342, %v2340
    %v2395 = vpack.c.b16 %v2343, %v2341
    %v2396 = vpack.c.b16 %v2346, %v2344
    %v2397 = vpack.c.b16 %v2347, %v2345
    %v2398 = vpack.c.b16 %v2350, %v2348
    %v2399 = vpack.c.b16 %v2351, %v2349
    %v2400 = vpack.c.b16 %v2354, %v2352
    %v2401 = vpack.c.b16 %v2355, %v2353
    %v2402 = vpack.c.b16 %v2358, %v2356
    %v2403 = vpack.c.b16 %v2359, %v2357
    %v2404 = vpack.c.b16 %v2362, %v2360
    %v2405 = vpack.c.b16 %v2363, %v2361
    %v2406 = vpack.c.b16 %v2366, %v2364
    %v2407 = vpack.c.b16 %v2367, %v2365
    %v2408 = vpack.c.b16 %v2370, %v2368
    %v2409 = vpack.c.b16 %v2371, %v2369
    %v2410 = vpack.c.b16 %v2374, %v2372
    %v2411 = vpack.c.b16 %v2375, %v2373
    %v2412 = vpack.c.b16 %v2378, %v2376
    %v2413 = vpack.c.b16 %v2379, %v2377
    %v2414 = vpack.c.b16 %v2382, %v2380
    %v2415 = vpack.c.b16 %v2383, %v2381
    %2448 = vmatpush.bf16.msra.mxu0 %v2398
    %2449 = vmatpush.bf16.msra.mxu0 %v2396
    %2450 = vmatpush.bf16.msra.mxu0 %v2394
    %2451 = vmatpush.bf16.msra.mxu0 %v2392
    %2452 = vmatpush.bf16.msra.mxu0 %v2390
    %2453 = vmatpush.bf16.msra.mxu0 %v2388
    %2454 = vmatpush.bf16.msra.mxu0 %v2386
    %2455 = vmatpush.bf16.msra.mxu0 %v2384
    %2456 = vmatmul.bf16.gmra.mxu0 %v2239
    %v2457 = vpop.f32.mrf.mxu0
    %v2458 = vadd.f32 0.0, %v2457
    %v2459 = vpop.f32.mrf.mxu0
    %v2460 = vadd.f32 0.0, %v2459
    %2461 = vmatmul.bf16.gmra.mxu0 %v2241
    %v2462 = vpop.f32.mrf.mxu0
    %v2463 = vadd.f32 0.0, %v2462
    %v2464 = vpop.f32.mrf.mxu0
    %v2465 = vadd.f32 0.0, %v2464
    %2466 = vmatmul.bf16.gmra.mxu0 %v2243
    %v2467 = vpop.f32.mrf.mxu0
    %v2468 = vadd.f32 0.0, %v2467
    %v2469 = vpop.f32.mrf.mxu0
    %v2470 = vadd.f32 0.0, %v2469
    %2471 = vmatmul.bf16.gmra.mxu0 %v2245
    %v2472 = vpop.f32.mrf.mxu0
    %v2473 = vadd.f32 0.0, %v2472
    %v2474 = vpop.f32.mrf.mxu0
    %v2475 = vadd.f32 0.0, %v2474
    %2476 = vmatmul.bf16.gmra.mxu0 %v2247
    %v2477 = vpop.f32.mrf.mxu0
    %v2478 = vadd.f32 0.0, %v2477
    %v2479 = vpop.f32.mrf.mxu0
    %v2480 = vadd.f32 0.0, %v2479
    %2481 = vmatmul.bf16.gmra.mxu0 %v2249
    %v2482 = vpop.f32.mrf.mxu0
    %v2483 = vadd.f32 0.0, %v2482
    %v2484 = vpop.f32.mrf.mxu0
    %v2485 = vadd.f32 0.0, %v2484
    %2486 = vmatmul.bf16.gmra.mxu0 %v2251
    %v2487 = vpop.f32.mrf.mxu0
    %v2488 = vadd.f32 0.0, %v2487
    %v2489 = vpop.f32.mrf.mxu0
    %v2490 = vadd.f32 0.0, %v2489
    %2491 = vmatmul.bf16.gmra.mxu0 %v2253
    %v2492 = vpop.f32.mrf.mxu0
    %v2493 = vadd.f32 0.0, %v2492
    %v2494 = vpop.f32.mrf.mxu0
    %v2495 = vadd.f32 0.0, %v2494
    %2496 = vdwg.mxu0
    %2497 = vmatpush.bf16.msra.mxu0 %v2414
    %2498 = vmatpush.bf16.msra.mxu0 %v2412
    %2499 = vmatpush.bf16.msra.mxu0 %v2410
    %2500 = vmatpush.bf16.msra.mxu0 %v2408
    %2501 = vmatpush.bf16.msra.mxu0 %v2406
    %2502 = vmatpush.bf16.msra.mxu0 %v2404
    %2503 = vmatpush.bf16.msra.mxu0 %v2402
    %2504 = vmatpush.bf16.msra.mxu0 %v2400
    %2505 = vmatmul.bf16.gmra.mxu0 %v2240
    %v2506 = vpop.f32.mrf.mxu0
    %v2507 = vadd.f32 %v2458, %v2506
    %v2508 = vpop.f32.mrf.mxu0
    %v2509 = vadd.f32 %v2460, %v2508
    %2510 = vmatmul.bf16.gmra.mxu0 %v2242
    %v2511 = vpop.f32.mrf.mxu0
    %v2512 = vadd.f32 %v2463, %v2511
    %v2513 = vpop.f32.mrf.mxu0
    %v2514 = vadd.f32 %v2465, %v2513
    %2515 = vmatmul.bf16.gmra.mxu0 %v2244
    %v2516 = vpop.f32.mrf.mxu0
    %v2517 = vadd.f32 %v2468, %v2516
    %v2518 = vpop.f32.mrf.mxu0
    %v2519 = vadd.f32 %v2470, %v2518
    %2520 = vmatmul.bf16.gmra.mxu0 %v2246
    %v2521 = vpop.f32.mrf.mxu0
    %v2522 = vadd.f32 %v2473, %v2521
    %v2523 = vpop.f32.mrf.mxu0
    %v2524 = vadd.f32 %v2475, %v2523
    %2525 = vmatmul.bf16.gmra.mxu0 %v2248
    %v2526 = vpop.f32.mrf.mxu0
    %v2527 = vadd.f32 %v2478, %v2526
    %v2528 = vpop.f32.mrf.mxu0
    %v2529 = vadd.f32 %v2480, %v2528
    %2530 = vmatmul.bf16.gmra.mxu0 %v2250
    %v2531 = vpop.f32.mrf.mxu0
    %v2532 = vadd.f32 %v2483, %v2531
    %v2533 = vpop.f32.mrf.mxu0
    %v2534 = vadd.f32 %v2485, %v2533
    %2535 = vmatmul.bf16.gmra.mxu0 %v2252
    %v2536 = vpop.f32.mrf.mxu0
    %v2537 = vadd.f32 %v2488, %v2536
    %v2538 = vpop.f32.mrf.mxu0
    %v2539 = vadd.f32 %v2490, %v2538
    %2540 = vmatmul.bf16.gmra.mxu0 %v2254
    %v2541 = vpop.f32.mrf.mxu0
    %v2542 = vadd.f32 %v2493, %v2541
    %v2543 = vpop.f32.mrf.mxu0
    %v2544 = vadd.f32 %v2495, %v2543
    %2545 = vdwg.mxu0
    %2546 = vmatpush.bf16.msra.mxu0 %v2399
    %2547 = vmatpush.bf16.msra.mxu0 %v2397
    %2548 = vmatpush.bf16.msra.mxu0 %v2395
    %2549 = vmatpush.bf16.msra.mxu0 %v2393
    %2550 = vmatpush.bf16.msra.mxu0 %v2391
    %2551 = vmatpush.bf16.msra.mxu0 %v2389
    %2552 = vmatpush.bf16.msra.mxu0 %v2387
    %2553 = vmatpush.bf16.msra.mxu0 %v2385
    %2554 = vmatmul.bf16.gmra.mxu0 %v2239
    %v2555 = vpop.f32.mrf.mxu0
    %v2556 = vadd.f32 0.0, %v2555
    %v2557 = vpop.f32.mrf.mxu0
    %v2558 = vadd.f32 0.0, %v2557
    %2559 = vmatmul.bf16.gmra.mxu0 %v2241
    %v2560 = vpop.f32.mrf.mxu0
    %v2561 = vadd.f32 0.0, %v2560
    %v2562 = vpop.f32.mrf.mxu0
    %v2563 = vadd.f32 0.0, %v2562
    %2564 = vmatmul.bf16.gmra.mxu0 %v2243
    %v2565 = vpop.f32.mrf.mxu0
    %v2566 = vadd.f32 0.0, %v2565
    %v2567 = vpop.f32.mrf.mxu0
    %v2568 = vadd.f32 0.0, %v2567
    %2569 = vmatmul.bf16.gmra.mxu0 %v2245
    %v2570 = vpop.f32.mrf.mxu0
    %v2571 = vadd.f32 0.0, %v2570
    %v2572 = vpop.f32.mrf.mxu0
    %v2573 = vadd.f32 0.0, %v2572
    %2574 = vmatmul.bf16.gmra.mxu0 %v2247
    %v2575 = vpop.f32.mrf.mxu0
    %v2576 = vadd.f32 0.0, %v2575
    %v2577 = vpop.f32.mrf.mxu0
    %v2578 = vadd.f32 0.0, %v2577
    %2579 = vmatmul.bf16.gmra.mxu0 %v2249
    %v2580 = vpop.f32.mrf.mxu0
    %v2581 = vadd.f32 0.0, %v2580
    %v2582 = vpop.f32.mrf.mxu0
    %v2583 = vadd.f32 0.0, %v2582
    %2584 = vmatmul.bf16.gmra.mxu0 %v2251
    %v2585 = vpop.f32.mrf.mxu0
    %v2586 = vadd.f32 0.0, %v2585
    %v2587 = vpop.f32.mrf.mxu0
    %v2588 = vadd.f32 0.0, %v2587
    %2589 = vmatmul.bf16.gmra.mxu0 %v2253
    %v2590 = vpop.f32.mrf.mxu0
    %v2591 = vadd.f32 0.0, %v2590
    %v2592 = vpop.f32.mrf.mxu0
    %v2593 = vadd.f32 0.0, %v2592
    %2594 = vdwg.mxu0
    %2595 = vmatpush.bf16.msra.mxu0 %v2415
    %2596 = vmatpush.bf16.msra.mxu0 %v2413
    %2597 = vmatpush.bf16.msra.mxu0 %v2411
    %2598 = vmatpush.bf16.msra.mxu0 %v2409
    %2599 = vmatpush.bf16.msra.mxu0 %v2407
    %2600 = vmatpush.bf16.msra.mxu0 %v2405
    %2601 = vmatpush.bf16.msra.mxu0 %v2403
    %2602 = vmatpush.bf16.msra.mxu0 %v2401
    %2603 = vmatmul.bf16.gmra.mxu0 %v2240
    %v2604 = vpop.f32.mrf.mxu0
    %v2605 = vadd.f32 %v2556, %v2604
    %v2606 = vpop.f32.mrf.mxu0
    %v2607 = vadd.f32 %v2558, %v2606
    %2608 = vmatmul.bf16.gmra.mxu0 %v2242
    %v2609 = vpop.f32.mrf.mxu0
    %v2610 = vadd.f32 %v2561, %v2609
    %v2611 = vpop.f32.mrf.mxu0
    %v2612 = vadd.f32 %v2563, %v2611
    %2613 = vmatmul.bf16.gmra.mxu0 %v2244
    %v2614 = vpop.f32.mrf.mxu0
    %v2615 = vadd.f32 %v2566, %v2614
    %v2616 = vpop.f32.mrf.mxu0
    %v2617 = vadd.f32 %v2568, %v2616
    %2618 = vmatmul.bf16.gmra.mxu0 %v2246
    %v2619 = vpop.f32.mrf.mxu0
    %v2620 = vadd.f32 %v2571, %v2619
    %v2621 = vpop.f32.mrf.mxu0
    %v2622 = vadd.f32 %v2573, %v2621
    %2623 = vmatmul.bf16.gmra.mxu0 %v2248
    %v2624 = vpop.f32.mrf.mxu0
    %v2625 = vadd.f32 %v2576, %v2624
    %v2626 = vpop.f32.mrf.mxu0
    %v2627 = vadd.f32 %v2578, %v2626
    %2628 = vmatmul.bf16.gmra.mxu0 %v2250
    %v2629 = vpop.f32.mrf.mxu0
    %v2630 = vadd.f32 %v2581, %v2629
    %v2631 = vpop.f32.mrf.mxu0
    %v2632 = vadd.f32 %v2583, %v2631
    %2633 = vmatmul.bf16.gmra.mxu0 %v2252
    %v2634 = vpop.f32.mrf.mxu0
    %v2635 = vadd.f32 %v2586, %v2634
    %v2636 = vpop.f32.mrf.mxu0
    %v2637 = vadd.f32 %v2588, %v2636
    %2638 = vmatmul.bf16.gmra.mxu0 %v2254
    %v2639 = vpop.f32.mrf.mxu0
    %v2640 = vadd.f32 %v2591, %v2639
    %v2641 = vpop.f32.mrf.mxu0
    %v2642 = vadd.f32 %v2593, %v2641
    %2643 = vdwg.mxu0
    %s2644 = scalar_lea.vmem %s2, 12
    %v2645 = vld [vmem:[%s2644] sm:$0xf]
    %v2646 = vadd.f32 %v2507, %v2509
    %v2647 = vadd.f32 %v2646, %v2512
    %v2648 = vadd.f32 %v2647, %v2514
    %v2649 = vadd.f32 %v2648, %v2517
    %v2650 = vadd.f32 %v2649, %v2519
    %v2651 = vadd.f32 %v2650, %v2522
    %v2652 = vadd.f32 %v2651, %v2524
    %v2653 = vadd.f32 %v2652, %v2527
    %v2654 = vadd.f32 %v2653, %v2529
    %v2655 = vadd.f32 %v2654, %v2532
    %v2656 = vadd.f32 %v2655, %v2534
    %v2657 = vadd.f32 %v2656, %v2537
    %v2658 = vadd.f32 %v2657, %v2539
    %v2659 = vadd.f32 %v2658, %v2542
    %v2660 = vadd.f32 %v2659, %v2544
    %v2661 = vrot.slane %v2660, 4
    %v2662 = vadd.f32 %v2660, %v2661
    %v2663 = vrot.slane %v2662, 2
    %v2664 = vadd.f32 %v2662, %v2663
    %v2665 = vrot.slane %v2664, 1
    %v2666 = vadd.f32 %v2664, %v2665
    %v2667 = vadd.f32 %v2605, %v2607
    %v2668 = vadd.f32 %v2667, %v2610
    %v2669 = vadd.f32 %v2668, %v2612
    %v2670 = vadd.f32 %v2669, %v2615
    %v2671 = vadd.f32 %v2670, %v2617
    %v2672 = vadd.f32 %v2671, %v2620
    %v2673 = vadd.f32 %v2672, %v2622
    %v2674 = vadd.f32 %v2673, %v2625
    %v2675 = vadd.f32 %v2674, %v2627
    %v2676 = vadd.f32 %v2675, %v2630
    %v2677 = vadd.f32 %v2676, %v2632
    %v2678 = vadd.f32 %v2677, %v2635
    %v2679 = vadd.f32 %v2678, %v2637
    %v2680 = vadd.f32 %v2679, %v2640
    %v2681 = vadd.f32 %v2680, %v2642
    %v2682 = vrot.slane %v2681, 4
    %v2683 = vadd.f32 %v2681, %v2682
    %v2684 = vrot.slane %v2683, 2
    %v2685 = vadd.f32 %v2683, %v2684
    %v2686 = vrot.slane %v2685, 1
    %v2687 = vadd.f32 %v2685, %v2686
    %v2688 = vmul.f32 %v2666, %v515
    %v2689 = vmul.f32 %v2687, %v515
    %v2690 = vsub.f32 %v2507, %v2688
    %v2691 = vsub.f32 %v2605, %v2689
    %v2692 = vsub.f32 %v2509, %v2688
    %v2693 = vsub.f32 %v2607, %v2689
    %v2694 = vsub.f32 %v2512, %v2688
    %v2695 = vsub.f32 %v2610, %v2689
    %v2696 = vsub.f32 %v2514, %v2688
    %v2697 = vsub.f32 %v2612, %v2689
    %v2698 = vsub.f32 %v2517, %v2688
    %v2699 = vsub.f32 %v2615, %v2689
    %v2700 = vsub.f32 %v2519, %v2688
    %v2701 = vsub.f32 %v2617, %v2689
    %v2702 = vsub.f32 %v2522, %v2688
    %v2703 = vsub.f32 %v2620, %v2689
    %v2704 = vsub.f32 %v2524, %v2688
    %v2705 = vsub.f32 %v2622, %v2689
    %v2706 = vsub.f32 %v2527, %v2688
    %v2707 = vsub.f32 %v2625, %v2689
    %v2708 = vsub.f32 %v2529, %v2688
    %v2709 = vsub.f32 %v2627, %v2689
    %v2710 = vsub.f32 %v2532, %v2688
    %v2711 = vsub.f32 %v2630, %v2689
    %v2712 = vsub.f32 %v2534, %v2688
    %v2713 = vsub.f32 %v2632, %v2689
    %v2714 = vsub.f32 %v2537, %v2688
    %v2715 = vsub.f32 %v2635, %v2689
    %v2716 = vsub.f32 %v2539, %v2688
    %v2717 = vsub.f32 %v2637, %v2689
    %v2718 = vsub.f32 %v2542, %v2688
    %v2719 = vsub.f32 %v2640, %v2689
    %v2720 = vsub.f32 %v2544, %v2688
    %v2721 = vsub.f32 %v2642, %v2689
    %v2722 = vmul.f32 %v2690, %v2690
    %v2723 = vmul.f32 %v2691, %v2691
    %v2724 = vmul.f32 %v2692, %v2692
    %v2725 = vmul.f32 %v2693, %v2693
    %v2726 = vmul.f32 %v2694, %v2694
    %v2727 = vmul.f32 %v2695, %v2695
    %v2728 = vmul.f32 %v2696, %v2696
    %v2729 = vmul.f32 %v2697, %v2697
    %v2730 = vmul.f32 %v2698, %v2698
    %v2731 = vmul.f32 %v2699, %v2699
    %v2732 = vmul.f32 %v2700, %v2700
    %v2733 = vmul.f32 %v2701, %v2701
    %v2734 = vmul.f32 %v2702, %v2702
    %v2735 = vmul.f32 %v2703, %v2703
    %v2736 = vmul.f32 %v2704, %v2704
    %v2737 = vmul.f32 %v2705, %v2705
    %v2738 = vmul.f32 %v2706, %v2706
    %v2739 = vmul.f32 %v2707, %v2707
    %v2740 = vmul.f32 %v2708, %v2708
    %v2741 = vmul.f32 %v2709, %v2709
    %v2742 = vmul.f32 %v2710, %v2710
    %v2743 = vmul.f32 %v2711, %v2711
    %v2744 = vmul.f32 %v2712, %v2712
    %v2745 = vmul.f32 %v2713, %v2713
    %v2746 = vmul.f32 %v2714, %v2714
    %v2747 = vmul.f32 %v2715, %v2715
    %v2748 = vmul.f32 %v2716, %v2716
    %v2749 = vmul.f32 %v2717, %v2717
    %v2750 = vmul.f32 %v2718, %v2718
    %v2751 = vmul.f32 %v2719, %v2719
    %v2752 = vmul.f32 %v2720, %v2720
    %v2753 = vmul.f32 %v2721, %v2721
    %v2754 = vadd.f32 %v2722, %v2724
    %v2755 = vadd.f32 %v2754, %v2726
    %v2756 = vadd.f32 %v2755, %v2728
    %v2757 = vadd.f32 %v2756, %v2730
    %v2758 = vadd.f32 %v2757, %v2732
    %v2759 = vadd.f32 %v2758, %v2734
    %v2760 = vadd.f32 %v2759, %v2736
    %v2761 = vadd.f32 %v2760, %v2738
    %v2762 = vadd.f32 %v2761, %v2740
    %v2763 = vadd.f32 %v2762, %v2742
    %v2764 = vadd.f32 %v2763, %v2744
    %v2765 = vadd.f32 %v2764, %v2746
    %v2766 = vadd.f32 %v2765, %v2748
    %v2767 = vadd.f32 %v2766, %v2750
    %v2768 = vadd.f32 %v2767, %v2752
    %v2769 = vrot.slane %v2768, 4
    %v2770 = vadd.f32 %v2768, %v2769
    %v2771 = vrot.slane %v2770, 2
    %v2772 = vadd.f32 %v2770, %v2771
    %v2773 = vrot.slane %v2772, 1
    %v2774 = vadd.f32 %v2772, %v2773
    %v2775 = vadd.f32 %v2723, %v2725
    %v2776 = vadd.f32 %v2775, %v2727
    %v2777 = vadd.f32 %v2776, %v2729
    %v2778 = vadd.f32 %v2777, %v2731
    %v2779 = vadd.f32 %v2778, %v2733
    %v2780 = vadd.f32 %v2779, %v2735
    %v2781 = vadd.f32 %v2780, %v2737
    %v2782 = vadd.f32 %v2781, %v2739
    %v2783 = vadd.f32 %v2782, %v2741
    %v2784 = vadd.f32 %v2783, %v2743
    %v2785 = vadd.f32 %v2784, %v2745
    %v2786 = vadd.f32 %v2785, %v2747
    %v2787 = vadd.f32 %v2786, %v2749
    %v2788 = vadd.f32 %v2787, %v2751
    %v2789 = vadd.f32 %v2788, %v2753
    %v2790 = vrot.slane %v2789, 4
    %v2791 = vadd.f32 %v2789, %v2790
    %v2792 = vrot.slane %v2791, 2
    %v2793 = vadd.f32 %v2791, %v2792
    %v2794 = vrot.slane %v2793, 1
    %v2795 = vadd.f32 %v2793, %v2794
    %v2796 = vmul.f32 %v2774, %v515
    %v2797 = vmul.f32 %v2795, %v515
    %v2798 = vadd.f32 %v2796, 1e-05
    %v2799 = vadd.f32 %v2797, 1e-05
    %v2800 = vrsqrt.pop %v2798
    %v2801 = vmul.f32 %v2800, %v2798
    %v2802 = vmul.f32 %v2801, %v2800
    %v2803 = vmul.f32 0.5, %v2802
    %v2804 = vsub.f32 1.5, %v2803
    %v2805 = vmul.f32 %v2800, %v2804
    %vm2806 = vweird.f32 %v2798
    %vm2807 = vweird.f32 %v2800
    %vm2808 = vmor %vm2806, %vm2807
    %v2809 = vsel %vm2808, %v2800, %v2805
    %v2810 = vrsqrt.pop %v2799
    %v2811 = vmul.f32 %v2810, %v2799
    %v2812 = vmul.f32 %v2811, %v2810
    %v2813 = vmul.f32 0.5, %v2812
    %v2814 = vsub.f32 1.5, %v2813
    %v2815 = vmul.f32 %v2810, %v2814
    %vm2816 = vweird.f32 %v2799
    %vm2817 = vweird.f32 %v2810
    %vm2818 = vmor %vm2816, %vm2817
    %v2819 = vsel %vm2818, %v2810, %v2815
    %v2821 = vperm.slane %v2645, 0
    %v2822 = vperm.slane %v2645, 2
    %v2825 = vmul.f32 %v2809, %v2821
    %v2826 = vmul.f32 %v2819, %v2822
    %v2827 = vperm.slane %v2825, 0
    %v2828 = vperm.slane %v2826, 0
    %v2829 = vmul.f32 %v2690, %v2827
    %v2830 = vmul.f32 %v2691, %v2828
    %v2831 = vmul.f32 %v2692, %v2827
    %v2832 = vmul.f32 %v2693, %v2828
    %v2833 = vmul.f32 %v2694, %v2827
    %v2834 = vmul.f32 %v2695, %v2828
    %v2835 = vmul.f32 %v2696, %v2827
    %v2836 = vmul.f32 %v2697, %v2828
    %v2837 = vmul.f32 %v2698, %v2827
    %v2838 = vmul.f32 %v2699, %v2828
    %v2839 = vmul.f32 %v2700, %v2827
    %v2840 = vmul.f32 %v2701, %v2828
    %v2841 = vmul.f32 %v2702, %v2827
    %v2842 = vmul.f32 %v2703, %v2828
    %v2843 = vmul.f32 %v2704, %v2827
    %v2844 = vmul.f32 %v2705, %v2828
    %v2845 = vmul.f32 %v2706, %v2827
    %v2846 = vmul.f32 %v2707, %v2828
    %v2847 = vmul.f32 %v2708, %v2827
    %v2848 = vmul.f32 %v2709, %v2828
    %v2849 = vmul.f32 %v2710, %v2827
    %v2850 = vmul.f32 %v2711, %v2828
    %v2851 = vmul.f32 %v2712, %v2827
    %v2852 = vmul.f32 %v2713, %v2828
    %v2853 = vmul.f32 %v2714, %v2827
    %v2854 = vmul.f32 %v2715, %v2828
    %v2855 = vmul.f32 %v2716, %v2827
    %v2856 = vmul.f32 %v2717, %v2828
    %v2857 = vmul.f32 %v2718, %v2827
    %v2858 = vmul.f32 %v2719, %v2828
    %v2859 = vmul.f32 %v2720, %v2827
    %v2860 = vmul.f32 %v2721, %v2828
    %v2861 = vperm.slane %v2645, 1
    %v2862 = vperm.slane %v2645, 3
    %v2865 = vperm.slane %v2861, 1
    %v2866 = vperm.slane %v2862, 1
    %v2867 = vadd.f32 %v2829, %v2865
    %v2868 = vadd.f32 %v2830, %v2866
    %v2869 = vadd.f32 %v2831, %v2865
    %v2870 = vadd.f32 %v2832, %v2866
    %v2871 = vadd.f32 %v2833, %v2865
    %v2872 = vadd.f32 %v2834, %v2866
    %v2873 = vadd.f32 %v2835, %v2865
    %v2874 = vadd.f32 %v2836, %v2866
    %v2875 = vadd.f32 %v2837, %v2865
    %v2876 = vadd.f32 %v2838, %v2866
    %v2877 = vadd.f32 %v2839, %v2865
    %v2878 = vadd.f32 %v2840, %v2866
    %v2879 = vadd.f32 %v2841, %v2865
    %v2880 = vadd.f32 %v2842, %v2866
    %v2881 = vadd.f32 %v2843, %v2865
    %v2882 = vadd.f32 %v2844, %v2866
    %v2883 = vadd.f32 %v2845, %v2865
    %v2884 = vadd.f32 %v2846, %v2866
    %v2885 = vadd.f32 %v2847, %v2865
    %v2886 = vadd.f32 %v2848, %v2866
    %v2887 = vadd.f32 %v2849, %v2865
    %v2888 = vadd.f32 %v2850, %v2866
    %v2889 = vadd.f32 %v2851, %v2865
    %v2890 = vadd.f32 %v2852, %v2866
    %v2891 = vadd.f32 %v2853, %v2865
    %v2892 = vadd.f32 %v2854, %v2866
    %v2893 = vadd.f32 %v2855, %v2865
    %v2894 = vadd.f32 %v2856, %v2866
    %v2895 = vadd.f32 %v2857, %v2865
    %v2896 = vadd.f32 %v2858, %v2866
    %v2897 = vadd.f32 %v2859, %v2865
    %v2898 = vadd.f32 %v2860, %v2866
    %v2899 = vtanh.pop %v2867
    %v2900 = vtanh.pop %v2868
    %v2901 = vtanh.pop %v2869
    %v2902 = vtanh.pop %v2870
    %v2903 = vtanh.pop %v2871
    %v2904 = vtanh.pop %v2872
    %v2905 = vtanh.pop %v2873
    %v2906 = vtanh.pop %v2874
    %v2907 = vtanh.pop %v2875
    %v2908 = vtanh.pop %v2876
    %v2909 = vtanh.pop %v2877
    %v2910 = vtanh.pop %v2878
    %v2911 = vtanh.pop %v2879
    %v2912 = vtanh.pop %v2880
    %v2913 = vtanh.pop %v2881
    %v2914 = vtanh.pop %v2882
    %v2915 = vtanh.pop %v2883
    %v2916 = vtanh.pop %v2884
    %v2917 = vtanh.pop %v2885
    %v2918 = vtanh.pop %v2886
    %v2919 = vtanh.pop %v2887
    %v2920 = vtanh.pop %v2888
    %v2921 = vtanh.pop %v2889
    %v2922 = vtanh.pop %v2890
    %v2923 = vtanh.pop %v2891
    %v2924 = vtanh.pop %v2892
    %v2925 = vtanh.pop %v2893
    %v2926 = vtanh.pop %v2894
    %v2927 = vtanh.pop %v2895
    %v2928 = vtanh.pop %v2896
    %v2929 = vtanh.pop %v2897
    %v2930 = vtanh.pop %v2898
    %v2931 = vpack.c.bf16 %v2901, %v2899
    %v2932 = vpack.c.bf16 %v2902, %v2900
    %v2933 = vpack.c.bf16 %v2905, %v2903
    %v2934 = vpack.c.bf16 %v2906, %v2904
    %v2935 = vpack.c.bf16 %v2909, %v2907
    %v2936 = vpack.c.bf16 %v2910, %v2908
    %v2937 = vpack.c.bf16 %v2913, %v2911
    %v2938 = vpack.c.bf16 %v2914, %v2912
    %v2939 = vpack.c.bf16 %v2917, %v2915
    %v2940 = vpack.c.bf16 %v2918, %v2916
    %v2941 = vpack.c.bf16 %v2921, %v2919
    %v2942 = vpack.c.bf16 %v2922, %v2920
    %v2943 = vpack.c.bf16 %v2925, %v2923
    %v2944 = vpack.c.bf16 %v2926, %v2924
    %v2945 = vpack.c.bf16 %v2929, %v2927
    %v2946 = vpack.c.bf16 %v2930, %v2928
    %s2947 = scalar_lea.vmem [#allocation2], 1024
    %v2948 = vld [vmem:[%s2947] sm:$0xff]
    %v2949 = vld [vmem:[%s2947 + $0x8] sm:$0xff]
    %v2950 = vld [vmem:[%s2947 + $0x10] sm:$0xff]
    %v2951 = vld [vmem:[%s2947 + $0x18] sm:$0xff]
    %v2952 = vld [vmem:[%s2947 + $0x20] sm:$0xff]
    %v2953 = vld [vmem:[%s2947 + $0x28] sm:$0xff]
    %v2954 = vld [vmem:[%s2947 + $0x30] sm:$0xff]
    %v2955 = vld [vmem:[%s2947 + $0x38] sm:$0xff]
    %v2956 = vld [vmem:[%s2947 + $0x40] sm:$0xff]
    %v2957 = vld [vmem:[%s2947 + $0x48] sm:$0xff]
    %v2958 = vld [vmem:[%s2947 + $0x50] sm:$0xff]
    %v2959 = vld [vmem:[%s2947 + $0x58] sm:$0xff]
    %v2960 = vld [vmem:[%s2947 + $0x60] sm:$0xff]
    %v2961 = vld [vmem:[%s2947 + $0x68] sm:$0xff]
    %v2962 = vld [vmem:[%s2947 + $0x70] sm:$0xff]
    %v2963 = vld [vmem:[%s2947 + $0x78] sm:$0xff]
    %v2964 = vld [vmem:[%s2947 + $0x80] sm:$0xff]
    %v2965 = vld [vmem:[%s2947 + $0x88] sm:$0xff]
    %v2966 = vld [vmem:[%s2947 + $0x90] sm:$0xff]
    %v2967 = vld [vmem:[%s2947 + $0x98] sm:$0xff]
    %v2968 = vld [vmem:[%s2947 + $0xa0] sm:$0xff]
    %v2969 = vld [vmem:[%s2947 + $0xa8] sm:$0xff]
    %v2970 = vld [vmem:[%s2947 + $0xb0] sm:$0xff]
    %v2971 = vld [vmem:[%s2947 + $0xb8] sm:$0xff]
    %v2972 = vld [vmem:[%s2947 + $0xc0] sm:$0xff]
    %v2973 = vld [vmem:[%s2947 + $0xc8] sm:$0xff]
    %v2974 = vld [vmem:[%s2947 + $0xd0] sm:$0xff]
    %v2975 = vld [vmem:[%s2947 + $0xd8] sm:$0xff]
    %v2976 = vld [vmem:[%s2947 + $0xe0] sm:$0xff]
    %v2977 = vld [vmem:[%s2947 + $0xe8] sm:$0xff]
    %v2978 = vld [vmem:[%s2947 + $0xf0] sm:$0xff]
    %v2979 = vld [vmem:[%s2947 + $0xf8] sm:$0xff]
    %v3012 = vunpack.c.l.b16 %v2948
    %v3013 = vunpack.c.l.b16 %v2949
    %v3014 = vunpack.c.l.b16 %v2950
    %v3015 = vunpack.c.l.b16 %v2951
    %v3016 = vunpack.c.l.b16 %v2952
    %v3017 = vunpack.c.l.b16 %v2953
    %v3018 = vunpack.c.l.b16 %v2954
    %v3019 = vunpack.c.l.b16 %v2955
    %v3020 = vunpack.c.l.b16 %v2956
    %v3021 = vunpack.c.l.b16 %v2957
    %v3022 = vunpack.c.l.b16 %v2958
    %v3023 = vunpack.c.l.b16 %v2959
    %v3024 = vunpack.c.l.b16 %v2960
    %v3025 = vunpack.c.l.b16 %v2961
    %v3026 = vunpack.c.l.b16 %v2962
    %v3027 = vunpack.c.l.b16 %v2963
    %v3028 = vunpack.c.l.b16 %v2964
    %v3029 = vunpack.c.l.b16 %v2965
    %v3030 = vunpack.c.l.b16 %v2966
    %v3031 = vunpack.c.l.b16 %v2967
    %v3032 = vunpack.c.l.b16 %v2968
    %v3033 = vunpack.c.l.b16 %v2969
    %v3034 = vunpack.c.l.b16 %v2970
    %v3035 = vunpack.c.l.b16 %v2971
    %v3036 = vunpack.c.l.b16 %v2972
    %v3037 = vunpack.c.l.b16 %v2973
    %v3038 = vunpack.c.l.b16 %v2974
    %v3039 = vunpack.c.l.b16 %v2975
    %v3040 = vunpack.c.l.b16 %v2976
    %v3041 = vunpack.c.l.b16 %v2977
    %v3042 = vunpack.c.l.b16 %v2978
    %v3043 = vunpack.c.l.b16 %v2979
    %v3044 = vpack.c.b16 %v3013, %v3012
    %v3045 = vpack.c.b16 %v3015, %v3014
    %v3046 = vpack.c.b16 %v3017, %v3016
    %v3047 = vpack.c.b16 %v3019, %v3018
    %v3048 = vpack.c.b16 %v3021, %v3020
    %v3049 = vpack.c.b16 %v3023, %v3022
    %v3050 = vpack.c.b16 %v3025, %v3024
    %v3051 = vpack.c.b16 %v3027, %v3026
    %v3052 = vpack.c.b16 %v3029, %v3028
    %v3053 = vpack.c.b16 %v3031, %v3030
    %v3054 = vpack.c.b16 %v3033, %v3032
    %v3055 = vpack.c.b16 %v3035, %v3034
    %v3056 = vpack.c.b16 %v3037, %v3036
    %v3057 = vpack.c.b16 %v3039, %v3038
    %v3058 = vpack.c.b16 %v3041, %v3040
    %v3059 = vpack.c.b16 %v3043, %v3042
    %3076 = vmatpush.bf16.msra.mxu0 %v3051
    %3077 = vmatpush.bf16.msra.mxu0 %v3050
    %3078 = vmatpush.bf16.msra.mxu0 %v3049
    %3079 = vmatpush.bf16.msra.mxu0 %v3048
    %3080 = vmatpush.bf16.msra.mxu0 %v3047
    %3081 = vmatpush.bf16.msra.mxu0 %v3046
    %3082 = vmatpush.bf16.msra.mxu0 %v3045
    %3083 = vmatpush.bf16.msra.mxu0 %v3044
    %3084 = vmatmul.bf16.gmra.mxu0 %v2931
    %v3085 = vpop.f32.mrf.mxu0
    %v3086 = vadd.f32 0.0, %v3085
    %v3087 = vpop.f32.mrf.mxu0
    %v3088 = vadd.f32 0.0, %v3087
    %3089 = vmatmul.bf16.gmra.mxu0 %v2933
    %v3090 = vpop.f32.mrf.mxu0
    %v3091 = vadd.f32 0.0, %v3090
    %v3092 = vpop.f32.mrf.mxu0
    %v3093 = vadd.f32 0.0, %v3092
    %3094 = vmatmul.bf16.gmra.mxu0 %v2935
    %v3095 = vpop.f32.mrf.mxu0
    %v3096 = vadd.f32 0.0, %v3095
    %v3097 = vpop.f32.mrf.mxu0
    %v3098 = vadd.f32 0.0, %v3097
    %3099 = vmatmul.bf16.gmra.mxu0 %v2937
    %v3100 = vpop.f32.mrf.mxu0
    %v3101 = vadd.f32 0.0, %v3100
    %v3102 = vpop.f32.mrf.mxu0
    %v3103 = vadd.f32 0.0, %v3102
    %3104 = vmatmul.bf16.gmra.mxu0 %v2939
    %v3105 = vpop.f32.mrf.mxu0
    %v3106 = vadd.f32 0.0, %v3105
    %v3107 = vpop.f32.mrf.mxu0
    %v3108 = vadd.f32 0.0, %v3107
    %3109 = vmatmul.bf16.gmra.mxu0 %v2941
    %v3110 = vpop.f32.mrf.mxu0
    %v3111 = vadd.f32 0.0, %v3110
    %v3112 = vpop.f32.mrf.mxu0
    %v3113 = vadd.f32 0.0, %v3112
    %3114 = vmatmul.bf16.gmra.mxu0 %v2943
    %v3115 = vpop.f32.mrf.mxu0
    %v3116 = vadd.f32 0.0, %v3115
    %v3117 = vpop.f32.mrf.mxu0
    %v3118 = vadd.f32 0.0, %v3117
    %3119 = vmatmul.bf16.gmra.mxu0 %v2945
    %v3120 = vpop.f32.mrf.mxu0
    %v3121 = vadd.f32 0.0, %v3120
    %v3122 = vpop.f32.mrf.mxu0
    %v3123 = vadd.f32 0.0, %v3122
    %3124 = vdwg.mxu0
    %3125 = vmatpush.bf16.msra.mxu0 %v3059
    %3126 = vmatpush.bf16.msra.mxu0 %v3058
    %3127 = vmatpush.bf16.msra.mxu0 %v3057
    %3128 = vmatpush.bf16.msra.mxu0 %v3056
    %3129 = vmatpush.bf16.msra.mxu0 %v3055
    %3130 = vmatpush.bf16.msra.mxu0 %v3054
    %3131 = vmatpush.bf16.msra.mxu0 %v3053
    %3132 = vmatpush.bf16.msra.mxu0 %v3052
    %3133 = vmatmul.bf16.gmra.mxu0 %v2932
    %v3134 = vpop.f32.mrf.mxu0
    %v3135 = vadd.f32 %v3086, %v3134
    %v3136 = vpop.f32.mrf.mxu0
    %v3137 = vadd.f32 %v3088, %v3136
    %3138 = vmatmul.bf16.gmra.mxu0 %v2934
    %v3139 = vpop.f32.mrf.mxu0
    %v3140 = vadd.f32 %v3091, %v3139
    %v3141 = vpop.f32.mrf.mxu0
    %v3142 = vadd.f32 %v3093, %v3141
    %3143 = vmatmul.bf16.gmra.mxu0 %v2936
    %v3144 = vpop.f32.mrf.mxu0
    %v3145 = vadd.f32 %v3096, %v3144
    %v3146 = vpop.f32.mrf.mxu0
    %v3147 = vadd.f32 %v3098, %v3146
    %3148 = vmatmul.bf16.gmra.mxu0 %v2938
    %v3149 = vpop.f32.mrf.mxu0
    %v3150 = vadd.f32 %v3101, %v3149
    %v3151 = vpop.f32.mrf.mxu0
    %v3152 = vadd.f32 %v3103, %v3151
    %3153 = vmatmul.bf16.gmra.mxu0 %v2940
    %v3154 = vpop.f32.mrf.mxu0
    %v3155 = vadd.f32 %v3106, %v3154
    %v3156 = vpop.f32.mrf.mxu0
    %v3157 = vadd.f32 %v3108, %v3156
    %3158 = vmatmul.bf16.gmra.mxu0 %v2942
    %v3159 = vpop.f32.mrf.mxu0
    %v3160 = vadd.f32 %v3111, %v3159
    %v3161 = vpop.f32.mrf.mxu0
    %v3162 = vadd.f32 %v3113, %v3161
    %3163 = vmatmul.bf16.gmra.mxu0 %v2944
    %v3164 = vpop.f32.mrf.mxu0
    %v3165 = vadd.f32 %v3116, %v3164
    %v3166 = vpop.f32.mrf.mxu0
    %v3167 = vadd.f32 %v3118, %v3166
    %3168 = vmatmul.bf16.gmra.mxu0 %v2946
    %v3169 = vpop.f32.mrf.mxu0
    %v3170 = vadd.f32 %v3121, %v3169
    %v3171 = vpop.f32.mrf.mxu0
    %v3172 = vadd.f32 %v3123, %v3171
    %3173 = vdwg.mxu0
    %s3174 = scalar_lea.vmem %s2, 16
    %v3175 = vld [vmem:[%s3174] sm:$0xf]
    %v3176 = vadd.f32 %v3135, %v3137
    %v3177 = vadd.f32 %v3176, %v3140
    %v3178 = vadd.f32 %v3177, %v3142
    %v3179 = vadd.f32 %v3178, %v3145
    %v3180 = vadd.f32 %v3179, %v3147
    %v3181 = vadd.f32 %v3180, %v3150
    %v3182 = vadd.f32 %v3181, %v3152
    %v3183 = vadd.f32 %v3182, %v3155
    %v3184 = vadd.f32 %v3183, %v3157
    %v3185 = vadd.f32 %v3184, %v3160
    %v3186 = vadd.f32 %v3185, %v3162
    %v3187 = vadd.f32 %v3186, %v3165
    %v3188 = vadd.f32 %v3187, %v3167
    %v3189 = vadd.f32 %v3188, %v3170
    %v3190 = vadd.f32 %v3189, %v3172
    %v3191 = vrot.slane %v3190, 4
    %v3192 = vadd.f32 %v3190, %v3191
    %v3193 = vrot.slane %v3192, 2
    %v3194 = vadd.f32 %v3192, %v3193
    %v3195 = vrot.slane %v3194, 1
    %v3196 = vadd.f32 %v3194, %v3195
    %v3197 = vmul.f32 %v3196, %v515
    %v3198 = vsub.f32 %v3135, %v3197
    %v3199 = vsub.f32 %v3137, %v3197
    %v3200 = vsub.f32 %v3140, %v3197
    %v3201 = vsub.f32 %v3142, %v3197
    %v3202 = vsub.f32 %v3145, %v3197
    %v3203 = vsub.f32 %v3147, %v3197
    %v3204 = vsub.f32 %v3150, %v3197
    %v3205 = vsub.f32 %v3152, %v3197
    %v3206 = vsub.f32 %v3155, %v3197
    %v3207 = vsub.f32 %v3157, %v3197
    %v3208 = vsub.f32 %v3160, %v3197
    %v3209 = vsub.f32 %v3162, %v3197
    %v3210 = vsub.f32 %v3165, %v3197
    %v3211 = vsub.f32 %v3167, %v3197
    %v3212 = vsub.f32 %v3170, %v3197
    %v3213 = vsub.f32 %v3172, %v3197
    %v3214 = vmul.f32 %v3198, %v3198
    %v3215 = vmul.f32 %v3199, %v3199
    %v3216 = vmul.f32 %v3200, %v3200
    %v3217 = vmul.f32 %v3201, %v3201
    %v3218 = vmul.f32 %v3202, %v3202
    %v3219 = vmul.f32 %v3203, %v3203
    %v3220 = vmul.f32 %v3204, %v3204
    %v3221 = vmul.f32 %v3205, %v3205
    %v3222 = vmul.f32 %v3206, %v3206
    %v3223 = vmul.f32 %v3207, %v3207
    %v3224 = vmul.f32 %v3208, %v3208
    %v3225 = vmul.f32 %v3209, %v3209
    %v3226 = vmul.f32 %v3210, %v3210
    %v3227 = vmul.f32 %v3211, %v3211
    %v3228 = vmul.f32 %v3212, %v3212
    %v3229 = vmul.f32 %v3213, %v3213
    %v3230 = vadd.f32 %v3214, %v3215
    %v3231 = vadd.f32 %v3230, %v3216
    %v3232 = vadd.f32 %v3231, %v3217
    %v3233 = vadd.f32 %v3232, %v3218
    %v3234 = vadd.f32 %v3233, %v3219
    %v3235 = vadd.f32 %v3234, %v3220
    %v3236 = vadd.f32 %v3235, %v3221
    %v3237 = vadd.f32 %v3236, %v3222
    %v3238 = vadd.f32 %v3237, %v3223
    %v3239 = vadd.f32 %v3238, %v3224
    %v3240 = vadd.f32 %v3239, %v3225
    %v3241 = vadd.f32 %v3240, %v3226
    %v3242 = vadd.f32 %v3241, %v3227
    %v3243 = vadd.f32 %v3242, %v3228
    %v3244 = vadd.f32 %v3243, %v3229
    %v3245 = vrot.slane %v3244, 4
    %v3246 = vadd.f32 %v3244, %v3245
    %v3247 = vrot.slane %v3246, 2
    %v3248 = vadd.f32 %v3246, %v3247
    %v3249 = vrot.slane %v3248, 1
    %v3250 = vadd.f32 %v3248, %v3249
    %v3251 = vmul.f32 %v3250, %v515
    %v3252 = vadd.f32 %v3251, 1e-05
    %v3253 = vrsqrt.pop %v3252
    %v3254 = vmul.f32 %v3253, %v3252
    %v3255 = vmul.f32 %v3254, %v3253
    %v3256 = vmul.f32 0.5, %v3255
    %v3257 = vsub.f32 1.5, %v3256
    %v3258 = vmul.f32 %v3253, %v3257
    %vm3259 = vweird.f32 %v3252
    %vm3260 = vweird.f32 %v3253
    %vm3261 = vmor %vm3259, %vm3260
    %v3262 = vsel %vm3261, %v3253, %v3258
    %v3264 = vperm.slane %v3175, 0
    %v3266 = vmul.f32 %v3262, %v3264
    %v3267 = vperm.slane %v3266, 0
    %v3268 = vmul.f32 %v3198, %v3267
    %v3269 = vmul.f32 %v3199, %v3267
    %v3270 = vmul.f32 %v3200, %v3267
    %v3271 = vmul.f32 %v3201, %v3267
    %v3272 = vmul.f32 %v3202, %v3267
    %v3273 = vmul.f32 %v3203, %v3267
    %v3274 = vmul.f32 %v3204, %v3267
    %v3275 = vmul.f32 %v3205, %v3267
    %v3276 = vmul.f32 %v3206, %v3267
    %v3277 = vmul.f32 %v3207, %v3267
    %v3278 = vmul.f32 %v3208, %v3267
    %v3279 = vmul.f32 %v3209, %v3267
    %v3280 = vmul.f32 %v3210, %v3267
    %v3281 = vmul.f32 %v3211, %v3267
    %v3282 = vmul.f32 %v3212, %v3267
    %v3283 = vmul.f32 %v3213, %v3267
    %v3284 = vperm.slane %v3175, 1
    %v3286 = vperm.slane %v3284, 1
    %v3287 = vadd.f32 %v3268, %v3286
    %v3288 = vadd.f32 %v3269, %v3286
    %v3289 = vadd.f32 %v3270, %v3286
    %v3290 = vadd.f32 %v3271, %v3286
    %v3291 = vadd.f32 %v3272, %v3286
    %v3292 = vadd.f32 %v3273, %v3286
    %v3293 = vadd.f32 %v3274, %v3286
    %v3294 = vadd.f32 %v3275, %v3286
    %v3295 = vadd.f32 %v3276, %v3286
    %v3296 = vadd.f32 %v3277, %v3286
    %v3297 = vadd.f32 %v3278, %v3286
    %v3298 = vadd.f32 %v3279, %v3286
    %v3299 = vadd.f32 %v3280, %v3286
    %v3300 = vadd.f32 %v3281, %v3286
    %v3301 = vadd.f32 %v3282, %v3286
    %v3302 = vadd.f32 %v3283, %v3286
    %v3303 = vmul.f32 %v3287, 0.5
    %v3304 = vmul.f32 %v3288, 0.5
    %v3305 = vmul.f32 %v3289, 0.5
    %v3306 = vmul.f32 %v3290, 0.5
    %v3307 = vmul.f32 %v3291, 0.5
    %v3308 = vmul.f32 %v3292, 0.5
    %v3309 = vmul.f32 %v3293, 0.5
    %v3310 = vmul.f32 %v3294, 0.5
    %v3311 = vmul.f32 %v3295, 0.5
    %v3312 = vmul.f32 %v3296, 0.5
    %v3313 = vmul.f32 %v3297, 0.5
    %v3314 = vmul.f32 %v3298, 0.5
    %v3315 = vmul.f32 %v3299, 0.5
    %v3316 = vmul.f32 %v3300, 0.5
    %v3317 = vmul.f32 %v3301, 0.5
    %v3318 = vmul.f32 %v3302, 0.5
    %v3319 = vtanh.pop %v3303
    %v3320 = vtanh.pop %v3304
    %v3321 = vtanh.pop %v3305
    %v3322 = vtanh.pop %v3306
    %v3323 = vtanh.pop %v3307
    %v3324 = vtanh.pop %v3308
    %v3325 = vtanh.pop %v3309
    %v3326 = vtanh.pop %v3310
    %v3327 = vtanh.pop %v3311
    %v3328 = vtanh.pop %v3312
    %v3329 = vtanh.pop %v3313
    %v3330 = vtanh.pop %v3314
    %v3331 = vtanh.pop %v3315
    %v3332 = vtanh.pop %v3316
    %v3333 = vtanh.pop %v3317
    %v3334 = vtanh.pop %v3318
    %v3335 = vadd.f32 %v3319, 1.0
    %v3336 = vadd.f32 %v3320, 1.0
    %v3337 = vadd.f32 %v3321, 1.0
    %v3338 = vadd.f32 %v3322, 1.0
    %v3339 = vadd.f32 %v3323, 1.0
    %v3340 = vadd.f32 %v3324, 1.0
    %v3341 = vadd.f32 %v3325, 1.0
    %v3342 = vadd.f32 %v3326, 1.0
    %v3343 = vadd.f32 %v3327, 1.0
    %v3344 = vadd.f32 %v3328, 1.0
    %v3345 = vadd.f32 %v3329, 1.0
    %v3346 = vadd.f32 %v3330, 1.0
    %v3347 = vadd.f32 %v3331, 1.0
    %v3348 = vadd.f32 %v3332, 1.0
    %v3349 = vadd.f32 %v3333, 1.0
    %v3350 = vadd.f32 %v3334, 1.0
    %v3351 = vmul.f32 %v3335, 0.5
    %v3352 = vmul.f32 %v3336, 0.5
    %v3353 = vmul.f32 %v3337, 0.5
    %v3354 = vmul.f32 %v3338, 0.5
    %v3355 = vmul.f32 %v3339, 0.5
    %v3356 = vmul.f32 %v3340, 0.5
    %v3357 = vmul.f32 %v3341, 0.5
    %v3358 = vmul.f32 %v3342, 0.5
    %v3359 = vmul.f32 %v3343, 0.5
    %v3360 = vmul.f32 %v3344, 0.5
    %v3361 = vmul.f32 %v3345, 0.5
    %v3362 = vmul.f32 %v3346, 0.5
    %v3363 = vmul.f32 %v3347, 0.5
    %v3364 = vmul.f32 %v3348, 0.5
    %v3365 = vmul.f32 %v3349, 0.5
    %v3366 = vmul.f32 %v3350, 0.5
    %vm3367 = vcmask 64512
    %3368 = vst.msk [vmem:[%s3] sm:$0xff] %vm3367, %v3351
    %3369 = vst.msk [vmem:[%s3 + $0x8] sm:$0xff] %vm3367, %v3352
    %3370 = vst.msk [vmem:[%s3 + $0x10] sm:$0xff] %vm3367, %v3353
    %3371 = vst.msk [vmem:[%s3 + $0x18] sm:$0xff] %vm3367, %v3354
    %3372 = vst.msk [vmem:[%s3 + $0x20] sm:$0xff] %vm3367, %v3355
    %3373 = vst.msk [vmem:[%s3 + $0x28] sm:$0xff] %vm3367, %v3356
    %3374 = vst.msk [vmem:[%s3 + $0x30] sm:$0xff] %vm3367, %v3357
    %3375 = vst.msk [vmem:[%s3 + $0x38] sm:$0xff] %vm3367, %v3358
    %3376 = vst.msk [vmem:[%s3 + $0x40] sm:$0xff] %vm3367, %v3359
    %3377 = vst.msk [vmem:[%s3 + $0x48] sm:$0xff] %vm3367, %v3360
    %3378 = vst.msk [vmem:[%s3 + $0x50] sm:$0xff] %vm3367, %v3361
    %3379 = vst.msk [vmem:[%s3 + $0x58] sm:$0xff] %vm3367, %v3362
    %3380 = vst.msk [vmem:[%s3 + $0x60] sm:$0xff] %vm3367, %v3363
    %3381 = vst.msk [vmem:[%s3 + $0x68] sm:$0xff] %vm3367, %v3364
    %3382 = vst.msk [vmem:[%s3 + $0x70] sm:$0xff] %vm3367, %v3365
    %3383 = vst.msk [vmem:[%s3 + $0x78] sm:$0xff] %vm3367, %v3366
    // Predicated region
    $region18: #{network_forward.1} parent=1 // pred_check
      _
    $region19: #{network_forward.1} parent=1 // pred_check_branch
      %3385 = sbr.rel (0) target = $region21
    $region20: #{network_forward.1} parent=1 // pred_region
      _
    $region21: #{network_forward.1} parent=1 // pred_fallthru
      _
    // Predicated region
    $region22: #{network_forward.1} parent=1 // pred_check
      _
    $region23: #{network_forward.1} parent=1 // pred_check_branch
      %3387 = sbr.rel (0) target = $region25
    $region24: #{network_forward.1} parent=1 // pred_region
      _
    $region25: #{network_forward.1} parent=1 // pred_fallthru
      _
    %3388 = vsyncpa [#allocation3], 1

</llo_original>
